<compile_context>
chip_gen: v6e
topology: v6e:2x2x1
jax: 0.10.0
libtpu: 0.0.40
codegen_flags: <defaults>
</compile_context>

<pallas_src>
import numpy as np
import jax
import jax.numpy as jnp
from jax.experimental import pallas as pl
from jax.experimental.pallas import tpu as pltpu

H = W = 16          # spatial size
C = 4               # channels (== dim of the BasicBlock)
GROUPS = 2          # GroupNorm(2, dim)
EPS = 1e-4
HW = H * W
CHW = C * HW
GSIZE = (C // GROUPS) * HW          # elements per GroupNorm group (512), lane-aligned
CPG = C // GROUPS                   # channels per group


# ----------------------------------------------------------------------------
# Weight-only preprocessing (done once per weight set, outside the hot path)
# ----------------------------------------------------------------------------
def conv_to_matrix(w_hwio):
    """Reformat (3,3,Cin,Cout) HWIO conv weights into a (C*H*W, C*H*W) operator M so
    that NCHW-flattened `out = x_flat @ M` equals a SAME zero-padded 3x3 conv."""
    hh = np.arange(H)[:, None]
    ww = np.arange(W)[None, :]
    p = (hh * W + ww).reshape(-1)                        # output flat position
    shift_mats = []
    for kh in range(3):
        for kw in range(3):
            hs, ws = hh + kh - 1, ww + kw - 1
            valid = ((hs >= 0) & (hs < H) & (ws >= 0) & (ws < W)).reshape(-1)
            q = (np.clip(hs, 0, H - 1) * W + np.clip(ws, 0, W - 1)).reshape(-1)
            s = np.zeros((HW, HW), np.float32)
            s[q[valid], p[valid]] = 1.0                  # input q feeds output p
            shift_mats.append(s)
    s9 = jnp.asarray(np.stack(shift_mats))               # (9, HW, HW) constants
    w9 = w_hwio.reshape(9, C, C)                         # (9, Cin, Cout)
    m = jnp.einsum("kio,kqp->iqop", w9, s9)              # (Cin, HW, Cout, HW)
    return m.reshape(CHW, CHW)


def prepare_params(w1, g1, b1, w2, g2, b2, *, mxu_dtype=jnp.bfloat16):
    """Lift conv weights to dense operators (cast for the MXU) and pack the two
    GroupNorm affine parameter sets into one (4, C) scalar table (rows: g1,b1,g2,b2)."""
    m1 = conv_to_matrix(w1).astype(mxu_dtype)
    m2 = conv_to_matrix(w2).astype(mxu_dtype)
    gn = jnp.stack([g1, b1, g2, b2]).astype(jnp.float32)      # (4, C) -> SMEM
    return m1, m2, gn


# ----------------------------------------------------------------------------
# Kernel
# ----------------------------------------------------------------------------
def _group_norm(h, gn_ref, grow, brow, apply_relu):
    """GroupNorm(GROUPS, eps=1e-4) (+ optional ReLU) on channel-major flattened rows.

    h: (B, C*H*W) f32.  One-pass statistics per 512-lane group; normalize + per-channel
    affine (+ReLU) fused into a single scale/shift FMA per 256-lane channel slab.
    gn_ref: (4, C) SMEM scalar table; rows `grow`/`brow` select gamma/beta."""
    slabs = []
    for g in range(GROUPS):
        seg = h[:, g * GSIZE:(g + 1) * GSIZE]                      # (B, 512) lane-aligned
        s1 = jnp.sum(seg, axis=-1, keepdims=True)                  # one pass over data
        s2 = jnp.sum(seg * seg, axis=-1, keepdims=True)
        mean = s1 * (1.0 / GSIZE)
        var = s2 * (1.0 / GSIZE) - mean * mean                     # biased var (PyTorch)
        inv = jax.lax.rsqrt(var + EPS)                             # (B, 1)
        for cc in range(CPG):
            c = g * CPG + cc
            scale = inv * gn_ref[grow, c]                          # (B, 1)
            shift = gn_ref[brow, c] - mean * scale                 # (B, 1)
            slab = seg[:, cc * HW:(cc + 1) * HW] * scale + shift   # (B, 256) fused FMA
            if apply_relu:
                slab = jnp.maximum(slab, 0.0)
            slabs.append(slab)
    return jnp.concatenate(slabs, axis=-1)                         # 256-lane aligned


def basic_block_kernel(x_ref, m1_ref, m2_ref, gn_ref, o_ref):
    mxu_dt = m1_ref.dtype

    # conv1 as a single MXU matmul over the lifted operator (f32 accumulation)
    h = jnp.dot(x_ref[...].astype(mxu_dt), m1_ref[...],
                preferred_element_type=jnp.float32)                # (B, CHW)
    h = _group_norm(h, gn_ref, 0, 1, apply_relu=True)              # bn1 + relu

    h = jnp.dot(h.astype(mxu_dt), m2_ref[...],
                preferred_element_type=jnp.float32)                # conv2
    h = _group_norm(h, gn_ref, 2, 3, apply_relu=False)             # bn2

    # residual read directly from x_ref (not carried live across the matmuls)
    o_ref[...] = jnp.maximum(h + x_ref[...], 0.0).astype(o_ref.dtype)


# ----------------------------------------------------------------------------
# Wrapper
# ----------------------------------------------------------------------------
def basic_block_apply(x_nchw, params, *, b_tile=512):
    """x_nchw: (N, C, H, W); params from prepare_params()."""
    m1, m2, gn = params
    n = x_nchw.shape[0]
    x_flat = x_nchw.reshape(n, CHW)                    # free reshape, no transpose/pad

    bt = min(b_tile, n)
    if n >= 16:
        # ensure >=2 grid steps so the "parallel" batch axis can shard across both
        # TensorCores on v7x (tiles kept a multiple of 8 sublanes)
        bt = min(bt, max(8, ((pl.cdiv(n, 2) + 7) // 8) * 8))
    grid = pl.cdiv(n, bt)

    # VMEM budget from actual buffer sizes (operators single-buffered, x/out
    # double-buffered, ~6 f32 (bt, CHW) intermediates, 4 MiB slack); v7x-safe clamp.
    mat_bytes = CHW * CHW * m1.dtype.itemsize
    io_bytes = bt * CHW * x_nchw.dtype.itemsize
    need = 2 * mat_bytes + 2 * 2 * io_bytes + 6 * bt * CHW * 4 + (4 << 20)
    vmem_limit = int(min(max(need, 32 << 20), 64 << 20))

    # Constant operators: same block every step -> single-buffer (no pipelining win).
    const_mat = pl.BlockSpec((CHW, CHW), lambda i: (0, 0),
                             pipeline_mode=pl.Buffered(1))

    out = pl.pallas_call(
        basic_block_kernel,
        out_shape=jax.ShapeDtypeStruct((n, CHW), x_nchw.dtype),
        grid_spec=pltpu.PrefetchScalarGridSpec(
            num_scalar_prefetch=0,
            grid=(grid,),
            in_specs=[
                pl.BlockSpec((bt, CHW), lambda i: (i, 0)),            # x block
                const_mat,                                            # conv1 operator
                const_mat,                                            # conv2 operator
                pl.BlockSpec(memory_space=pltpu.MemorySpace.SMEM),    # packed GN affine
            ],
            out_specs=pl.BlockSpec((bt, CHW), lambda i: (i, 0)),
        ),
        compiler_params=pltpu.CompilerParams(
            dimension_semantics=("parallel",),        # batch blocks are independent
            vmem_limit_bytes=vmem_limit,
        ),
    )(x_flat, m1, m2, gn)
    return out.reshape(n, C, H, W)


# ----------------------------------------------------------------------------
# Plain-JAX reference (correctness check)
# ----------------------------------------------------------------------------
def reference(x_nchw, w1, g1, b1, w2, g2, b2):
    x = jnp.transpose(x_nchw, (0, 2, 3, 1))

    def conv(inp, w):
        return jax.lax.conv_general_dilated(
            inp, w, window_strides=(1, 1), padding="SAME",
            dimension_numbers=("NHWC", "HWIO", "NHWC"))

    def gn(v, gamma, beta):
        nb, hh, ww, cc = v.shape
        vg = v.reshape(nb, hh, ww, GROUPS, cc // GROUPS)
        m = jnp.mean(vg, axis=(1, 2, 4), keepdims=True)
        var = jnp.mean((vg - m) ** 2, axis=(1, 2, 4), keepdims=True)
        vn = (vg - m) / jnp.sqrt(var + EPS)
        return vn.reshape(nb, hh, ww, cc) * gamma + beta

    o = conv(x, w1); o = gn(o, g1, b1); o = jnp.maximum(o, 0.0)
    o = conv(o, w2); o = gn(o, g2, b2); o = o + x; o = jnp.maximum(o, 0.0)
    return jnp.transpose(o, (0, 3, 1, 2))


if __name__ == "__main__":
    key = jax.random.PRNGKey(0)
    k1, k2, k3, k4, k5 = jax.random.split(key, 5)

    N = 2
    x = jax.random.normal(k1, (N, C, H, W), jnp.float32)
    w1 = jax.random.normal(k2, (3, 3, C, C), jnp.float32) * 0.2
    w2 = jax.random.normal(k3, (3, 3, C, C), jnp.float32) * 0.2
    g1 = jnp.ones((C,), jnp.float32) + 0.1 * jax.random.normal(k4, (C,), jnp.float32)
    b1 = 0.1 * jax.random.normal(k5, (C,), jnp.float32)
    g2 = jnp.ones((C,), jnp.float32)
    b2 = jnp.zeros((C,), jnp.float32)

    ref = jax.block_until_ready(reference(x, w1, g1, b1, w2, g2, b2))
    fwd = jax.jit(basic_block_apply)

    # f32-operator path: bit-exact semantics, tight tolerance.
    params_f32 = prepare_params(w1, g1, b1, w2, g2, b2, mxu_dtype=jnp.float32)
    out_f32 = jax.block_until_ready(fwd(x, params_f32))
    assert out_f32.shape == (N, C, H, W), out_f32.shape
    assert jnp.allclose(out_f32, ref, atol=1e-4, rtol=1e-4), \
        float(jnp.max(jnp.abs(out_f32 - ref)))

    # Fast bf16-MXU path (default): same math in bf16 with f32 accumulation;
    # bf16 mantissa (8 bits) through two convs + two GroupNorms => ~1e-2 abs error.
    params_bf16 = prepare_params(w1, g1, b1, w2, g2, b2, mxu_dtype=jnp.bfloat16)
    out_bf16 = jax.block_until_ready(fwd(x, params_bf16))
    assert out_bf16.shape == (N, C, H, W), out_bf16.shape
    assert jnp.allclose(out_bf16, ref, atol=8e-2, rtol=5e-2), \
        float(jnp.max(jnp.abs(out_bf16 - ref)))

    print("KERNEL_OK")
</pallas_src>

<mosaic_0001>
module attributes {stable_mosaic.version = 11 : i64} {
  func.func @basic_block_kernel(%arg0: i32, %arg1: memref<2x1024xf32, #tpu.memory_space<vmem>>, %arg2: memref<1024x1024xf32, #tpu.memory_space<vmem>>, %arg3: memref<1024x1024xf32, #tpu.memory_space<vmem>>, %arg4: memref<4x4xf32, #tpu.memory_space<smem>>, %arg5: memref<2x1024xf32, #tpu.memory_space<vmem>>) attributes {dimension_semantics = [#tpu.dimension_semantics<parallel>], iteration_bounds = array<i64: 1>, scalar_prefetch = 0 : i64, scratch_operands = 0 : i64, tpu.core_type = #tpu.core_type<tc>, window_params = [{transform_indices = @transform_0, window_bounds = array<i64: 2, 1024>}, {pipeline_mode = #tpu.pipeline_mode<synchronous>, transform_indices = @transform_1, window_bounds = array<i64: 1024, 1024>}, {pipeline_mode = #tpu.pipeline_mode<synchronous>, transform_indices = @transform_2, window_bounds = array<i64: 1024, 1024>}, {transform_indices = @transform_3, window_bounds = array<i64: 4, 4>}, {transform_indices = @transform_4, window_bounds = array<i64: 2, 1024>}]} {
    %c0 = arith.constant 0 : index
    %c0_0 = arith.constant 0 : index
    %0 = vector.load %arg1[%c0, %c0_0] : memref<2x1024xf32, #tpu.memory_space<vmem>>, vector<2x1024xf32>
    %c0_1 = arith.constant 0 : index
    %c0_2 = arith.constant 0 : index
    %1 = vector.load %arg2[%c0_1, %c0_2] : memref<1024x1024xf32, #tpu.memory_space<vmem>>, vector<1024x1024xf32>
    %cst = arith.constant dense<0.000000e+00> : vector<2x1024xf32>
    %2 = tpu.matmul %0, %1, %cst {dimension_numbers = #tpu.dot_dimension_numbers<[1], [0], [0], [1], [0, 0, 1, 1], [], []>} : vector<2x1024xf32>, vector<1024x1024xf32>, vector<2x1024xf32> -> vector<2x1024xf32>
    %3 = vector.extract_strided_slice %2 {offsets = [0, 0], sizes = [2, 512], strides = [1, 1]} : vector<2x1024xf32> to vector<2x512xf32>
    %cst_3 = arith.constant dense<0.000000e+00> : vector<2xf32>
    %4 = vector.multi_reduction <add>, %3, %cst_3 [1] : vector<2x512xf32> to vector<2xf32>
    %5 = vector.shape_cast %4 : vector<2xf32> to vector<2x1xf32>
    %6 = arith.mulf %3, %3 : vector<2x512xf32>
    %cst_4 = arith.constant dense<0.000000e+00> : vector<2xf32>
    %7 = vector.multi_reduction <add>, %6, %cst_4 [1] : vector<2x512xf32> to vector<2xf32>
    %8 = vector.shape_cast %7 : vector<2xf32> to vector<2x1xf32>
    %cst_5 = arith.constant 0.001953125 : f32
    %9 = vector.broadcast %cst_5 : f32 to vector<2x1xf32>
    %10 = arith.mulf %5, %9 : vector<2x1xf32>
    %cst_6 = arith.constant 0.001953125 : f32
    %11 = vector.broadcast %cst_6 : f32 to vector<2x1xf32>
    %12 = arith.mulf %8, %11 : vector<2x1xf32>
    %13 = arith.mulf %10, %10 : vector<2x1xf32>
    %14 = arith.subf %12, %13 : vector<2x1xf32>
    %cst_7 = arith.constant 9.99999974E-5 : f32
    %15 = vector.broadcast %cst_7 : f32 to vector<2x1xf32>
    %16 = arith.addf %14, %15 : vector<2x1xf32>
    %17 = math.rsqrt %16 : vector<2x1xf32>
    %c0_8 = arith.constant 0 : index
    %c0_9 = arith.constant 0 : index
    %18 = memref.load %arg4[%c0_8, %c0_9] : memref<4x4xf32, #tpu.memory_space<smem>>
    %19 = vector.broadcast %18 : f32 to vector<2x1xf32>
    %20 = arith.mulf %17, %19 : vector<2x1xf32>
    %c1 = arith.constant 1 : index
    %c0_10 = arith.constant 0 : index
    %21 = memref.load %arg4[%c1, %c0_10] : memref<4x4xf32, #tpu.memory_space<smem>>
    %22 = arith.mulf %10, %20 : vector<2x1xf32>
    %23 = vector.broadcast %21 : f32 to vector<2x1xf32>
    %24 = arith.subf %23, %22 : vector<2x1xf32>
    %25 = vector.extract_strided_slice %3 {offsets = [0, 0], sizes = [2, 256], strides = [1, 1]} : vector<2x512xf32> to vector<2x256xf32>
    %26 = vector.broadcast %20 : vector<2x1xf32> to vector<2x256xf32>
    %27 = arith.mulf %25, %26 : vector<2x256xf32>
    %28 = vector.broadcast %24 : vector<2x1xf32> to vector<2x256xf32>
    %29 = arith.addf %27, %28 : vector<2x256xf32>
    %cst_11 = arith.constant 0.000000e+00 : f32
    %30 = vector.broadcast %cst_11 : f32 to vector<2x256xf32>
    %31 = arith.maximumf %29, %30 : vector<2x256xf32>
    %c0_12 = arith.constant 0 : index
    %c1_13 = arith.constant 1 : index
    %32 = memref.load %arg4[%c0_12, %c1_13] : memref<4x4xf32, #tpu.memory_space<smem>>
    %33 = vector.broadcast %32 : f32 to vector<2x1xf32>
    %34 = arith.mulf %17, %33 : vector<2x1xf32>
    %c1_14 = arith.constant 1 : index
    %c1_15 = arith.constant 1 : index
    %35 = memref.load %arg4[%c1_14, %c1_15] : memref<4x4xf32, #tpu.memory_space<smem>>
    %36 = arith.mulf %10, %34 : vector<2x1xf32>
    %37 = vector.broadcast %35 : f32 to vector<2x1xf32>
    %38 = arith.subf %37, %36 : vector<2x1xf32>
    %39 = vector.extract_strided_slice %3 {offsets = [0, 256], sizes = [2, 256], strides = [1, 1]} : vector<2x512xf32> to vector<2x256xf32>
    %40 = vector.broadcast %34 : vector<2x1xf32> to vector<2x256xf32>
    %41 = arith.mulf %39, %40 : vector<2x256xf32>
    %42 = vector.broadcast %38 : vector<2x1xf32> to vector<2x256xf32>
    %43 = arith.addf %41, %42 : vector<2x256xf32>
    %cst_16 = arith.constant 0.000000e+00 : f32
    %44 = vector.broadcast %cst_16 : f32 to vector<2x256xf32>
    %45 = arith.maximumf %43, %44 : vector<2x256xf32>
    %46 = vector.extract_strided_slice %2 {offsets = [0, 512], sizes = [2, 512], strides = [1, 1]} : vector<2x1024xf32> to vector<2x512xf32>
    %cst_17 = arith.constant dense<0.000000e+00> : vector<2xf32>
    %47 = vector.multi_reduction <add>, %46, %cst_17 [1] : vector<2x512xf32> to vector<2xf32>
    %48 = vector.shape_cast %47 : vector<2xf32> to vector<2x1xf32>
    %49 = arith.mulf %46, %46 : vector<2x512xf32>
    %cst_18 = arith.constant dense<0.000000e+00> : vector<2xf32>
    %50 = vector.multi_reduction <add>, %49, %cst_18 [1] : vector<2x512xf32> to vector<2xf32>
    %51 = vector.shape_cast %50 : vector<2xf32> to vector<2x1xf32>
    %cst_19 = arith.constant 0.001953125 : f32
    %52 = vector.broadcast %cst_19 : f32 to vector<2x1xf32>
    %53 = arith.mulf %48, %52 : vector<2x1xf32>
    %cst_20 = arith.constant 0.001953125 : f32
    %54 = vector.broadcast %cst_20 : f32 to vector<2x1xf32>
    %55 = arith.mulf %51, %54 : vector<2x1xf32>
    %56 = arith.mulf %53, %53 : vector<2x1xf32>
    %57 = arith.subf %55, %56 : vector<2x1xf32>
    %cst_21 = arith.constant 9.99999974E-5 : f32
    %58 = vector.broadcast %cst_21 : f32 to vector<2x1xf32>
    %59 = arith.addf %57, %58 : vector<2x1xf32>
    %60 = math.rsqrt %59 : vector<2x1xf32>
    %c0_22 = arith.constant 0 : index
    %c2 = arith.constant 2 : index
    %61 = memref.load %arg4[%c0_22, %c2] : memref<4x4xf32, #tpu.memory_space<smem>>
    %62 = vector.broadcast %61 : f32 to vector<2x1xf32>
    %63 = arith.mulf %60, %62 : vector<2x1xf32>
    %c1_23 = arith.constant 1 : index
    %c2_24 = arith.constant 2 : index
    %64 = memref.load %arg4[%c1_23, %c2_24] : memref<4x4xf32, #tpu.memory_space<smem>>
    %65 = arith.mulf %53, %63 : vector<2x1xf32>
    %66 = vector.broadcast %64 : f32 to vector<2x1xf32>
    %67 = arith.subf %66, %65 : vector<2x1xf32>
    %68 = vector.extract_strided_slice %46 {offsets = [0, 0], sizes = [2, 256], strides = [1, 1]} : vector<2x512xf32> to vector<2x256xf32>
    %69 = vector.broadcast %63 : vector<2x1xf32> to vector<2x256xf32>
    %70 = arith.mulf %68, %69 : vector<2x256xf32>
    %71 = vector.broadcast %67 : vector<2x1xf32> to vector<2x256xf32>
    %72 = arith.addf %70, %71 : vector<2x256xf32>
    %cst_25 = arith.constant 0.000000e+00 : f32
    %73 = vector.broadcast %cst_25 : f32 to vector<2x256xf32>
    %74 = arith.maximumf %72, %73 : vector<2x256xf32>
    %c0_26 = arith.constant 0 : index
    %c3 = arith.constant 3 : index
    %75 = memref.load %arg4[%c0_26, %c3] : memref<4x4xf32, #tpu.memory_space<smem>>
    %76 = vector.broadcast %75 : f32 to vector<2x1xf32>
    %77 = arith.mulf %60, %76 : vector<2x1xf32>
    %c1_27 = arith.constant 1 : index
    %c3_28 = arith.constant 3 : index
    %78 = memref.load %arg4[%c1_27, %c3_28] : memref<4x4xf32, #tpu.memory_space<smem>>
    %79 = arith.mulf %53, %77 : vector<2x1xf32>
    %80 = vector.broadcast %78 : f32 to vector<2x1xf32>
    %81 = arith.subf %80, %79 : vector<2x1xf32>
    %82 = vector.extract_strided_slice %46 {offsets = [0, 256], sizes = [2, 256], strides = [1, 1]} : vector<2x512xf32> to vector<2x256xf32>
    %83 = vector.broadcast %77 : vector<2x1xf32> to vector<2x256xf32>
    %84 = arith.mulf %82, %83 : vector<2x256xf32>
    %85 = vector.broadcast %81 : vector<2x1xf32> to vector<2x256xf32>
    %86 = arith.addf %84, %85 : vector<2x256xf32>
    %cst_29 = arith.constant 0.000000e+00 : f32
    %87 = vector.broadcast %cst_29 : f32 to vector<2x256xf32>
    %88 = arith.maximumf %86, %87 : vector<2x256xf32>
    %89 = tpu.concatenate %31, %45, %74, %88 in 1 : vector<2x256xf32>, vector<2x256xf32>, vector<2x256xf32>, vector<2x256xf32> -> vector<2x1024xf32>
    %c0_30 = arith.constant 0 : index
    %c0_31 = arith.constant 0 : index
    %90 = vector.load %arg3[%c0_30, %c0_31] : memref<1024x1024xf32, #tpu.memory_space<vmem>>, vector<1024x1024xf32>
    %cst_32 = arith.constant dense<0.000000e+00> : vector<2x1024xf32>
    %91 = tpu.matmul %89, %90, %cst_32 {dimension_numbers = #tpu.dot_dimension_numbers<[1], [0], [0], [1], [0, 0, 1, 1], [], []>} : vector<2x1024xf32>, vector<1024x1024xf32>, vector<2x1024xf32> -> vector<2x1024xf32>
    %92 = vector.extract_strided_slice %91 {offsets = [0, 0], sizes = [2, 512], strides = [1, 1]} : vector<2x1024xf32> to vector<2x512xf32>
    %cst_33 = arith.constant dense<0.000000e+00> : vector<2xf32>
    %93 = vector.multi_reduction <add>, %92, %cst_33 [1] : vector<2x512xf32> to vector<2xf32>
    %94 = vector.shape_cast %93 : vector<2xf32> to vector<2x1xf32>
    %95 = arith.mulf %92, %92 : vector<2x512xf32>
    %cst_34 = arith.constant dense<0.000000e+00> : vector<2xf32>
    %96 = vector.multi_reduction <add>, %95, %cst_34 [1] : vector<2x512xf32> to vector<2xf32>
    %97 = vector.shape_cast %96 : vector<2xf32> to vector<2x1xf32>
    %cst_35 = arith.constant 0.001953125 : f32
    %98 = vector.broadcast %cst_35 : f32 to vector<2x1xf32>
    %99 = arith.mulf %94, %98 : vector<2x1xf32>
    %cst_36 = arith.constant 0.001953125 : f32
    %100 = vector.broadcast %cst_36 : f32 to vector<2x1xf32>
    %101 = arith.mulf %97, %100 : vector<2x1xf32>
    %102 = arith.mulf %99, %99 : vector<2x1xf32>
    %103 = arith.subf %101, %102 : vector<2x1xf32>
    %cst_37 = arith.constant 9.99999974E-5 : f32
    %104 = vector.broadcast %cst_37 : f32 to vector<2x1xf32>
    %105 = arith.addf %103, %104 : vector<2x1xf32>
    %106 = math.rsqrt %105 : vector<2x1xf32>
    %c2_38 = arith.constant 2 : index
    %c0_39 = arith.constant 0 : index
    %107 = memref.load %arg4[%c2_38, %c0_39] : memref<4x4xf32, #tpu.memory_space<smem>>
    %108 = vector.broadcast %107 : f32 to vector<2x1xf32>
    %109 = arith.mulf %106, %108 : vector<2x1xf32>
    %c3_40 = arith.constant 3 : index
    %c0_41 = arith.constant 0 : index
    %110 = memref.load %arg4[%c3_40, %c0_41] : memref<4x4xf32, #tpu.memory_space<smem>>
    %111 = arith.mulf %99, %109 : vector<2x1xf32>
    %112 = vector.broadcast %110 : f32 to vector<2x1xf32>
    %113 = arith.subf %112, %111 : vector<2x1xf32>
    %114 = vector.extract_strided_slice %92 {offsets = [0, 0], sizes = [2, 256], strides = [1, 1]} : vector<2x512xf32> to vector<2x256xf32>
    %115 = vector.broadcast %109 : vector<2x1xf32> to vector<2x256xf32>
    %116 = arith.mulf %114, %115 : vector<2x256xf32>
    %117 = vector.broadcast %113 : vector<2x1xf32> to vector<2x256xf32>
    %118 = arith.addf %116, %117 : vector<2x256xf32>
    %c2_42 = arith.constant 2 : index
    %c1_43 = arith.constant 1 : index
    %119 = memref.load %arg4[%c2_42, %c1_43] : memref<4x4xf32, #tpu.memory_space<smem>>
    %120 = vector.broadcast %119 : f32 to vector<2x1xf32>
    %121 = arith.mulf %106, %120 : vector<2x1xf32>
    %c3_44 = arith.constant 3 : index
    %c1_45 = arith.constant 1 : index
    %122 = memref.load %arg4[%c3_44, %c1_45] : memref<4x4xf32, #tpu.memory_space<smem>>
    %123 = arith.mulf %99, %121 : vector<2x1xf32>
    %124 = vector.broadcast %122 : f32 to vector<2x1xf32>
    %125 = arith.subf %124, %123 : vector<2x1xf32>
    %126 = vector.extract_strided_slice %92 {offsets = [0, 256], sizes = [2, 256], strides = [1, 1]} : vector<2x512xf32> to vector<2x256xf32>
    %127 = vector.broadcast %121 : vector<2x1xf32> to vector<2x256xf32>
    %128 = arith.mulf %126, %127 : vector<2x256xf32>
    %129 = vector.broadcast %125 : vector<2x1xf32> to vector<2x256xf32>
    %130 = arith.addf %128, %129 : vector<2x256xf32>
    %131 = vector.extract_strided_slice %91 {offsets = [0, 512], sizes = [2, 512], strides = [1, 1]} : vector<2x1024xf32> to vector<2x512xf32>
    %cst_46 = arith.constant dense<0.000000e+00> : vector<2xf32>
    %132 = vector.multi_reduction <add>, %131, %cst_46 [1] : vector<2x512xf32> to vector<2xf32>
    %133 = vector.shape_cast %132 : vector<2xf32> to vector<2x1xf32>
    %134 = arith.mulf %131, %131 : vector<2x512xf32>
    %cst_47 = arith.constant dense<0.000000e+00> : vector<2xf32>
    %135 = vector.multi_reduction <add>, %134, %cst_47 [1] : vector<2x512xf32> to vector<2xf32>
    %136 = vector.shape_cast %135 : vector<2xf32> to vector<2x1xf32>
    %cst_48 = arith.constant 0.001953125 : f32
    %137 = vector.broadcast %cst_48 : f32 to vector<2x1xf32>
    %138 = arith.mulf %133, %137 : vector<2x1xf32>
    %cst_49 = arith.constant 0.001953125 : f32
    %139 = vector.broadcast %cst_49 : f32 to vector<2x1xf32>
    %140 = arith.mulf %136, %139 : vector<2x1xf32>
    %141 = arith.mulf %138, %138 : vector<2x1xf32>
    %142 = arith.subf %140, %141 : vector<2x1xf32>
    %cst_50 = arith.constant 9.99999974E-5 : f32
    %143 = vector.broadcast %cst_50 : f32 to vector<2x1xf32>
    %144 = arith.addf %142, %143 : vector<2x1xf32>
    %145 = math.rsqrt %144 : vector<2x1xf32>
    %c2_51 = arith.constant 2 : index
    %c2_52 = arith.constant 2 : index
    %146 = memref.load %arg4[%c2_51, %c2_52] : memref<4x4xf32, #tpu.memory_space<smem>>
    %147 = vector.broadcast %146 : f32 to vector<2x1xf32>
    %148 = arith.mulf %145, %147 : vector<2x1xf32>
    %c3_53 = arith.constant 3 : index
    %c2_54 = arith.constant 2 : index
    %149 = memref.load %arg4[%c3_53, %c2_54] : memref<4x4xf32, #tpu.memory_space<smem>>
    %150 = arith.mulf %138, %148 : vector<2x1xf32>
    %151 = vector.broadcast %149 : f32 to vector<2x1xf32>
    %152 = arith.subf %151, %150 : vector<2x1xf32>
    %153 = vector.extract_strided_slice %131 {offsets = [0, 0], sizes = [2, 256], strides = [1, 1]} : vector<2x512xf32> to vector<2x256xf32>
    %154 = vector.broadcast %148 : vector<2x1xf32> to vector<2x256xf32>
    %155 = arith.mulf %153, %154 : vector<2x256xf32>
    %156 = vector.broadcast %152 : vector<2x1xf32> to vector<2x256xf32>
    %157 = arith.addf %155, %156 : vector<2x256xf32>
    %c2_55 = arith.constant 2 : index
    %c3_56 = arith.constant 3 : index
    %158 = memref.load %arg4[%c2_55, %c3_56] : memref<4x4xf32, #tpu.memory_space<smem>>
    %159 = vector.broadcast %158 : f32 to vector<2x1xf32>
    %160 = arith.mulf %145, %159 : vector<2x1xf32>
    %c3_57 = arith.constant 3 : index
    %c3_58 = arith.constant 3 : index
    %161 = memref.load %arg4[%c3_57, %c3_58] : memref<4x4xf32, #tpu.memory_space<smem>>
    %162 = arith.mulf %138, %160 : vector<2x1xf32>
    %163 = vector.broadcast %161 : f32 to vector<2x1xf32>
    %164 = arith.subf %163, %162 : vector<2x1xf32>
    %165 = vector.extract_strided_slice %131 {offsets = [0, 256], sizes = [2, 256], strides = [1, 1]} : vector<2x512xf32> to vector<2x256xf32>
    %166 = vector.broadcast %160 : vector<2x1xf32> to vector<2x256xf32>
    %167 = arith.mulf %165, %166 : vector<2x256xf32>
    %168 = vector.broadcast %164 : vector<2x1xf32> to vector<2x256xf32>
    %169 = arith.addf %167, %168 : vector<2x256xf32>
    %170 = tpu.concatenate %118, %130, %157, %169 in 1 : vector<2x256xf32>, vector<2x256xf32>, vector<2x256xf32>, vector<2x256xf32> -> vector<2x1024xf32>
    %c0_59 = arith.constant 0 : index
    %c0_60 = arith.constant 0 : index
    %171 = vector.load %arg1[%c0_59, %c0_60] : memref<2x1024xf32, #tpu.memory_space<vmem>>, vector<2x1024xf32>
    %172 = arith.addf %170, %171 : vector<2x1024xf32>
    %cst_61 = arith.constant 0.000000e+00 : f32
    %173 = vector.broadcast %cst_61 : f32 to vector<2x1024xf32>
    %174 = arith.maximumf %172, %173 : vector<2x1024xf32>
    %c0_62 = arith.constant 0 : index
    %c0_63 = arith.constant 0 : index
    %175 = vector.load %arg5[%c0_62, %c0_63] : memref<2x1024xf32, #tpu.memory_space<vmem>>, vector<2x1024xf32>
    tpu.vector_store %arg5[%c0_62, %c0_63], %174 {strides = array<i32>} : memref<2x1024xf32, #tpu.memory_space<vmem>>, vector<2x1024xf32>,
    return
  }
  func.func @transform_0(%arg0: i32) -> (i32, i32) {
    %c0_i32 = arith.constant 0 : i32
    %c0_i32_0 = arith.constant 0 : i32
    return %arg0, %c0_i32 : i32, i32
  }
  func.func @transform_1(%arg0: i32) -> (i32, i32) {
    %c0_i32 = arith.constant 0 : i32
    %c0_i32_0 = arith.constant 0 : i32
    %c0_i32_1 = arith.constant 0 : i32
    return %c0_i32, %c0_i32_0 : i32, i32
  }
  func.func @transform_2(%arg0: i32) -> (i32, i32) {
    %c0_i32 = arith.constant 0 : i32
    %c0_i32_0 = arith.constant 0 : i32
    %c0_i32_1 = arith.constant 0 : i32
    return %c0_i32, %c0_i32_0 : i32, i32
  }
  func.func @transform_3(%arg0: i32) -> (i32, i32) {
    %c0_i32 = arith.constant 0 : i32
    %c0_i32_0 = arith.constant 0 : i32
    %c0_i32_1 = arith.constant 0 : i32
    return %c0_i32, %c0_i32_0 : i32, i32
  }
  func.func @transform_4(%arg0: i32) -> (i32, i32) {
    %c0_i32 = arith.constant 0 : i32
    %c0_i32_0 = arith.constant 0 : i32
    return %arg0, %c0_i32 : i32, i32
  }
}

</mosaic_0001>

<llo_original>
// kernel: basic_block_apply.1
$region0: #{basic_block_apply.1}
  #allocation0 [shape = 'u32[]', space=smem, size = 0x4, offset = 0x4, fixed_abs, tag = 'smem constant byte address 0x4 - core index']
  #allocation1 [shape = 'u32[144,128]{1,0:T(1,128)}', space=vmem, size = 0x12000, scoped, tag = 'internal scratch']
  %s0 = inlined_call_operand.vmem [shape: f32[2,1024], index: 0, kind: input, shape index: {}]
  %s1 = inlined_call_operand.hbm [shape: f32[1024,1024], index: 1, kind: input, shape index: {}]
  %s2 = inlined_call_operand.hbm [shape: f32[1024,1024], index: 2, kind: input, shape index: {}]
  %s3 = inlined_call_operand.hbm [shape: f32[4,4], index: 3, kind: input, shape index: {}]
  %s4 = inlined_call_operand.vmem [shape: f32[2,1024], index: 4, kind: output, shape index: {}]
  %s5 = sld [smem:[#allocation0]]
  $region38: #{basic_block_apply.1} parent=0
    _
  %s7 = ssub.s32 1, %s5
  %s8 = scalar_select 0, %s7, %s5
  $region1: #{basic_block_apply.1} parent=0
    #allocation2 [shape = 'u8[4194304]{0}', space=vmem, size = 0x400000, scoped, tag = 'input window, operand 1, single buffered']
    #allocation3 [shape = 's32[1]{0}', space=sflag, size = 0x4, scoped, tag = 'scoped memory for basic_block_apply.1']
    #allocation4 [shape = 's32[1]{0}', space=sflag, size = 0x4, scoped, tag = 'scoped memory for basic_block_apply.1']
    #allocation5 [shape = 'u8[4194304]{0}', space=vmem, size = 0x400000, scoped, tag = 'input window, operand 2, single buffered']
    #allocation6 [shape = 's32[1]{0}', space=sflag, size = 0x4, scoped, tag = 'scoped memory for basic_block_apply.1']
    #allocation7 [shape = 'u8[2048]{0}', space=smem, size = 0x800, scoped, tag = 'input window, operand 3, single buffered']
    %9 = vsyncpa [#allocation3], 0
    %10 = vsyncpa [#allocation6], 0
    %11 = vsyncpa [#allocation4], 0
    // Predicated region
    $region2: #{basic_block_apply.1} parent=1 // pred_check
      _
    $region3: #{basic_block_apply.1} parent=1 // pred_check_branch
      %13 = sbr.rel (0) target = $region5
    $region4: #{basic_block_apply.1} parent=1 // pred_region
      _
    $region5: #{basic_block_apply.1} parent=1 // pred_fallthru
      _
    // Predicated region
    $region6: #{basic_block_apply.1} parent=1 // pred_check
      _
    $region7: #{basic_block_apply.1} parent=1 // pred_check_branch
      %15 = sbr.rel (0) target = $region9
    $region8: #{basic_block_apply.1} parent=1 // pred_region
      %s17 = ssub.s32 131072, 131072
      %18 = vsyncadd [#allocation3], %s17
      %s19 = sshll.u32 [#allocation2], 4
      %s20 = int_to_ptr.vmem [resolvable:$true] %s19
      %25 = dma.hbm_to_vmem [thread:$0]  %s1, 131072, %s20, [#allocation3], 1024, 1024, 64
    $region9: #{basic_block_apply.1} parent=1 // pred_fallthru
      _
    // Predicated region
    $region10: #{basic_block_apply.1} parent=1 // pred_check
      _
    $region11: #{basic_block_apply.1} parent=1 // pred_check_branch
      %27 = sbr.rel (0) target = $region13
    $region12: #{basic_block_apply.1} parent=1 // pred_region
      %s29 = ssub.s32 131072, 131072
      %30 = vsyncadd [#allocation6], %s29
      %s31 = sshll.u32 [#allocation5], 4
      %s32 = int_to_ptr.vmem [resolvable:$true] %s31
      %37 = dma.hbm_to_vmem [thread:$0]  %s2, 131072, %s32, [#allocation6], 1024, 1024, 64
    $region13: #{basic_block_apply.1} parent=1 // pred_fallthru
      _
    // Predicated region
    $region14: #{basic_block_apply.1} parent=1 // pred_check
      _
    $region15: #{basic_block_apply.1} parent=1 // pred_check_branch
      %39 = sbr.rel (0) target = $region17
    $region16: #{basic_block_apply.1} parent=1 // pred_region
      %s41 = ssub.s32 64, 64
      %42 = vsyncadd [#allocation4], %s41
      %45 = dma.hbm_to_smem %s3, 64, [#allocation7], [#allocation4]
    $region17: #{basic_block_apply.1} parent=1 // pred_fallthru
      _
    // Predicated region
    $region18: #{basic_block_apply.1} parent=1 // pred_check
      _
    $region19: #{basic_block_apply.1} parent=1 // pred_check_branch
      %47 = sbr.rel (0) target = $region21
    $region20: #{basic_block_apply.1} parent=1 // pred_region
      %48 = dma.done [#allocation3], 131072
    $region21: #{basic_block_apply.1} parent=1 // pred_fallthru
      _
    // Predicated region
    $region22: #{basic_block_apply.1} parent=1 // pred_check
      _
    $region23: #{basic_block_apply.1} parent=1 // pred_check_branch
      %50 = sbr.rel (0) target = $region25
    $region24: #{basic_block_apply.1} parent=1 // pred_region
      %51 = dma.done [#allocation6], 131072
    $region25: #{basic_block_apply.1} parent=1 // pred_fallthru
      _
    // Predicated region
    $region26: #{basic_block_apply.1} parent=1 // pred_check
      _
    $region27: #{basic_block_apply.1} parent=1 // pred_check_branch
      %53 = sbr.rel (0) target = $region29
    $region28: #{basic_block_apply.1} parent=1 // pred_region
      %54 = dma.done [#allocation4], 64
    $region29: #{basic_block_apply.1} parent=1 // pred_fallthru
      _
    %55 = sfence
    %v56 = vld [vmem:[%s0] sm:$0xff]
    %v57 = vld [vmem:[%s0 + $0x8] sm:$0xff]
    %v58 = vld [vmem:[#allocation2] sm:$0xff]
    %v59 = vld [vmem:[#allocation2 + $0x8] sm:$0xff]
    %v60 = vld [vmem:[#allocation2 + $0x10] sm:$0xff]
    %v61 = vld [vmem:[#allocation2 + $0x18] sm:$0xff]
    %v62 = vld [vmem:[#allocation2 + $0x20] sm:$0xff]
    %v63 = vld [vmem:[#allocation2 + $0x28] sm:$0xff]
    %v64 = vld [vmem:[#allocation2 + $0x30] sm:$0xff]
    %v65 = vld [vmem:[#allocation2 + $0x38] sm:$0xff]
    %v66 = vld [vmem:[#allocation2 + $0x40] sm:$0xff]
    %v67 = vld [vmem:[#allocation2 + $0x48] sm:$0xff]
    %v68 = vld [vmem:[#allocation2 + $0x50] sm:$0xff]
    %v69 = vld [vmem:[#allocation2 + $0x58] sm:$0xff]
    %v70 = vld [vmem:[#allocation2 + $0x60] sm:$0xff]
    %v71 = vld [vmem:[#allocation2 + $0x68] sm:$0xff]
    %v72 = vld [vmem:[#allocation2 + $0x70] sm:$0xff]
    %v73 = vld [vmem:[#allocation2 + $0x78] sm:$0xff]
    %v74 = vld [vmem:[#allocation2 + $0x80] sm:$0xff]
    %v75 = vld [vmem:[#allocation2 + $0x88] sm:$0xff]
    %v76 = vld [vmem:[#allocation2 + $0x90] sm:$0xff]
    %v77 = vld [vmem:[#allocation2 + $0x98] sm:$0xff]
    %v78 = vld [vmem:[#allocation2 + $0xa0] sm:$0xff]
    %v79 = vld [vmem:[#allocation2 + $0xa8] sm:$0xff]
    %v80 = vld [vmem:[#allocation2 + $0xb0] sm:$0xff]
    %v81 = vld [vmem:[#allocation2 + $0xb8] sm:$0xff]
    %v82 = vld [vmem:[#allocation2 + $0xc0] sm:$0xff]
    %v83 = vld [vmem:[#allocation2 + $0xc8] sm:$0xff]
    %v84 = vld [vmem:[#allocation2 + $0xd0] sm:$0xff]
    %v85 = vld [vmem:[#allocation2 + $0xd8] sm:$0xff]
    %v86 = vld [vmem:[#allocation2 + $0xe0] sm:$0xff]
    %v87 = vld [vmem:[#allocation2 + $0xe8] sm:$0xff]
    %v88 = vld [vmem:[#allocation2 + $0xf0] sm:$0xff]
    %v89 = vld [vmem:[#allocation2 + $0xf8] sm:$0xff]
    %v90 = vld [vmem:[#allocation2 + $0x100] sm:$0xff]
    %v91 = vld [vmem:[#allocation2 + $0x108] sm:$0xff]
    %v92 = vld [vmem:[#allocation2 + $0x110] sm:$0xff]
    %v93 = vld [vmem:[#allocation2 + $0x118] sm:$0xff]
    %v94 = vld [vmem:[#allocation2 + $0x120] sm:$0xff]
    %v95 = vld [vmem:[#allocation2 + $0x128] sm:$0xff]
    %v96 = vld [vmem:[#allocation2 + $0x130] sm:$0xff]
    %v97 = vld [vmem:[#allocation2 + $0x138] sm:$0xff]
    %v98 = vld [vmem:[#allocation2 + $0x140] sm:$0xff]
    %v99 = vld [vmem:[#allocation2 + $0x148] sm:$0xff]
    %v100 = vld [vmem:[#allocation2 + $0x150] sm:$0xff]
    %v101 = vld [vmem:[#allocation2 + $0x158] sm:$0xff]
    %v102 = vld [vmem:[#allocation2 + $0x160] sm:$0xff]
    %v103 = vld [vmem:[#allocation2 + $0x168] sm:$0xff]
    %v104 = vld [vmem:[#allocation2 + $0x170] sm:$0xff]
    %v105 = vld [vmem:[#allocation2 + $0x178] sm:$0xff]
    %v106 = vld [vmem:[#allocation2 + $0x180] sm:$0xff]
    %v107 = vld [vmem:[#allocation2 + $0x188] sm:$0xff]
    %v108 = vld [vmem:[#allocation2 + $0x190] sm:$0xff]
    %v109 = vld [vmem:[#allocation2 + $0x198] sm:$0xff]
    %v110 = vld [vmem:[#allocation2 + $0x1a0] sm:$0xff]
    %v111 = vld [vmem:[#allocation2 + $0x1a8] sm:$0xff]
    %v112 = vld [vmem:[#allocation2 + $0x1b0] sm:$0xff]
    %v113 = vld [vmem:[#allocation2 + $0x1b8] sm:$0xff]
    %v114 = vld [vmem:[#allocation2 + $0x1c0] sm:$0xff]
    %v115 = vld [vmem:[#allocation2 + $0x1c8] sm:$0xff]
    %v116 = vld [vmem:[#allocation2 + $0x1d0] sm:$0xff]
    %v117 = vld [vmem:[#allocation2 + $0x1d8] sm:$0xff]
    %v118 = vld [vmem:[#allocation2 + $0x1e0] sm:$0xff]
    %v119 = vld [vmem:[#allocation2 + $0x1e8] sm:$0xff]
    %v120 = vld [vmem:[#allocation2 + $0x1f0] sm:$0xff]
    %v121 = vld [vmem:[#allocation2 + $0x1f8] sm:$0xff]
    %v122 = vld [vmem:[#allocation2 + $0x200] sm:$0xff]
    %v123 = vld [vmem:[#allocation2 + $0x208] sm:$0xff]
    %v124 = vld [vmem:[#allocation2 + $0x210] sm:$0xff]
    %v125 = vld [vmem:[#allocation2 + $0x218] sm:$0xff]
    %v126 = vld [vmem:[#allocation2 + $0x220] sm:$0xff]
    %v127 = vld [vmem:[#allocation2 + $0x228] sm:$0xff]
    %v128 = vld [vmem:[#allocation2 + $0x230] sm:$0xff]
    %v129 = vld [vmem:[#allocation2 + $0x238] sm:$0xff]
    %v130 = vld [vmem:[#allocation2 + $0x240] sm:$0xff]
    %v131 = vld [vmem:[#allocation2 + $0x248] sm:$0xff]
    %v132 = vld [vmem:[#allocation2 + $0x250] sm:$0xff]
    %v133 = vld [vmem:[#allocation2 + $0x258] sm:$0xff]
    %v134 = vld [vmem:[#allocation2 + $0x260] sm:$0xff]
    %v135 = vld [vmem:[#allocation2 + $0x268] sm:$0xff]
    %v136 = vld [vmem:[#allocation2 + $0x270] sm:$0xff]
    %v137 = vld [vmem:[#allocation2 + $0x278] sm:$0xff]
    %v138 = vld [vmem:[#allocation2 + $0x280] sm:$0xff]
    %v139 = vld [vmem:[#allocation2 + $0x288] sm:$0xff]
    %v140 = vld [vmem:[#allocation2 + $0x290] sm:$0xff]
    %v141 = vld [vmem:[#allocation2 + $0x298] sm:$0xff]
    %v142 = vld [vmem:[#allocation2 + $0x2a0] sm:$0xff]
    %v143 = vld [vmem:[#allocation2 + $0x2a8] sm:$0xff]
    %v144 = vld [vmem:[#allocation2 + $0x2b0] sm:$0xff]
    %v145 = vld [vmem:[#allocation2 + $0x2b8] sm:$0xff]
    %v146 = vld [vmem:[#allocation2 + $0x2c0] sm:$0xff]
    %v147 = vld [vmem:[#allocation2 + $0x2c8] sm:$0xff]
    %v148 = vld [vmem:[#allocation2 + $0x2d0] sm:$0xff]
    %v149 = vld [vmem:[#allocation2 + $0x2d8] sm:$0xff]
    %v150 = vld [vmem:[#allocation2 + $0x2e0] sm:$0xff]
    %v151 = vld [vmem:[#allocation2 + $0x2e8] sm:$0xff]
    %v152 = vld [vmem:[#allocation2 + $0x2f0] sm:$0xff]
    %v153 = vld [vmem:[#allocation2 + $0x2f8] sm:$0xff]
    %v154 = vld [vmem:[#allocation2 + $0x300] sm:$0xff]
    %v155 = vld [vmem:[#allocation2 + $0x308] sm:$0xff]
    %v156 = vld [vmem:[#allocation2 + $0x310] sm:$0xff]
    %v157 = vld [vmem:[#allocation2 + $0x318] sm:$0xff]
    %v158 = vld [vmem:[#allocation2 + $0x320] sm:$0xff]
    %v159 = vld [vmem:[#allocation2 + $0x328] sm:$0xff]
    %v160 = vld [vmem:[#allocation2 + $0x330] sm:$0xff]
    %v161 = vld [vmem:[#allocation2 + $0x338] sm:$0xff]
    %v162 = vld [vmem:[#allocation2 + $0x340] sm:$0xff]
    %v163 = vld [vmem:[#allocation2 + $0x348] sm:$0xff]
    %v164 = vld [vmem:[#allocation2 + $0x350] sm:$0xff]
    %v165 = vld [vmem:[#allocation2 + $0x358] sm:$0xff]
    %v166 = vld [vmem:[#allocation2 + $0x360] sm:$0xff]
    %v167 = vld [vmem:[#allocation2 + $0x368] sm:$0xff]
    %v168 = vld [vmem:[#allocation2 + $0x370] sm:$0xff]
    %v169 = vld [vmem:[#allocation2 + $0x378] sm:$0xff]
    %v170 = vld [vmem:[#allocation2 + $0x380] sm:$0xff]
    %v171 = vld [vmem:[#allocation2 + $0x388] sm:$0xff]
    %v172 = vld [vmem:[#allocation2 + $0x390] sm:$0xff]
    %v173 = vld [vmem:[#allocation2 + $0x398] sm:$0xff]
    %v174 = vld [vmem:[#allocation2 + $0x3a0] sm:$0xff]
    %v175 = vld [vmem:[#allocation2 + $0x3a8] sm:$0xff]
    %v176 = vld [vmem:[#allocation2 + $0x3b0] sm:$0xff]
    %v177 = vld [vmem:[#allocation2 + $0x3b8] sm:$0xff]
    %v178 = vld [vmem:[#allocation2 + $0x3c0] sm:$0xff]
    %v179 = vld [vmem:[#allocation2 + $0x3c8] sm:$0xff]
    %v180 = vld [vmem:[#allocation2 + $0x3d0] sm:$0xff]
    %v181 = vld [vmem:[#allocation2 + $0x3d8] sm:$0xff]
    %v182 = vld [vmem:[#allocation2 + $0x3e0] sm:$0xff]
    %v183 = vld [vmem:[#allocation2 + $0x3e8] sm:$0xff]
    %v184 = vld [vmem:[#allocation2 + $0x3f0] sm:$0xff]
    %v185 = vld [vmem:[#allocation2 + $0x3f8] sm:$0xff]
    %v186 = vld [vmem:[#allocation2 + $0x400] sm:$0xff]
    %v187 = vld [vmem:[#allocation2 + $0x408] sm:$0xff]
    %v188 = vld [vmem:[#allocation2 + $0x410] sm:$0xff]
    %v189 = vld [vmem:[#allocation2 + $0x418] sm:$0xff]
    %v190 = vld [vmem:[#allocation2 + $0x420] sm:$0xff]
    %v191 = vld [vmem:[#allocation2 + $0x428] sm:$0xff]
    %v192 = vld [vmem:[#allocation2 + $0x430] sm:$0xff]
    %v193 = vld [vmem:[#allocation2 + $0x438] sm:$0xff]
    %v194 = vld [vmem:[#allocation2 + $0x440] sm:$0xff]
    %v195 = vld [vmem:[#allocation2 + $0x448] sm:$0xff]
    %v196 = vld [vmem:[#allocation2 + $0x450] sm:$0xff]
    %v197 = vld [vmem:[#allocation2 + $0x458] sm:$0xff]
    %v198 = vld [vmem:[#allocation2 + $0x460] sm:$0xff]
    %v199 = vld [vmem:[#allocation2 + $0x468] sm:$0xff]
    %v200 = vld [vmem:[#allocation2 + $0x470] sm:$0xff]
    %v201 = vld [vmem:[#allocation2 + $0x478] sm:$0xff]
    %v202 = vld [vmem:[#allocation2 + $0x480] sm:$0xff]
    %v203 = vld [vmem:[#allocation2 + $0x488] sm:$0xff]
    %v204 = vld [vmem:[#allocation2 + $0x490] sm:$0xff]
    %v205 = vld [vmem:[#allocation2 + $0x498] sm:$0xff]
    %v206 = vld [vmem:[#allocation2 + $0x4a0] sm:$0xff]
    %v207 = vld [vmem:[#allocation2 + $0x4a8] sm:$0xff]
    %v208 = vld [vmem:[#allocation2 + $0x4b0] sm:$0xff]
    %v209 = vld [vmem:[#allocation2 + $0x4b8] sm:$0xff]
    %v210 = vld [vmem:[#allocation2 + $0x4c0] sm:$0xff]
    %v211 = vld [vmem:[#allocation2 + $0x4c8] sm:$0xff]
    %v212 = vld [vmem:[#allocation2 + $0x4d0] sm:$0xff]
    %v213 = vld [vmem:[#allocation2 + $0x4d8] sm:$0xff]
    %v214 = vld [vmem:[#allocation2 + $0x4e0] sm:$0xff]
    %v215 = vld [vmem:[#allocation2 + $0x4e8] sm:$0xff]
    %v216 = vld [vmem:[#allocation2 + $0x4f0] sm:$0xff]
    %v217 = vld [vmem:[#allocation2 + $0x4f8] sm:$0xff]
    %v218 = vld [vmem:[#allocation2 + $0x500] sm:$0xff]
    %v219 = vld [vmem:[#allocation2 + $0x508] sm:$0xff]
    %v220 = vld [vmem:[#allocation2 + $0x510] sm:$0xff]
    %v221 = vld [vmem:[#allocation2 + $0x518] sm:$0xff]
    %v222 = vld [vmem:[#allocation2 + $0x520] sm:$0xff]
    %v223 = vld [vmem:[#allocation2 + $0x528] sm:$0xff]
    %v224 = vld [vmem:[#allocation2 + $0x530] sm:$0xff]
    %v225 = vld [vmem:[#allocation2 + $0x538] sm:$0xff]
    %v226 = vld [vmem:[#allocation2 + $0x540] sm:$0xff]
    %v227 = vld [vmem:[#allocation2 + $0x548] sm:$0xff]
    %v228 = vld [vmem:[#allocation2 + $0x550] sm:$0xff]
    %v229 = vld [vmem:[#allocation2 + $0x558] sm:$0xff]
    %v230 = vld [vmem:[#allocation2 + $0x560] sm:$0xff]
    %v231 = vld [vmem:[#allocation2 + $0x568] sm:$0xff]
    %v232 = vld [vmem:[#allocation2 + $0x570] sm:$0xff]
    %v233 = vld [vmem:[#allocation2 + $0x578] sm:$0xff]
    %v234 = vld [vmem:[#allocation2 + $0x580] sm:$0xff]
    %v235 = vld [vmem:[#allocation2 + $0x588] sm:$0xff]
    %v236 = vld [vmem:[#allocation2 + $0x590] sm:$0xff]
    %v237 = vld [vmem:[#allocation2 + $0x598] sm:$0xff]
    %v238 = vld [vmem:[#allocation2 + $0x5a0] sm:$0xff]
    %v239 = vld [vmem:[#allocation2 + $0x5a8] sm:$0xff]
    %v240 = vld [vmem:[#allocation2 + $0x5b0] sm:$0xff]
    %v241 = vld [vmem:[#allocation2 + $0x5b8] sm:$0xff]
    %v242 = vld [vmem:[#allocation2 + $0x5c0] sm:$0xff]
    %v243 = vld [vmem:[#allocation2 + $0x5c8] sm:$0xff]
    %v244 = vld [vmem:[#allocation2 + $0x5d0] sm:$0xff]
    %v245 = vld [vmem:[#allocation2 + $0x5d8] sm:$0xff]
    %v246 = vld [vmem:[#allocation2 + $0x5e0] sm:$0xff]
    %v247 = vld [vmem:[#allocation2 + $0x5e8] sm:$0xff]
    %v248 = vld [vmem:[#allocation2 + $0x5f0] sm:$0xff]
    %v249 = vld [vmem:[#allocation2 + $0x5f8] sm:$0xff]
    %v250 = vld [vmem:[#allocation2 + $0x600] sm:$0xff]
    %v251 = vld [vmem:[#allocation2 + $0x608] sm:$0xff]
    %v252 = vld [vmem:[#allocation2 + $0x610] sm:$0xff]
    %v253 = vld [vmem:[#allocation2 + $0x618] sm:$0xff]
    %v254 = vld [vmem:[#allocation2 + $0x620] sm:$0xff]
    %v255 = vld [vmem:[#allocation2 + $0x628] sm:$0xff]
    %v256 = vld [vmem:[#allocation2 + $0x630] sm:$0xff]
    %v257 = vld [vmem:[#allocation2 + $0x638] sm:$0xff]
    %v258 = vld [vmem:[#allocation2 + $0x640] sm:$0xff]
    %v259 = vld [vmem:[#allocation2 + $0x648] sm:$0xff]
    %v260 = vld [vmem:[#allocation2 + $0x650] sm:$0xff]
    %v261 = vld [vmem:[#allocation2 + $0x658] sm:$0xff]
    %v262 = vld [vmem:[#allocation2 + $0x660] sm:$0xff]
    %v263 = vld [vmem:[#allocation2 + $0x668] sm:$0xff]
    %v264 = vld [vmem:[#allocation2 + $0x670] sm:$0xff]
    %v265 = vld [vmem:[#allocation2 + $0x678] sm:$0xff]
    %v266 = vld [vmem:[#allocation2 + $0x680] sm:$0xff]
    %v267 = vld [vmem:[#allocation2 + $0x688] sm:$0xff]
    %v268 = vld [vmem:[#allocation2 + $0x690] sm:$0xff]
    %v269 = vld [vmem:[#allocation2 + $0x698] sm:$0xff]
    %v270 = vld [vmem:[#allocation2 + $0x6a0] sm:$0xff]
    %v271 = vld [vmem:[#allocation2 + $0x6a8] sm:$0xff]
    %v272 = vld [vmem:[#allocation2 + $0x6b0] sm:$0xff]
    %v273 = vld [vmem:[#allocation2 + $0x6b8] sm:$0xff]
    %v274 = vld [vmem:[#allocation2 + $0x6c0] sm:$0xff]
    %v275 = vld [vmem:[#allocation2 + $0x6c8] sm:$0xff]
    %v276 = vld [vmem:[#allocation2 + $0x6d0] sm:$0xff]
    %v277 = vld [vmem:[#allocation2 + $0x6d8] sm:$0xff]
    %v278 = vld [vmem:[#allocation2 + $0x6e0] sm:$0xff]
    %v279 = vld [vmem:[#allocation2 + $0x6e8] sm:$0xff]
    %v280 = vld [vmem:[#allocation2 + $0x6f0] sm:$0xff]
    %v281 = vld [vmem:[#allocation2 + $0x6f8] sm:$0xff]
    %v282 = vld [vmem:[#allocation2 + $0x700] sm:$0xff]
    %v283 = vld [vmem:[#allocation2 + $0x708] sm:$0xff]
    %v284 = vld [vmem:[#allocation2 + $0x710] sm:$0xff]
    %v285 = vld [vmem:[#allocation2 + $0x718] sm:$0xff]
    %v286 = vld [vmem:[#allocation2 + $0x720] sm:$0xff]
    %v287 = vld [vmem:[#allocation2 + $0x728] sm:$0xff]
    %v288 = vld [vmem:[#allocation2 + $0x730] sm:$0xff]
    %v289 = vld [vmem:[#allocation2 + $0x738] sm:$0xff]
    %v290 = vld [vmem:[#allocation2 + $0x740] sm:$0xff]
    %v291 = vld [vmem:[#allocation2 + $0x748] sm:$0xff]
    %v292 = vld [vmem:[#allocation2 + $0x750] sm:$0xff]
    %v293 = vld [vmem:[#allocation2 + $0x758] sm:$0xff]
    %v294 = vld [vmem:[#allocation2 + $0x760] sm:$0xff]
    %v295 = vld [vmem:[#allocation2 + $0x768] sm:$0xff]
    %v296 = vld [vmem:[#allocation2 + $0x770] sm:$0xff]
    %v297 = vld [vmem:[#allocation2 + $0x778] sm:$0xff]
    %v298 = vld [vmem:[#allocation2 + $0x780] sm:$0xff]
    %v299 = vld [vmem:[#allocation2 + $0x788] sm:$0xff]
    %v300 = vld [vmem:[#allocation2 + $0x790] sm:$0xff]
    %v301 = vld [vmem:[#allocation2 + $0x798] sm:$0xff]
    %v302 = vld [vmem:[#allocation2 + $0x7a0] sm:$0xff]
    %v303 = vld [vmem:[#allocation2 + $0x7a8] sm:$0xff]
    %v304 = vld [vmem:[#allocation2 + $0x7b0] sm:$0xff]
    %v305 = vld [vmem:[#allocation2 + $0x7b8] sm:$0xff]
    %v306 = vld [vmem:[#allocation2 + $0x7c0] sm:$0xff]
    %v307 = vld [vmem:[#allocation2 + $0x7c8] sm:$0xff]
    %v308 = vld [vmem:[#allocation2 + $0x7d0] sm:$0xff]
    %v309 = vld [vmem:[#allocation2 + $0x7d8] sm:$0xff]
    %v310 = vld [vmem:[#allocation2 + $0x7e0] sm:$0xff]
    %v311 = vld [vmem:[#allocation2 + $0x7e8] sm:$0xff]
    %v312 = vld [vmem:[#allocation2 + $0x7f0] sm:$0xff]
    %v313 = vld [vmem:[#allocation2 + $0x7f8] sm:$0xff]
    %v314 = vld [vmem:[#allocation2 + $0x800] sm:$0xff]
    %v315 = vld [vmem:[#allocation2 + $0x808] sm:$0xff]
    %v316 = vld [vmem:[#allocation2 + $0x810] sm:$0xff]
    %v317 = vld [vmem:[#allocation2 + $0x818] sm:$0xff]
    %v318 = vld [vmem:[#allocation2 + $0x820] sm:$0xff]
    %v319 = vld [vmem:[#allocation2 + $0x828] sm:$0xff]
    %v320 = vld [vmem:[#allocation2 + $0x830] sm:$0xff]
    %v321 = vld [vmem:[#allocation2 + $0x838] sm:$0xff]
    %v322 = vld [vmem:[#allocation2 + $0x840] sm:$0xff]
    %v323 = vld [vmem:[#allocation2 + $0x848] sm:$0xff]
    %v324 = vld [vmem:[#allocation2 + $0x850] sm:$0xff]
    %v325 = vld [vmem:[#allocation2 + $0x858] sm:$0xff]
    %v326 = vld [vmem:[#allocation2 + $0x860] sm:$0xff]
    %v327 = vld [vmem:[#allocation2 + $0x868] sm:$0xff]
    %v328 = vld [vmem:[#allocation2 + $0x870] sm:$0xff]
    %v329 = vld [vmem:[#allocation2 + $0x878] sm:$0xff]
    %v330 = vld [vmem:[#allocation2 + $0x880] sm:$0xff]
    %v331 = vld [vmem:[#allocation2 + $0x888] sm:$0xff]
    %v332 = vld [vmem:[#allocation2 + $0x890] sm:$0xff]
    %v333 = vld [vmem:[#allocation2 + $0x898] sm:$0xff]
    %v334 = vld [vmem:[#allocation2 + $0x8a0] sm:$0xff]
    %v335 = vld [vmem:[#allocation2 + $0x8a8] sm:$0xff]
    %v336 = vld [vmem:[#allocation2 + $0x8b0] sm:$0xff]
    %v337 = vld [vmem:[#allocation2 + $0x8b8] sm:$0xff]
    %v338 = vld [vmem:[#allocation2 + $0x8c0] sm:$0xff]
    %v339 = vld [vmem:[#allocation2 + $0x8c8] sm:$0xff]
    %v340 = vld [vmem:[#allocation2 + $0x8d0] sm:$0xff]
    %v341 = vld [vmem:[#allocation2 + $0x8d8] sm:$0xff]
    %v342 = vld [vmem:[#allocation2 + $0x8e0] sm:$0xff]
    %v343 = vld [vmem:[#allocation2 + $0x8e8] sm:$0xff]
    %v344 = vld [vmem:[#allocation2 + $0x8f0] sm:$0xff]
    %v345 = vld [vmem:[#allocation2 + $0x8f8] sm:$0xff]
    %v346 = vld [vmem:[#allocation2 + $0x900] sm:$0xff]
    %v347 = vld [vmem:[#allocation2 + $0x908] sm:$0xff]
    %v348 = vld [vmem:[#allocation2 + $0x910] sm:$0xff]
    %v349 = vld [vmem:[#allocation2 + $0x918] sm:$0xff]
    %v350 = vld [vmem:[#allocation2 + $0x920] sm:$0xff]
    %v351 = vld [vmem:[#allocation2 + $0x928] sm:$0xff]
    %v352 = vld [vmem:[#allocation2 + $0x930] sm:$0xff]
    %v353 = vld [vmem:[#allocation2 + $0x938] sm:$0xff]
    %v354 = vld [vmem:[#allocation2 + $0x940] sm:$0xff]
    %v355 = vld [vmem:[#allocation2 + $0x948] sm:$0xff]
    %v356 = vld [vmem:[#allocation2 + $0x950] sm:$0xff]
    %v357 = vld [vmem:[#allocation2 + $0x958] sm:$0xff]
    %v358 = vld [vmem:[#allocation2 + $0x960] sm:$0xff]
    %v359 = vld [vmem:[#allocation2 + $0x968] sm:$0xff]
    %v360 = vld [vmem:[#allocation2 + $0x970] sm:$0xff]
    %v361 = vld [vmem:[#allocation2 + $0x978] sm:$0xff]
    %v362 = vld [vmem:[#allocation2 + $0x980] sm:$0xff]
    %v363 = vld [vmem:[#allocation2 + $0x988] sm:$0xff]
    %v364 = vld [vmem:[#allocation2 + $0x990] sm:$0xff]
    %v365 = vld [vmem:[#allocation2 + $0x998] sm:$0xff]
    %v366 = vld [vmem:[#allocation2 + $0x9a0] sm:$0xff]
    %v367 = vld [vmem:[#allocation2 + $0x9a8] sm:$0xff]
    %v368 = vld [vmem:[#allocation2 + $0x9b0] sm:$0xff]
    %v369 = vld [vmem:[#allocation2 + $0x9b8] sm:$0xff]
    %v370 = vld [vmem:[#allocation2 + $0x9c0] sm:$0xff]
    %v371 = vld [vmem:[#allocation2 + $0x9c8] sm:$0xff]
    %v372 = vld [vmem:[#allocation2 + $0x9d0] sm:$0xff]
    %v373 = vld [vmem:[#allocation2 + $0x9d8] sm:$0xff]
    %v374 = vld [vmem:[#allocation2 + $0x9e0] sm:$0xff]
    %v375 = vld [vmem:[#allocation2 + $0x9e8] sm:$0xff]
    %v376 = vld [vmem:[#allocation2 + $0x9f0] sm:$0xff]
    %v377 = vld [vmem:[#allocation2 + $0x9f8] sm:$0xff]
    %v378 = vld [vmem:[#allocation2 + $0xa00] sm:$0xff]
    %v379 = vld [vmem:[#allocation2 + $0xa08] sm:$0xff]
    %v380 = vld [vmem:[#allocation2 + $0xa10] sm:$0xff]
    %v381 = vld [vmem:[#allocation2 + $0xa18] sm:$0xff]
    %v382 = vld [vmem:[#allocation2 + $0xa20] sm:$0xff]
    %v383 = vld [vmem:[#allocation2 + $0xa28] sm:$0xff]
    %v384 = vld [vmem:[#allocation2 + $0xa30] sm:$0xff]
    %v385 = vld [vmem:[#allocation2 + $0xa38] sm:$0xff]
    %v386 = vld [vmem:[#allocation2 + $0xa40] sm:$0xff]
    %v387 = vld [vmem:[#allocation2 + $0xa48] sm:$0xff]
    %v388 = vld [vmem:[#allocation2 + $0xa50] sm:$0xff]
    %v389 = vld [vmem:[#allocation2 + $0xa58] sm:$0xff]
    %v390 = vld [vmem:[#allocation2 + $0xa60] sm:$0xff]
    %v391 = vld [vmem:[#allocation2 + $0xa68] sm:$0xff]
    %v392 = vld [vmem:[#allocation2 + $0xa70] sm:$0xff]
    %v393 = vld [vmem:[#allocation2 + $0xa78] sm:$0xff]
    %v394 = vld [vmem:[#allocation2 + $0xa80] sm:$0xff]
    %v395 = vld [vmem:[#allocation2 + $0xa88] sm:$0xff]
    %v396 = vld [vmem:[#allocation2 + $0xa90] sm:$0xff]
    %v397 = vld [vmem:[#allocation2 + $0xa98] sm:$0xff]
    %v398 = vld [vmem:[#allocation2 + $0xaa0] sm:$0xff]
    %v399 = vld [vmem:[#allocation2 + $0xaa8] sm:$0xff]
    %v400 = vld [vmem:[#allocation2 + $0xab0] sm:$0xff]
    %v401 = vld [vmem:[#allocation2 + $0xab8] sm:$0xff]
    %v402 = vld [vmem:[#allocation2 + $0xac0] sm:$0xff]
    %v403 = vld [vmem:[#allocation2 + $0xac8] sm:$0xff]
    %v404 = vld [vmem:[#allocation2 + $0xad0] sm:$0xff]
    %v405 = vld [vmem:[#allocation2 + $0xad8] sm:$0xff]
    %v406 = vld [vmem:[#allocation2 + $0xae0] sm:$0xff]
    %v407 = vld [vmem:[#allocation2 + $0xae8] sm:$0xff]
    %v408 = vld [vmem:[#allocation2 + $0xaf0] sm:$0xff]
    %v409 = vld [vmem:[#allocation2 + $0xaf8] sm:$0xff]
    %v410 = vld [vmem:[#allocation2 + $0xb00] sm:$0xff]
    %v411 = vld [vmem:[#allocation2 + $0xb08] sm:$0xff]
    %v412 = vld [vmem:[#allocation2 + $0xb10] sm:$0xff]
    %v413 = vld [vmem:[#allocation2 + $0xb18] sm:$0xff]
    %v414 = vld [vmem:[#allocation2 + $0xb20] sm:$0xff]
    %v415 = vld [vmem:[#allocation2 + $0xb28] sm:$0xff]
    %v416 = vld [vmem:[#allocation2 + $0xb30] sm:$0xff]
    %v417 = vld [vmem:[#allocation2 + $0xb38] sm:$0xff]
    %v418 = vld [vmem:[#allocation2 + $0xb40] sm:$0xff]
    %v419 = vld [vmem:[#allocation2 + $0xb48] sm:$0xff]
    %v420 = vld [vmem:[#allocation2 + $0xb50] sm:$0xff]
    %v421 = vld [vmem:[#allocation2 + $0xb58] sm:$0xff]
    %v422 = vld [vmem:[#allocation2 + $0xb60] sm:$0xff]
    %v423 = vld [vmem:[#allocation2 + $0xb68] sm:$0xff]
    %v424 = vld [vmem:[#allocation2 + $0xb70] sm:$0xff]
    %v425 = vld [vmem:[#allocation2 + $0xb78] sm:$0xff]
    %v426 = vld [vmem:[#allocation2 + $0xb80] sm:$0xff]
    %v427 = vld [vmem:[#allocation2 + $0xb88] sm:$0xff]
    %v428 = vld [vmem:[#allocation2 + $0xb90] sm:$0xff]
    %v429 = vld [vmem:[#allocation2 + $0xb98] sm:$0xff]
    %v430 = vld [vmem:[#allocation2 + $0xba0] sm:$0xff]
    %v431 = vld [vmem:[#allocation2 + $0xba8] sm:$0xff]
    %v432 = vld [vmem:[#allocation2 + $0xbb0] sm:$0xff]
    %v433 = vld [vmem:[#allocation2 + $0xbb8] sm:$0xff]
    %v434 = vld [vmem:[#allocation2 + $0xbc0] sm:$0xff]
    %v435 = vld [vmem:[#allocation2 + $0xbc8] sm:$0xff]
    %v436 = vld [vmem:[#allocation2 + $0xbd0] sm:$0xff]
    %v437 = vld [vmem:[#allocation2 + $0xbd8] sm:$0xff]
    %v438 = vld [vmem:[#allocation2 + $0xbe0] sm:$0xff]
    %v439 = vld [vmem:[#allocation2 + $0xbe8] sm:$0xff]
    %v440 = vld [vmem:[#allocation2 + $0xbf0] sm:$0xff]
    %v441 = vld [vmem:[#allocation2 + $0xbf8] sm:$0xff]
    %v442 = vld [vmem:[#allocation2 + $0xc00] sm:$0xff]
    %v443 = vld [vmem:[#allocation2 + $0xc08] sm:$0xff]
    %v444 = vld [vmem:[#allocation2 + $0xc10] sm:$0xff]
    %v445 = vld [vmem:[#allocation2 + $0xc18] sm:$0xff]
    %v446 = vld [vmem:[#allocation2 + $0xc20] sm:$0xff]
    %v447 = vld [vmem:[#allocation2 + $0xc28] sm:$0xff]
    %v448 = vld [vmem:[#allocation2 + $0xc30] sm:$0xff]
    %v449 = vld [vmem:[#allocation2 + $0xc38] sm:$0xff]
    %v450 = vld [vmem:[#allocation2 + $0xc40] sm:$0xff]
    %v451 = vld [vmem:[#allocation2 + $0xc48] sm:$0xff]
    %v452 = vld [vmem:[#allocation2 + $0xc50] sm:$0xff]
    %v453 = vld [vmem:[#allocation2 + $0xc58] sm:$0xff]
    %v454 = vld [vmem:[#allocation2 + $0xc60] sm:$0xff]
    %v455 = vld [vmem:[#allocation2 + $0xc68] sm:$0xff]
    %v456 = vld [vmem:[#allocation2 + $0xc70] sm:$0xff]
    %v457 = vld [vmem:[#allocation2 + $0xc78] sm:$0xff]
    %v458 = vld [vmem:[#allocation2 + $0xc80] sm:$0xff]
    %v459 = vld [vmem:[#allocation2 + $0xc88] sm:$0xff]
    %v460 = vld [vmem:[#allocation2 + $0xc90] sm:$0xff]
    %v461 = vld [vmem:[#allocation2 + $0xc98] sm:$0xff]
    %v462 = vld [vmem:[#allocation2 + $0xca0] sm:$0xff]
    %v463 = vld [vmem:[#allocation2 + $0xca8] sm:$0xff]
    %v464 = vld [vmem:[#allocation2 + $0xcb0] sm:$0xff]
    %v465 = vld [vmem:[#allocation2 + $0xcb8] sm:$0xff]
    %v466 = vld [vmem:[#allocation2 + $0xcc0] sm:$0xff]
    %v467 = vld [vmem:[#allocation2 + $0xcc8] sm:$0xff]
    %v468 = vld [vmem:[#allocation2 + $0xcd0] sm:$0xff]
    %v469 = vld [vmem:[#allocation2 + $0xcd8] sm:$0xff]
    %v470 = vld [vmem:[#allocation2 + $0xce0] sm:$0xff]
    %v471 = vld [vmem:[#allocation2 + $0xce8] sm:$0xff]
    %v472 = vld [vmem:[#allocation2 + $0xcf0] sm:$0xff]
    %v473 = vld [vmem:[#allocation2 + $0xcf8] sm:$0xff]
    %v474 = vld [vmem:[#allocation2 + $0xd00] sm:$0xff]
    %v475 = vld [vmem:[#allocation2 + $0xd08] sm:$0xff]
    %v476 = vld [vmem:[#allocation2 + $0xd10] sm:$0xff]
    %v477 = vld [vmem:[#allocation2 + $0xd18] sm:$0xff]
    %v478 = vld [vmem:[#allocation2 + $0xd20] sm:$0xff]
    %v479 = vld [vmem:[#allocation2 + $0xd28] sm:$0xff]
    %v480 = vld [vmem:[#allocation2 + $0xd30] sm:$0xff]
    %v481 = vld [vmem:[#allocation2 + $0xd38] sm:$0xff]
    %v482 = vld [vmem:[#allocation2 + $0xd40] sm:$0xff]
    %v483 = vld [vmem:[#allocation2 + $0xd48] sm:$0xff]
    %v484 = vld [vmem:[#allocation2 + $0xd50] sm:$0xff]
    %v485 = vld [vmem:[#allocation2 + $0xd58] sm:$0xff]
    %v486 = vld [vmem:[#allocation2 + $0xd60] sm:$0xff]
    %v487 = vld [vmem:[#allocation2 + $0xd68] sm:$0xff]
    %v488 = vld [vmem:[#allocation2 + $0xd70] sm:$0xff]
    %v489 = vld [vmem:[#allocation2 + $0xd78] sm:$0xff]
    %v490 = vld [vmem:[#allocation2 + $0xd80] sm:$0xff]
    %v491 = vld [vmem:[#allocation2 + $0xd88] sm:$0xff]
    %v492 = vld [vmem:[#allocation2 + $0xd90] sm:$0xff]
    %v493 = vld [vmem:[#allocation2 + $0xd98] sm:$0xff]
    %v494 = vld [vmem:[#allocation2 + $0xda0] sm:$0xff]
    %v495 = vld [vmem:[#allocation2 + $0xda8] sm:$0xff]
    %v496 = vld [vmem:[#allocation2 + $0xdb0] sm:$0xff]
    %v497 = vld [vmem:[#allocation2 + $0xdb8] sm:$0xff]
    %v498 = vld [vmem:[#allocation2 + $0xdc0] sm:$0xff]
    %v499 = vld [vmem:[#allocation2 + $0xdc8] sm:$0xff]
    %v500 = vld [vmem:[#allocation2 + $0xdd0] sm:$0xff]
    %v501 = vld [vmem:[#allocation2 + $0xdd8] sm:$0xff]
    %v502 = vld [vmem:[#allocation2 + $0xde0] sm:$0xff]
    %v503 = vld [vmem:[#allocation2 + $0xde8] sm:$0xff]
    %v504 = vld [vmem:[#allocation2 + $0xdf0] sm:$0xff]
    %v505 = vld [vmem:[#allocation2 + $0xdf8] sm:$0xff]
    %v506 = vld [vmem:[#allocation2 + $0xe00] sm:$0xff]
    %v507 = vld [vmem:[#allocation2 + $0xe08] sm:$0xff]
    %v508 = vld [vmem:[#allocation2 + $0xe10] sm:$0xff]
    %v509 = vld [vmem:[#allocation2 + $0xe18] sm:$0xff]
    %v510 = vld [vmem:[#allocation2 + $0xe20] sm:$0xff]
    %v511 = vld [vmem:[#allocation2 + $0xe28] sm:$0xff]
    %v512 = vld [vmem:[#allocation2 + $0xe30] sm:$0xff]
    %v513 = vld [vmem:[#allocation2 + $0xe38] sm:$0xff]
    %v514 = vld [vmem:[#allocation2 + $0xe40] sm:$0xff]
    %v515 = vld [vmem:[#allocation2 + $0xe48] sm:$0xff]
    %v516 = vld [vmem:[#allocation2 + $0xe50] sm:$0xff]
    %v517 = vld [vmem:[#allocation2 + $0xe58] sm:$0xff]
    %v518 = vld [vmem:[#allocation2 + $0xe60] sm:$0xff]
    %v519 = vld [vmem:[#allocation2 + $0xe68] sm:$0xff]
    %v520 = vld [vmem:[#allocation2 + $0xe70] sm:$0xff]
    %v521 = vld [vmem:[#allocation2 + $0xe78] sm:$0xff]
    %v522 = vld [vmem:[#allocation2 + $0xe80] sm:$0xff]
    %v523 = vld [vmem:[#allocation2 + $0xe88] sm:$0xff]
    %v524 = vld [vmem:[#allocation2 + $0xe90] sm:$0xff]
    %v525 = vld [vmem:[#allocation2 + $0xe98] sm:$0xff]
    %v526 = vld [vmem:[#allocation2 + $0xea0] sm:$0xff]
    %v527 = vld [vmem:[#allocation2 + $0xea8] sm:$0xff]
    %v528 = vld [vmem:[#allocation2 + $0xeb0] sm:$0xff]
    %v529 = vld [vmem:[#allocation2 + $0xeb8] sm:$0xff]
    %v530 = vld [vmem:[#allocation2 + $0xec0] sm:$0xff]
    %v531 = vld [vmem:[#allocation2 + $0xec8] sm:$0xff]
    %v532 = vld [vmem:[#allocation2 + $0xed0] sm:$0xff]
    %v533 = vld [vmem:[#allocation2 + $0xed8] sm:$0xff]
    %v534 = vld [vmem:[#allocation2 + $0xee0] sm:$0xff]
    %v535 = vld [vmem:[#allocation2 + $0xee8] sm:$0xff]
    %v536 = vld [vmem:[#allocation2 + $0xef0] sm:$0xff]
    %v537 = vld [vmem:[#allocation2 + $0xef8] sm:$0xff]
    %v538 = vld [vmem:[#allocation2 + $0xf00] sm:$0xff]
    %v539 = vld [vmem:[#allocation2 + $0xf08] sm:$0xff]
    %v540 = vld [vmem:[#allocation2 + $0xf10] sm:$0xff]
    %v541 = vld [vmem:[#allocation2 + $0xf18] sm:$0xff]
    %v542 = vld [vmem:[#allocation2 + $0xf20] sm:$0xff]
    %v543 = vld [vmem:[#allocation2 + $0xf28] sm:$0xff]
    %v544 = vld [vmem:[#allocation2 + $0xf30] sm:$0xff]
    %v545 = vld [vmem:[#allocation2 + $0xf38] sm:$0xff]
    %v546 = vld [vmem:[#allocation2 + $0xf40] sm:$0xff]
    %v547 = vld [vmem:[#allocation2 + $0xf48] sm:$0xff]
    %v548 = vld [vmem:[#allocation2 + $0xf50] sm:$0xff]
    %v549 = vld [vmem:[#allocation2 + $0xf58] sm:$0xff]
    %v550 = vld [vmem:[#allocation2 + $0xf60] sm:$0xff]
    %v551 = vld [vmem:[#allocation2 + $0xf68] sm:$0xff]
    %v552 = vld [vmem:[#allocation2 + $0xf70] sm:$0xff]
    %v553 = vld [vmem:[#allocation2 + $0xf78] sm:$0xff]
    %v554 = vld [vmem:[#allocation2 + $0xf80] sm:$0xff]
    %v555 = vld [vmem:[#allocation2 + $0xf88] sm:$0xff]
    %v556 = vld [vmem:[#allocation2 + $0xf90] sm:$0xff]
    %v557 = vld [vmem:[#allocation2 + $0xf98] sm:$0xff]
    %v558 = vld [vmem:[#allocation2 + $0xfa0] sm:$0xff]
    %v559 = vld [vmem:[#allocation2 + $0xfa8] sm:$0xff]
    %v560 = vld [vmem:[#allocation2 + $0xfb0] sm:$0xff]
    %v561 = vld [vmem:[#allocation2 + $0xfb8] sm:$0xff]
    %v562 = vld [vmem:[#allocation2 + $0xfc0] sm:$0xff]
    %v563 = vld [vmem:[#allocation2 + $0xfc8] sm:$0xff]
    %v564 = vld [vmem:[#allocation2 + $0xfd0] sm:$0xff]
    %v565 = vld [vmem:[#allocation2 + $0xfd8] sm:$0xff]
    %v566 = vld [vmem:[#allocation2 + $0xfe0] sm:$0xff]
    %v567 = vld [vmem:[#allocation2 + $0xfe8] sm:$0xff]
    %v568 = vld [vmem:[#allocation2 + $0xff0] sm:$0xff]
    %v569 = vld [vmem:[#allocation2 + $0xff8] sm:$0xff]
    %v570 = vld [vmem:[#allocation2 + $0x1000] sm:$0xff]
    %v571 = vld [vmem:[#allocation2 + $0x1008] sm:$0xff]
    %v572 = vld [vmem:[#allocation2 + $0x1010] sm:$0xff]
    %v573 = vld [vmem:[#allocation2 + $0x1018] sm:$0xff]
    %v574 = vld [vmem:[#allocation2 + $0x1020] sm:$0xff]
    %v575 = vld [vmem:[#allocation2 + $0x1028] sm:$0xff]
    %v576 = vld [vmem:[#allocation2 + $0x1030] sm:$0xff]
    %v577 = vld [vmem:[#allocation2 + $0x1038] sm:$0xff]
    %v578 = vld [vmem:[#allocation2 + $0x1040] sm:$0xff]
    %v579 = vld [vmem:[#allocation2 + $0x1048] sm:$0xff]
    %v580 = vld [vmem:[#allocation2 + $0x1050] sm:$0xff]
    %v581 = vld [vmem:[#allocation2 + $0x1058] sm:$0xff]
    %v582 = vld [vmem:[#allocation2 + $0x1060] sm:$0xff]
    %v583 = vld [vmem:[#allocation2 + $0x1068] sm:$0xff]
    %v584 = vld [vmem:[#allocation2 + $0x1070] sm:$0xff]
    %v585 = vld [vmem:[#allocation2 + $0x1078] sm:$0xff]
    %v586 = vld [vmem:[#allocation2 + $0x1080] sm:$0xff]
    %v587 = vld [vmem:[#allocation2 + $0x1088] sm:$0xff]
    %v588 = vld [vmem:[#allocation2 + $0x1090] sm:$0xff]
    %v589 = vld [vmem:[#allocation2 + $0x1098] sm:$0xff]
    %v590 = vld [vmem:[#allocation2 + $0x10a0] sm:$0xff]
    %v591 = vld [vmem:[#allocation2 + $0x10a8] sm:$0xff]
    %v592 = vld [vmem:[#allocation2 + $0x10b0] sm:$0xff]
    %v593 = vld [vmem:[#allocation2 + $0x10b8] sm:$0xff]
    %v594 = vld [vmem:[#allocation2 + $0x10c0] sm:$0xff]
    %v595 = vld [vmem:[#allocation2 + $0x10c8] sm:$0xff]
    %v596 = vld [vmem:[#allocation2 + $0x10d0] sm:$0xff]
    %v597 = vld [vmem:[#allocation2 + $0x10d8] sm:$0xff]
    %v598 = vld [vmem:[#allocation2 + $0x10e0] sm:$0xff]
    %v599 = vld [vmem:[#allocation2 + $0x10e8] sm:$0xff]
    %v600 = vld [vmem:[#allocation2 + $0x10f0] sm:$0xff]
    %v601 = vld [vmem:[#allocation2 + $0x10f8] sm:$0xff]
    %v602 = vld [vmem:[#allocation2 + $0x1100] sm:$0xff]
    %v603 = vld [vmem:[#allocation2 + $0x1108] sm:$0xff]
    %v604 = vld [vmem:[#allocation2 + $0x1110] sm:$0xff]
    %v605 = vld [vmem:[#allocation2 + $0x1118] sm:$0xff]
    %v606 = vld [vmem:[#allocation2 + $0x1120] sm:$0xff]
    %v607 = vld [vmem:[#allocation2 + $0x1128] sm:$0xff]
    %v608 = vld [vmem:[#allocation2 + $0x1130] sm:$0xff]
    %v609 = vld [vmem:[#allocation2 + $0x1138] sm:$0xff]
    %v610 = vld [vmem:[#allocation2 + $0x1140] sm:$0xff]
    %v611 = vld [vmem:[#allocation2 + $0x1148] sm:$0xff]
    %v612 = vld [vmem:[#allocation2 + $0x1150] sm:$0xff]
    %v613 = vld [vmem:[#allocation2 + $0x1158] sm:$0xff]
    %v614 = vld [vmem:[#allocation2 + $0x1160] sm:$0xff]
    %v615 = vld [vmem:[#allocation2 + $0x1168] sm:$0xff]
    %v616 = vld [vmem:[#allocation2 + $0x1170] sm:$0xff]
    %v617 = vld [vmem:[#allocation2 + $0x1178] sm:$0xff]
    %v618 = vld [vmem:[#allocation2 + $0x1180] sm:$0xff]
    %v619 = vld [vmem:[#allocation2 + $0x1188] sm:$0xff]
    %v620 = vld [vmem:[#allocation2 + $0x1190] sm:$0xff]
    %v621 = vld [vmem:[#allocation2 + $0x1198] sm:$0xff]
    %v622 = vld [vmem:[#allocation2 + $0x11a0] sm:$0xff]
    %v623 = vld [vmem:[#allocation2 + $0x11a8] sm:$0xff]
    %v624 = vld [vmem:[#allocation2 + $0x11b0] sm:$0xff]
    %v625 = vld [vmem:[#allocation2 + $0x11b8] sm:$0xff]
    %v626 = vld [vmem:[#allocation2 + $0x11c0] sm:$0xff]
    %v627 = vld [vmem:[#allocation2 + $0x11c8] sm:$0xff]
    %v628 = vld [vmem:[#allocation2 + $0x11d0] sm:$0xff]
    %v629 = vld [vmem:[#allocation2 + $0x11d8] sm:$0xff]
    %v630 = vld [vmem:[#allocation2 + $0x11e0] sm:$0xff]
    %v631 = vld [vmem:[#allocation2 + $0x11e8] sm:$0xff]
    %v632 = vld [vmem:[#allocation2 + $0x11f0] sm:$0xff]
    %v633 = vld [vmem:[#allocation2 + $0x11f8] sm:$0xff]
    %v634 = vld [vmem:[#allocation2 + $0x1200] sm:$0xff]
    %v635 = vld [vmem:[#allocation2 + $0x1208] sm:$0xff]
    %v636 = vld [vmem:[#allocation2 + $0x1210] sm:$0xff]
    %v637 = vld [vmem:[#allocation2 + $0x1218] sm:$0xff]
    %v638 = vld [vmem:[#allocation2 + $0x1220] sm:$0xff]
    %v639 = vld [vmem:[#allocation2 + $0x1228] sm:$0xff]
    %v640 = vld [vmem:[#allocation2 + $0x1230] sm:$0xff]
    %v641 = vld [vmem:[#allocation2 + $0x1238] sm:$0xff]
    %v642 = vld [vmem:[#allocation2 + $0x1240] sm:$0xff]
    %v643 = vld [vmem:[#allocation2 + $0x1248] sm:$0xff]
    %v644 = vld [vmem:[#allocation2 + $0x1250] sm:$0xff]
    %v645 = vld [vmem:[#allocation2 + $0x1258] sm:$0xff]
    %v646 = vld [vmem:[#allocation2 + $0x1260] sm:$0xff]
    %v647 = vld [vmem:[#allocation2 + $0x1268] sm:$0xff]
    %v648 = vld [vmem:[#allocation2 + $0x1270] sm:$0xff]
    %v649 = vld [vmem:[#allocation2 + $0x1278] sm:$0xff]
    %v650 = vld [vmem:[#allocation2 + $0x1280] sm:$0xff]
    %v651 = vld [vmem:[#allocation2 + $0x1288] sm:$0xff]
    %v652 = vld [vmem:[#allocation2 + $0x1290] sm:$0xff]
    %v653 = vld [vmem:[#allocation2 + $0x1298] sm:$0xff]
    %v654 = vld [vmem:[#allocation2 + $0x12a0] sm:$0xff]
    %v655 = vld [vmem:[#allocation2 + $0x12a8] sm:$0xff]
    %v656 = vld [vmem:[#allocation2 + $0x12b0] sm:$0xff]
    %v657 = vld [vmem:[#allocation2 + $0x12b8] sm:$0xff]
    %v658 = vld [vmem:[#allocation2 + $0x12c0] sm:$0xff]
    %v659 = vld [vmem:[#allocation2 + $0x12c8] sm:$0xff]
    %v660 = vld [vmem:[#allocation2 + $0x12d0] sm:$0xff]
    %v661 = vld [vmem:[#allocation2 + $0x12d8] sm:$0xff]
    %v662 = vld [vmem:[#allocation2 + $0x12e0] sm:$0xff]
    %v663 = vld [vmem:[#allocation2 + $0x12e8] sm:$0xff]
    %v664 = vld [vmem:[#allocation2 + $0x12f0] sm:$0xff]
    %v665 = vld [vmem:[#allocation2 + $0x12f8] sm:$0xff]
    %v666 = vld [vmem:[#allocation2 + $0x1300] sm:$0xff]
    %v667 = vld [vmem:[#allocation2 + $0x1308] sm:$0xff]
    %v668 = vld [vmem:[#allocation2 + $0x1310] sm:$0xff]
    %v669 = vld [vmem:[#allocation2 + $0x1318] sm:$0xff]
    %v670 = vld [vmem:[#allocation2 + $0x1320] sm:$0xff]
    %v671 = vld [vmem:[#allocation2 + $0x1328] sm:$0xff]
    %v672 = vld [vmem:[#allocation2 + $0x1330] sm:$0xff]
    %v673 = vld [vmem:[#allocation2 + $0x1338] sm:$0xff]
    %v674 = vld [vmem:[#allocation2 + $0x1340] sm:$0xff]
    %v675 = vld [vmem:[#allocation2 + $0x1348] sm:$0xff]
    %v676 = vld [vmem:[#allocation2 + $0x1350] sm:$0xff]
    %v677 = vld [vmem:[#allocation2 + $0x1358] sm:$0xff]
    %v678 = vld [vmem:[#allocation2 + $0x1360] sm:$0xff]
    %v679 = vld [vmem:[#allocation2 + $0x1368] sm:$0xff]
    %v680 = vld [vmem:[#allocation2 + $0x1370] sm:$0xff]
    %v681 = vld [vmem:[#allocation2 + $0x1378] sm:$0xff]
    %v682 = vld [vmem:[#allocation2 + $0x1380] sm:$0xff]
    %v683 = vld [vmem:[#allocation2 + $0x1388] sm:$0xff]
    %v684 = vld [vmem:[#allocation2 + $0x1390] sm:$0xff]
    %v685 = vld [vmem:[#allocation2 + $0x1398] sm:$0xff]
    %v686 = vld [vmem:[#allocation2 + $0x13a0] sm:$0xff]
    %v687 = vld [vmem:[#allocation2 + $0x13a8] sm:$0xff]
    %v688 = vld [vmem:[#allocation2 + $0x13b0] sm:$0xff]
    %v689 = vld [vmem:[#allocation2 + $0x13b8] sm:$0xff]
    %v690 = vld [vmem:[#allocation2 + $0x13c0] sm:$0xff]
    %v691 = vld [vmem:[#allocation2 + $0x13c8] sm:$0xff]
    %v692 = vld [vmem:[#allocation2 + $0x13d0] sm:$0xff]
    %v693 = vld [vmem:[#allocation2 + $0x13d8] sm:$0xff]
    %v694 = vld [vmem:[#allocation2 + $0x13e0] sm:$0xff]
    %v695 = vld [vmem:[#allocation2 + $0x13e8] sm:$0xff]
    %v696 = vld [vmem:[#allocation2 + $0x13f0] sm:$0xff]
    %v697 = vld [vmem:[#allocation2 + $0x13f8] sm:$0xff]
    %v698 = vld [vmem:[#allocation2 + $0x1400] sm:$0xff]
    %v699 = vld [vmem:[#allocation2 + $0x1408] sm:$0xff]
    %v700 = vld [vmem:[#allocation2 + $0x1410] sm:$0xff]
    %v701 = vld [vmem:[#allocation2 + $0x1418] sm:$0xff]
    %v702 = vld [vmem:[#allocation2 + $0x1420] sm:$0xff]
    %v703 = vld [vmem:[#allocation2 + $0x1428] sm:$0xff]
    %v704 = vld [vmem:[#allocation2 + $0x1430] sm:$0xff]
    %v705 = vld [vmem:[#allocation2 + $0x1438] sm:$0xff]
    %v706 = vld [vmem:[#allocation2 + $0x1440] sm:$0xff]
    %v707 = vld [vmem:[#allocation2 + $0x1448] sm:$0xff]
    %v708 = vld [vmem:[#allocation2 + $0x1450] sm:$0xff]
    %v709 = vld [vmem:[#allocation2 + $0x1458] sm:$0xff]
    %v710 = vld [vmem:[#allocation2 + $0x1460] sm:$0xff]
    %v711 = vld [vmem:[#allocation2 + $0x1468] sm:$0xff]
    %v712 = vld [vmem:[#allocation2 + $0x1470] sm:$0xff]
    %v713 = vld [vmem:[#allocation2 + $0x1478] sm:$0xff]
    %v714 = vld [vmem:[#allocation2 + $0x1480] sm:$0xff]
    %v715 = vld [vmem:[#allocation2 + $0x1488] sm:$0xff]
    %v716 = vld [vmem:[#allocation2 + $0x1490] sm:$0xff]
    %v717 = vld [vmem:[#allocation2 + $0x1498] sm:$0xff]
    %v718 = vld [vmem:[#allocation2 + $0x14a0] sm:$0xff]
    %v719 = vld [vmem:[#allocation2 + $0x14a8] sm:$0xff]
    %v720 = vld [vmem:[#allocation2 + $0x14b0] sm:$0xff]
    %v721 = vld [vmem:[#allocation2 + $0x14b8] sm:$0xff]
    %v722 = vld [vmem:[#allocation2 + $0x14c0] sm:$0xff]
    %v723 = vld [vmem:[#allocation2 + $0x14c8] sm:$0xff]
    %v724 = vld [vmem:[#allocation2 + $0x14d0] sm:$0xff]
    %v725 = vld [vmem:[#allocation2 + $0x14d8] sm:$0xff]
    %v726 = vld [vmem:[#allocation2 + $0x14e0] sm:$0xff]
    %v727 = vld [vmem:[#allocation2 + $0x14e8] sm:$0xff]
    %v728 = vld [vmem:[#allocation2 + $0x14f0] sm:$0xff]
    %v729 = vld [vmem:[#allocation2 + $0x14f8] sm:$0xff]
    %v730 = vld [vmem:[#allocation2 + $0x1500] sm:$0xff]
    %v731 = vld [vmem:[#allocation2 + $0x1508] sm:$0xff]
    %v732 = vld [vmem:[#allocation2 + $0x1510] sm:$0xff]
    %v733 = vld [vmem:[#allocation2 + $0x1518] sm:$0xff]
    %v734 = vld [vmem:[#allocation2 + $0x1520] sm:$0xff]
    %v735 = vld [vmem:[#allocation2 + $0x1528] sm:$0xff]
    %v736 = vld [vmem:[#allocation2 + $0x1530] sm:$0xff]
    %v737 = vld [vmem:[#allocation2 + $0x1538] sm:$0xff]
    %v738 = vld [vmem:[#allocation2 + $0x1540] sm:$0xff]
    %v739 = vld [vmem:[#allocation2 + $0x1548] sm:$0xff]
    %v740 = vld [vmem:[#allocation2 + $0x1550] sm:$0xff]
    %v741 = vld [vmem:[#allocation2 + $0x1558] sm:$0xff]
    %v742 = vld [vmem:[#allocation2 + $0x1560] sm:$0xff]
    %v743 = vld [vmem:[#allocation2 + $0x1568] sm:$0xff]
    %v744 = vld [vmem:[#allocation2 + $0x1570] sm:$0xff]
    %v745 = vld [vmem:[#allocation2 + $0x1578] sm:$0xff]
    %v746 = vld [vmem:[#allocation2 + $0x1580] sm:$0xff]
    %v747 = vld [vmem:[#allocation2 + $0x1588] sm:$0xff]
    %v748 = vld [vmem:[#allocation2 + $0x1590] sm:$0xff]
    %v749 = vld [vmem:[#allocation2 + $0x1598] sm:$0xff]
    %v750 = vld [vmem:[#allocation2 + $0x15a0] sm:$0xff]
    %v751 = vld [vmem:[#allocation2 + $0x15a8] sm:$0xff]
    %v752 = vld [vmem:[#allocation2 + $0x15b0] sm:$0xff]
    %v753 = vld [vmem:[#allocation2 + $0x15b8] sm:$0xff]
    %v754 = vld [vmem:[#allocation2 + $0x15c0] sm:$0xff]
    %v755 = vld [vmem:[#allocation2 + $0x15c8] sm:$0xff]
    %v756 = vld [vmem:[#allocation2 + $0x15d0] sm:$0xff]
    %v757 = vld [vmem:[#allocation2 + $0x15d8] sm:$0xff]
    %v758 = vld [vmem:[#allocation2 + $0x15e0] sm:$0xff]
    %v759 = vld [vmem:[#allocation2 + $0x15e8] sm:$0xff]
    %v760 = vld [vmem:[#allocation2 + $0x15f0] sm:$0xff]
    %v761 = vld [vmem:[#allocation2 + $0x15f8] sm:$0xff]
    %v762 = vld [vmem:[#allocation2 + $0x1600] sm:$0xff]
    %v763 = vld [vmem:[#allocation2 + $0x1608] sm:$0xff]
    %v764 = vld [vmem:[#allocation2 + $0x1610] sm:$0xff]
    %v765 = vld [vmem:[#allocation2 + $0x1618] sm:$0xff]
    %v766 = vld [vmem:[#allocation2 + $0x1620] sm:$0xff]
    %v767 = vld [vmem:[#allocation2 + $0x1628] sm:$0xff]
    %v768 = vld [vmem:[#allocation2 + $0x1630] sm:$0xff]
    %v769 = vld [vmem:[#allocation2 + $0x1638] sm:$0xff]
    %v770 = vld [vmem:[#allocation2 + $0x1640] sm:$0xff]
    %v771 = vld [vmem:[#allocation2 + $0x1648] sm:$0xff]
    %v772 = vld [vmem:[#allocation2 + $0x1650] sm:$0xff]
    %v773 = vld [vmem:[#allocation2 + $0x1658] sm:$0xff]
    %v774 = vld [vmem:[#allocation2 + $0x1660] sm:$0xff]
    %v775 = vld [vmem:[#allocation2 + $0x1668] sm:$0xff]
    %v776 = vld [vmem:[#allocation2 + $0x1670] sm:$0xff]
    %v777 = vld [vmem:[#allocation2 + $0x1678] sm:$0xff]
    %v778 = vld [vmem:[#allocation2 + $0x1680] sm:$0xff]
    %v779 = vld [vmem:[#allocation2 + $0x1688] sm:$0xff]
    %v780 = vld [vmem:[#allocation2 + $0x1690] sm:$0xff]
    %v781 = vld [vmem:[#allocation2 + $0x1698] sm:$0xff]
    %v782 = vld [vmem:[#allocation2 + $0x16a0] sm:$0xff]
    %v783 = vld [vmem:[#allocation2 + $0x16a8] sm:$0xff]
    %v784 = vld [vmem:[#allocation2 + $0x16b0] sm:$0xff]
    %v785 = vld [vmem:[#allocation2 + $0x16b8] sm:$0xff]
    %v786 = vld [vmem:[#allocation2 + $0x16c0] sm:$0xff]
    %v787 = vld [vmem:[#allocation2 + $0x16c8] sm:$0xff]
    %v788 = vld [vmem:[#allocation2 + $0x16d0] sm:$0xff]
    %v789 = vld [vmem:[#allocation2 + $0x16d8] sm:$0xff]
    %v790 = vld [vmem:[#allocation2 + $0x16e0] sm:$0xff]
    %v791 = vld [vmem:[#allocation2 + $0x16e8] sm:$0xff]
    %v792 = vld [vmem:[#allocation2 + $0x16f0] sm:$0xff]
    %v793 = vld [vmem:[#allocation2 + $0x16f8] sm:$0xff]
    %v794 = vld [vmem:[#allocation2 + $0x1700] sm:$0xff]
    %v795 = vld [vmem:[#allocation2 + $0x1708] sm:$0xff]
    %v796 = vld [vmem:[#allocation2 + $0x1710] sm:$0xff]
    %v797 = vld [vmem:[#allocation2 + $0x1718] sm:$0xff]
    %v798 = vld [vmem:[#allocation2 + $0x1720] sm:$0xff]
    %v799 = vld [vmem:[#allocation2 + $0x1728] sm:$0xff]
    %v800 = vld [vmem:[#allocation2 + $0x1730] sm:$0xff]
    %v801 = vld [vmem:[#allocation2 + $0x1738] sm:$0xff]
    %v802 = vld [vmem:[#allocation2 + $0x1740] sm:$0xff]
    %v803 = vld [vmem:[#allocation2 + $0x1748] sm:$0xff]
    %v804 = vld [vmem:[#allocation2 + $0x1750] sm:$0xff]
    %v805 = vld [vmem:[#allocation2 + $0x1758] sm:$0xff]
    %v806 = vld [vmem:[#allocation2 + $0x1760] sm:$0xff]
    %v807 = vld [vmem:[#allocation2 + $0x1768] sm:$0xff]
    %v808 = vld [vmem:[#allocation2 + $0x1770] sm:$0xff]
    %v809 = vld [vmem:[#allocation2 + $0x1778] sm:$0xff]
    %v810 = vld [vmem:[#allocation2 + $0x1780] sm:$0xff]
    %v811 = vld [vmem:[#allocation2 + $0x1788] sm:$0xff]
    %v812 = vld [vmem:[#allocation2 + $0x1790] sm:$0xff]
    %v813 = vld [vmem:[#allocation2 + $0x1798] sm:$0xff]
    %v814 = vld [vmem:[#allocation2 + $0x17a0] sm:$0xff]
    %v815 = vld [vmem:[#allocation2 + $0x17a8] sm:$0xff]
    %v816 = vld [vmem:[#allocation2 + $0x17b0] sm:$0xff]
    %v817 = vld [vmem:[#allocation2 + $0x17b8] sm:$0xff]
    %v818 = vld [vmem:[#allocation2 + $0x17c0] sm:$0xff]
    %v819 = vld [vmem:[#allocation2 + $0x17c8] sm:$0xff]
    %v820 = vld [vmem:[#allocation2 + $0x17d0] sm:$0xff]
    %v821 = vld [vmem:[#allocation2 + $0x17d8] sm:$0xff]
    %v822 = vld [vmem:[#allocation2 + $0x17e0] sm:$0xff]
    %v823 = vld [vmem:[#allocation2 + $0x17e8] sm:$0xff]
    %v824 = vld [vmem:[#allocation2 + $0x17f0] sm:$0xff]
    %v825 = vld [vmem:[#allocation2 + $0x17f8] sm:$0xff]
    %v826 = vld [vmem:[#allocation2 + $0x1800] sm:$0xff]
    %v827 = vld [vmem:[#allocation2 + $0x1808] sm:$0xff]
    %v828 = vld [vmem:[#allocation2 + $0x1810] sm:$0xff]
    %v829 = vld [vmem:[#allocation2 + $0x1818] sm:$0xff]
    %v830 = vld [vmem:[#allocation2 + $0x1820] sm:$0xff]
    %v831 = vld [vmem:[#allocation2 + $0x1828] sm:$0xff]
    %v832 = vld [vmem:[#allocation2 + $0x1830] sm:$0xff]
    %v833 = vld [vmem:[#allocation2 + $0x1838] sm:$0xff]
    %v834 = vld [vmem:[#allocation2 + $0x1840] sm:$0xff]
    %v835 = vld [vmem:[#allocation2 + $0x1848] sm:$0xff]
    %v836 = vld [vmem:[#allocation2 + $0x1850] sm:$0xff]
    %v837 = vld [vmem:[#allocation2 + $0x1858] sm:$0xff]
    %v838 = vld [vmem:[#allocation2 + $0x1860] sm:$0xff]
    %v839 = vld [vmem:[#allocation2 + $0x1868] sm:$0xff]
    %v840 = vld [vmem:[#allocation2 + $0x1870] sm:$0xff]
    %v841 = vld [vmem:[#allocation2 + $0x1878] sm:$0xff]
    %v842 = vld [vmem:[#allocation2 + $0x1880] sm:$0xff]
    %v843 = vld [vmem:[#allocation2 + $0x1888] sm:$0xff]
    %v844 = vld [vmem:[#allocation2 + $0x1890] sm:$0xff]
    %v845 = vld [vmem:[#allocation2 + $0x1898] sm:$0xff]
    %v846 = vld [vmem:[#allocation2 + $0x18a0] sm:$0xff]
    %v847 = vld [vmem:[#allocation2 + $0x18a8] sm:$0xff]
    %v848 = vld [vmem:[#allocation2 + $0x18b0] sm:$0xff]
    %v849 = vld [vmem:[#allocation2 + $0x18b8] sm:$0xff]
    %v850 = vld [vmem:[#allocation2 + $0x18c0] sm:$0xff]
    %v851 = vld [vmem:[#allocation2 + $0x18c8] sm:$0xff]
    %v852 = vld [vmem:[#allocation2 + $0x18d0] sm:$0xff]
    %v853 = vld [vmem:[#allocation2 + $0x18d8] sm:$0xff]
    %v854 = vld [vmem:[#allocation2 + $0x18e0] sm:$0xff]
    %v855 = vld [vmem:[#allocation2 + $0x18e8] sm:$0xff]
    %v856 = vld [vmem:[#allocation2 + $0x18f0] sm:$0xff]
    %v857 = vld [vmem:[#allocation2 + $0x18f8] sm:$0xff]
    %v858 = vld [vmem:[#allocation2 + $0x1900] sm:$0xff]
    %v859 = vld [vmem:[#allocation2 + $0x1908] sm:$0xff]
    %v860 = vld [vmem:[#allocation2 + $0x1910] sm:$0xff]
    %v861 = vld [vmem:[#allocation2 + $0x1918] sm:$0xff]
    %v862 = vld [vmem:[#allocation2 + $0x1920] sm:$0xff]
    %v863 = vld [vmem:[#allocation2 + $0x1928] sm:$0xff]
    %v864 = vld [vmem:[#allocation2 + $0x1930] sm:$0xff]
    %v865 = vld [vmem:[#allocation2 + $0x1938] sm:$0xff]
    %v866 = vld [vmem:[#allocation2 + $0x1940] sm:$0xff]
    %v867 = vld [vmem:[#allocation2 + $0x1948] sm:$0xff]
    %v868 = vld [vmem:[#allocation2 + $0x1950] sm:$0xff]
    %v869 = vld [vmem:[#allocation2 + $0x1958] sm:$0xff]
    %v870 = vld [vmem:[#allocation2 + $0x1960] sm:$0xff]
    %v871 = vld [vmem:[#allocation2 + $0x1968] sm:$0xff]
    %v872 = vld [vmem:[#allocation2 + $0x1970] sm:$0xff]
    %v873 = vld [vmem:[#allocation2 + $0x1978] sm:$0xff]
    %v874 = vld [vmem:[#allocation2 + $0x1980] sm:$0xff]
    %v875 = vld [vmem:[#allocation2 + $0x1988] sm:$0xff]
    %v876 = vld [vmem:[#allocation2 + $0x1990] sm:$0xff]
    %v877 = vld [vmem:[#allocation2 + $0x1998] sm:$0xff]
    %v878 = vld [vmem:[#allocation2 + $0x19a0] sm:$0xff]
    %v879 = vld [vmem:[#allocation2 + $0x19a8] sm:$0xff]
    %v880 = vld [vmem:[#allocation2 + $0x19b0] sm:$0xff]
    %v881 = vld [vmem:[#allocation2 + $0x19b8] sm:$0xff]
    %v882 = vld [vmem:[#allocation2 + $0x19c0] sm:$0xff]
    %v883 = vld [vmem:[#allocation2 + $0x19c8] sm:$0xff]
    %v884 = vld [vmem:[#allocation2 + $0x19d0] sm:$0xff]
    %v885 = vld [vmem:[#allocation2 + $0x19d8] sm:$0xff]
    %v886 = vld [vmem:[#allocation2 + $0x19e0] sm:$0xff]
    %v887 = vld [vmem:[#allocation2 + $0x19e8] sm:$0xff]
    %v888 = vld [vmem:[#allocation2 + $0x19f0] sm:$0xff]
    %v889 = vld [vmem:[#allocation2 + $0x19f8] sm:$0xff]
    %v890 = vld [vmem:[#allocation2 + $0x1a00] sm:$0xff]
    %v891 = vld [vmem:[#allocation2 + $0x1a08] sm:$0xff]
    %v892 = vld [vmem:[#allocation2 + $0x1a10] sm:$0xff]
    %v893 = vld [vmem:[#allocation2 + $0x1a18] sm:$0xff]
    %v894 = vld [vmem:[#allocation2 + $0x1a20] sm:$0xff]
    %v895 = vld [vmem:[#allocation2 + $0x1a28] sm:$0xff]
    %v896 = vld [vmem:[#allocation2 + $0x1a30] sm:$0xff]
    %v897 = vld [vmem:[#allocation2 + $0x1a38] sm:$0xff]
    %v898 = vld [vmem:[#allocation2 + $0x1a40] sm:$0xff]
    %v899 = vld [vmem:[#allocation2 + $0x1a48] sm:$0xff]
    %v900 = vld [vmem:[#allocation2 + $0x1a50] sm:$0xff]
    %v901 = vld [vmem:[#allocation2 + $0x1a58] sm:$0xff]
    %v902 = vld [vmem:[#allocation2 + $0x1a60] sm:$0xff]
    %v903 = vld [vmem:[#allocation2 + $0x1a68] sm:$0xff]
    %v904 = vld [vmem:[#allocation2 + $0x1a70] sm:$0xff]
    %v905 = vld [vmem:[#allocation2 + $0x1a78] sm:$0xff]
    %v906 = vld [vmem:[#allocation2 + $0x1a80] sm:$0xff]
    %v907 = vld [vmem:[#allocation2 + $0x1a88] sm:$0xff]
    %v908 = vld [vmem:[#allocation2 + $0x1a90] sm:$0xff]
    %v909 = vld [vmem:[#allocation2 + $0x1a98] sm:$0xff]
    %v910 = vld [vmem:[#allocation2 + $0x1aa0] sm:$0xff]
    %v911 = vld [vmem:[#allocation2 + $0x1aa8] sm:$0xff]
    %v912 = vld [vmem:[#allocation2 + $0x1ab0] sm:$0xff]
    %v913 = vld [vmem:[#allocation2 + $0x1ab8] sm:$0xff]
    %v914 = vld [vmem:[#allocation2 + $0x1ac0] sm:$0xff]
    %v915 = vld [vmem:[#allocation2 + $0x1ac8] sm:$0xff]
    %v916 = vld [vmem:[#allocation2 + $0x1ad0] sm:$0xff]
    %v917 = vld [vmem:[#allocation2 + $0x1ad8] sm:$0xff]
    %v918 = vld [vmem:[#allocation2 + $0x1ae0] sm:$0xff]
    %v919 = vld [vmem:[#allocation2 + $0x1ae8] sm:$0xff]
    %v920 = vld [vmem:[#allocation2 + $0x1af0] sm:$0xff]
    %v921 = vld [vmem:[#allocation2 + $0x1af8] sm:$0xff]
    %v922 = vld [vmem:[#allocation2 + $0x1b00] sm:$0xff]
    %v923 = vld [vmem:[#allocation2 + $0x1b08] sm:$0xff]
    %v924 = vld [vmem:[#allocation2 + $0x1b10] sm:$0xff]
    %v925 = vld [vmem:[#allocation2 + $0x1b18] sm:$0xff]
    %v926 = vld [vmem:[#allocation2 + $0x1b20] sm:$0xff]
    %v927 = vld [vmem:[#allocation2 + $0x1b28] sm:$0xff]
    %v928 = vld [vmem:[#allocation2 + $0x1b30] sm:$0xff]
    %v929 = vld [vmem:[#allocation2 + $0x1b38] sm:$0xff]
    %v930 = vld [vmem:[#allocation2 + $0x1b40] sm:$0xff]
    %v931 = vld [vmem:[#allocation2 + $0x1b48] sm:$0xff]
    %v932 = vld [vmem:[#allocation2 + $0x1b50] sm:$0xff]
    %v933 = vld [vmem:[#allocation2 + $0x1b58] sm:$0xff]
    %v934 = vld [vmem:[#allocation2 + $0x1b60] sm:$0xff]
    %v935 = vld [vmem:[#allocation2 + $0x1b68] sm:$0xff]
    %v936 = vld [vmem:[#allocation2 + $0x1b70] sm:$0xff]
    %v937 = vld [vmem:[#allocation2 + $0x1b78] sm:$0xff]
    %v938 = vld [vmem:[#allocation2 + $0x1b80] sm:$0xff]
    %v939 = vld [vmem:[#allocation2 + $0x1b88] sm:$0xff]
    %v940 = vld [vmem:[#allocation2 + $0x1b90] sm:$0xff]
    %v941 = vld [vmem:[#allocation2 + $0x1b98] sm:$0xff]
    %v942 = vld [vmem:[#allocation2 + $0x1ba0] sm:$0xff]
    %v943 = vld [vmem:[#allocation2 + $0x1ba8] sm:$0xff]
    %v944 = vld [vmem:[#allocation2 + $0x1bb0] sm:$0xff]
    %v945 = vld [vmem:[#allocation2 + $0x1bb8] sm:$0xff]
    %v946 = vld [vmem:[#allocation2 + $0x1bc0] sm:$0xff]
    %v947 = vld [vmem:[#allocation2 + $0x1bc8] sm:$0xff]
    %v948 = vld [vmem:[#allocation2 + $0x1bd0] sm:$0xff]
    %v949 = vld [vmem:[#allocation2 + $0x1bd8] sm:$0xff]
    %v950 = vld [vmem:[#allocation2 + $0x1be0] sm:$0xff]
    %v951 = vld [vmem:[#allocation2 + $0x1be8] sm:$0xff]
    %v952 = vld [vmem:[#allocation2 + $0x1bf0] sm:$0xff]
    %v953 = vld [vmem:[#allocation2 + $0x1bf8] sm:$0xff]
    %v954 = vld [vmem:[#allocation2 + $0x1c00] sm:$0xff]
    %v955 = vld [vmem:[#allocation2 + $0x1c08] sm:$0xff]
    %v956 = vld [vmem:[#allocation2 + $0x1c10] sm:$0xff]
    %v957 = vld [vmem:[#allocation2 + $0x1c18] sm:$0xff]
    %v958 = vld [vmem:[#allocation2 + $0x1c20] sm:$0xff]
    %v959 = vld [vmem:[#allocation2 + $0x1c28] sm:$0xff]
    %v960 = vld [vmem:[#allocation2 + $0x1c30] sm:$0xff]
    %v961 = vld [vmem:[#allocation2 + $0x1c38] sm:$0xff]
    %v962 = vld [vmem:[#allocation2 + $0x1c40] sm:$0xff]
    %v963 = vld [vmem:[#allocation2 + $0x1c48] sm:$0xff]
    %v964 = vld [vmem:[#allocation2 + $0x1c50] sm:$0xff]
    %v965 = vld [vmem:[#allocation2 + $0x1c58] sm:$0xff]
    %v966 = vld [vmem:[#allocation2 + $0x1c60] sm:$0xff]
    %v967 = vld [vmem:[#allocation2 + $0x1c68] sm:$0xff]
    %v968 = vld [vmem:[#allocation2 + $0x1c70] sm:$0xff]
    %v969 = vld [vmem:[#allocation2 + $0x1c78] sm:$0xff]
    %v970 = vld [vmem:[#allocation2 + $0x1c80] sm:$0xff]
    %v971 = vld [vmem:[#allocation2 + $0x1c88] sm:$0xff]
    %v972 = vld [vmem:[#allocation2 + $0x1c90] sm:$0xff]
    %v973 = vld [vmem:[#allocation2 + $0x1c98] sm:$0xff]
    %v974 = vld [vmem:[#allocation2 + $0x1ca0] sm:$0xff]
    %v975 = vld [vmem:[#allocation2 + $0x1ca8] sm:$0xff]
    %v976 = vld [vmem:[#allocation2 + $0x1cb0] sm:$0xff]
    %v977 = vld [vmem:[#allocation2 + $0x1cb8] sm:$0xff]
    %v978 = vld [vmem:[#allocation2 + $0x1cc0] sm:$0xff]
    %v979 = vld [vmem:[#allocation2 + $0x1cc8] sm:$0xff]
    %v980 = vld [vmem:[#allocation2 + $0x1cd0] sm:$0xff]
    %v981 = vld [vmem:[#allocation2 + $0x1cd8] sm:$0xff]
    %v982 = vld [vmem:[#allocation2 + $0x1ce0] sm:$0xff]
    %v983 = vld [vmem:[#allocation2 + $0x1ce8] sm:$0xff]
    %v984 = vld [vmem:[#allocation2 + $0x1cf0] sm:$0xff]
    %v985 = vld [vmem:[#allocation2 + $0x1cf8] sm:$0xff]
    %v986 = vld [vmem:[#allocation2 + $0x1d00] sm:$0xff]
    %v987 = vld [vmem:[#allocation2 + $0x1d08] sm:$0xff]
    %v988 = vld [vmem:[#allocation2 + $0x1d10] sm:$0xff]
    %v989 = vld [vmem:[#allocation2 + $0x1d18] sm:$0xff]
    %v990 = vld [vmem:[#allocation2 + $0x1d20] sm:$0xff]
    %v991 = vld [vmem:[#allocation2 + $0x1d28] sm:$0xff]
    %v992 = vld [vmem:[#allocation2 + $0x1d30] sm:$0xff]
    %v993 = vld [vmem:[#allocation2 + $0x1d38] sm:$0xff]
    %v994 = vld [vmem:[#allocation2 + $0x1d40] sm:$0xff]
    %v995 = vld [vmem:[#allocation2 + $0x1d48] sm:$0xff]
    %v996 = vld [vmem:[#allocation2 + $0x1d50] sm:$0xff]
    %v997 = vld [vmem:[#allocation2 + $0x1d58] sm:$0xff]
    %v998 = vld [vmem:[#allocation2 + $0x1d60] sm:$0xff]
    %v999 = vld [vmem:[#allocation2 + $0x1d68] sm:$0xff]
    %v1000 = vld [vmem:[#allocation2 + $0x1d70] sm:$0xff]
    %v1001 = vld [vmem:[#allocation2 + $0x1d78] sm:$0xff]
    %v1002 = vld [vmem:[#allocation2 + $0x1d80] sm:$0xff]
    %v1003 = vld [vmem:[#allocation2 + $0x1d88] sm:$0xff]
    %v1004 = vld [vmem:[#allocation2 + $0x1d90] sm:$0xff]
    %v1005 = vld [vmem:[#allocation2 + $0x1d98] sm:$0xff]
    %v1006 = vld [vmem:[#allocation2 + $0x1da0] sm:$0xff]
    %v1007 = vld [vmem:[#allocation2 + $0x1da8] sm:$0xff]
    %v1008 = vld [vmem:[#allocation2 + $0x1db0] sm:$0xff]
    %v1009 = vld [vmem:[#allocation2 + $0x1db8] sm:$0xff]
    %v1010 = vld [vmem:[#allocation2 + $0x1dc0] sm:$0xff]
    %v1011 = vld [vmem:[#allocation2 + $0x1dc8] sm:$0xff]
    %v1012 = vld [vmem:[#allocation2 + $0x1dd0] sm:$0xff]
    %v1013 = vld [vmem:[#allocation2 + $0x1dd8] sm:$0xff]
    %v1014 = vld [vmem:[#allocation2 + $0x1de0] sm:$0xff]
    %v1015 = vld [vmem:[#allocation2 + $0x1de8] sm:$0xff]
    %v1016 = vld [vmem:[#allocation2 + $0x1df0] sm:$0xff]
    %v1017 = vld [vmem:[#allocation2 + $0x1df8] sm:$0xff]
    %v1018 = vld [vmem:[#allocation2 + $0x1e00] sm:$0xff]
    %v1019 = vld [vmem:[#allocation2 + $0x1e08] sm:$0xff]
    %v1020 = vld [vmem:[#allocation2 + $0x1e10] sm:$0xff]
    %v1021 = vld [vmem:[#allocation2 + $0x1e18] sm:$0xff]
    %v1022 = vld [vmem:[#allocation2 + $0x1e20] sm:$0xff]
    %v1023 = vld [vmem:[#allocation2 + $0x1e28] sm:$0xff]
    %v1024 = vld [vmem:[#allocation2 + $0x1e30] sm:$0xff]
    %v1025 = vld [vmem:[#allocation2 + $0x1e38] sm:$0xff]
    %v1026 = vld [vmem:[#allocation2 + $0x1e40] sm:$0xff]
    %v1027 = vld [vmem:[#allocation2 + $0x1e48] sm:$0xff]
    %v1028 = vld [vmem:[#allocation2 + $0x1e50] sm:$0xff]
    %v1029 = vld [vmem:[#allocation2 + $0x1e58] sm:$0xff]
    %v1030 = vld [vmem:[#allocation2 + $0x1e60] sm:$0xff]
    %v1031 = vld [vmem:[#allocation2 + $0x1e68] sm:$0xff]
    %v1032 = vld [vmem:[#allocation2 + $0x1e70] sm:$0xff]
    %v1033 = vld [vmem:[#allocation2 + $0x1e78] sm:$0xff]
    %v1034 = vld [vmem:[#allocation2 + $0x1e80] sm:$0xff]
    %v1035 = vld [vmem:[#allocation2 + $0x1e88] sm:$0xff]
    %v1036 = vld [vmem:[#allocation2 + $0x1e90] sm:$0xff]
    %v1037 = vld [vmem:[#allocation2 + $0x1e98] sm:$0xff]
    %v1038 = vld [vmem:[#allocation2 + $0x1ea0] sm:$0xff]
    %v1039 = vld [vmem:[#allocation2 + $0x1ea8] sm:$0xff]
    %v1040 = vld [vmem:[#allocation2 + $0x1eb0] sm:$0xff]
    %v1041 = vld [vmem:[#allocation2 + $0x1eb8] sm:$0xff]
    %v1042 = vld [vmem:[#allocation2 + $0x1ec0] sm:$0xff]
    %v1043 = vld [vmem:[#allocation2 + $0x1ec8] sm:$0xff]
    %v1044 = vld [vmem:[#allocation2 + $0x1ed0] sm:$0xff]
    %v1045 = vld [vmem:[#allocation2 + $0x1ed8] sm:$0xff]
    %v1046 = vld [vmem:[#allocation2 + $0x1ee0] sm:$0xff]
    %v1047 = vld [vmem:[#allocation2 + $0x1ee8] sm:$0xff]
    %v1048 = vld [vmem:[#allocation2 + $0x1ef0] sm:$0xff]
    %v1049 = vld [vmem:[#allocation2 + $0x1ef8] sm:$0xff]
    %v1050 = vld [vmem:[#allocation2 + $0x1f00] sm:$0xff]
    %v1051 = vld [vmem:[#allocation2 + $0x1f08] sm:$0xff]
    %v1052 = vld [vmem:[#allocation2 + $0x1f10] sm:$0xff]
    %v1053 = vld [vmem:[#allocation2 + $0x1f18] sm:$0xff]
    %v1054 = vld [vmem:[#allocation2 + $0x1f20] sm:$0xff]
    %v1055 = vld [vmem:[#allocation2 + $0x1f28] sm:$0xff]
    %v1056 = vld [vmem:[#allocation2 + $0x1f30] sm:$0xff]
    %v1057 = vld [vmem:[#allocation2 + $0x1f38] sm:$0xff]
    %v1058 = vld [vmem:[#allocation2 + $0x1f40] sm:$0xff]
    %v1059 = vld [vmem:[#allocation2 + $0x1f48] sm:$0xff]
    %v1060 = vld [vmem:[#allocation2 + $0x1f50] sm:$0xff]
    %v1061 = vld [vmem:[#allocation2 + $0x1f58] sm:$0xff]
    %v1062 = vld [vmem:[#allocation2 + $0x1f60] sm:$0xff]
    %v1063 = vld [vmem:[#allocation2 + $0x1f68] sm:$0xff]
    %v1064 = vld [vmem:[#allocation2 + $0x1f70] sm:$0xff]
    %v1065 = vld [vmem:[#allocation2 + $0x1f78] sm:$0xff]
    %v1066 = vld [vmem:[#allocation2 + $0x1f80] sm:$0xff]
    %v1067 = vld [vmem:[#allocation2 + $0x1f88] sm:$0xff]
    %v1068 = vld [vmem:[#allocation2 + $0x1f90] sm:$0xff]
    %v1069 = vld [vmem:[#allocation2 + $0x1f98] sm:$0xff]
    %v1070 = vld [vmem:[#allocation2 + $0x1fa0] sm:$0xff]
    %v1071 = vld [vmem:[#allocation2 + $0x1fa8] sm:$0xff]
    %v1072 = vld [vmem:[#allocation2 + $0x1fb0] sm:$0xff]
    %v1073 = vld [vmem:[#allocation2 + $0x1fb8] sm:$0xff]
    %v1074 = vld [vmem:[#allocation2 + $0x1fc0] sm:$0xff]
    %v1075 = vld [vmem:[#allocation2 + $0x1fc8] sm:$0xff]
    %v1076 = vld [vmem:[#allocation2 + $0x1fd0] sm:$0xff]
    %v1077 = vld [vmem:[#allocation2 + $0x1fd8] sm:$0xff]
    %v1078 = vld [vmem:[#allocation2 + $0x1fe0] sm:$0xff]
    %v1079 = vld [vmem:[#allocation2 + $0x1fe8] sm:$0xff]
    %v1080 = vld [vmem:[#allocation2 + $0x1ff0] sm:$0xff]
    %v1081 = vld [vmem:[#allocation2 + $0x1ff8] sm:$0xff]
    %v1084 = vcombine.high %v56, %v56
    %v1086 = vunpack.c.l.s4 1983009808
    %v1087 = vunpack.c.0.s8 %v1086
    %v1088 = vlaneseq
    %v1089 = vshrl.u32 %v1088, 7
    %v1090 = vsub.s32 %v1087, %v1089
    %v1091 = vrot.slane %v56, %v1090
    %v1093 = vunpack.c.l.s4 1983009808
    %v1094 = vunpack.c.0.s8 %v1093
    %v1095 = vlaneseq
    %v1096 = vshrl.u32 %v1095, 7
    %v1097 = vsub.s32 %v1094, %v1096
    %v1098 = vrot.slane %v1084, %v1097
    %v1099 = vcombine.high %v1091, %v1091
    %v1100 = vcombine.high %v1098, %v1098
    %v1101 = vcombine.high %v57, %v57
    %v1103 = vunpack.c.l.s4 1983009808
    %v1104 = vunpack.c.0.s8 %v1103
    %v1105 = vlaneseq
    %v1106 = vshrl.u32 %v1105, 7
    %v1107 = vsub.s32 %v1104, %v1106
    %v1108 = vrot.slane %v57, %v1107
    %v1110 = vunpack.c.l.s4 1983009808
    %v1111 = vunpack.c.0.s8 %v1110
    %v1112 = vlaneseq
    %v1113 = vshrl.u32 %v1112, 7
    %v1114 = vsub.s32 %v1111, %v1113
    %v1115 = vrot.slane %v1101, %v1114
    %v1116 = vcombine.high %v1108, %v1108
    %v1117 = vcombine.high %v1115, %v1115
    %1126 = vmatprep.subr.mxu0 %v179
    %1127 = vmatpush1.msra.mxu0 %v178
    %1128 = vmatprep.subr.mxu0 %v171
    %1129 = vmatpush1.msra.mxu0 %v170
    %1130 = vmatprep.subr.mxu0 %v163
    %1131 = vmatpush1.msra.mxu0 %v162
    %1132 = vmatprep.subr.mxu0 %v155
    %1133 = vmatpush1.msra.mxu0 %v154
    %1134 = vmatprep.subr.mxu0 %v147
    %1135 = vmatpush1.msra.mxu0 %v146
    %1136 = vmatprep.subr.mxu0 %v139
    %1137 = vmatpush1.msra.mxu0 %v138
    %1138 = vmatprep.subr.mxu0 %v131
    %1139 = vmatpush1.msra.mxu0 %v130
    %1140 = vmatprep.subr.mxu0 %v123
    %1141 = vmatpush1.msra.mxu0 %v122
    %1142 = vmatprep.subr.mxu0 %v115
    %1143 = vmatpush1.msra.mxu0 %v114
    %1144 = vmatprep.subr.mxu0 %v107
    %1145 = vmatpush1.msra.mxu0 %v106
    %1146 = vmatprep.subr.mxu0 %v99
    %1147 = vmatpush1.msra.mxu0 %v98
    %1148 = vmatprep.subr.mxu0 %v91
    %1149 = vmatpush1.msra.mxu0 %v90
    %1150 = vmatprep.subr.mxu0 %v83
    %1151 = vmatpush1.msra.mxu0 %v82
    %1152 = vmatprep.subr.mxu0 %v75
    %1153 = vmatpush1.msra.mxu0 %v74
    %1154 = vmatprep.subr.mxu0 %v67
    %1155 = vmatpush1.msra.mxu0 %v66
    %1156 = vmatprep.subr.mxu0 %v59
    %1157 = vmatpush1.msra.mxu0 %v58
    %1158 = vmatprep.subr.mxu0 %v307
    %1159 = vmatpush2.msra.mxu0 %v306
    %1160 = vmatprep.subr.mxu0 %v299
    %1161 = vmatpush2.msra.mxu0 %v298
    %1162 = vmatprep.subr.mxu0 %v291
    %1163 = vmatpush2.msra.mxu0 %v290
    %1164 = vmatprep.subr.mxu0 %v283
    %1165 = vmatpush2.msra.mxu0 %v282
    %1166 = vmatprep.subr.mxu0 %v275
    %1167 = vmatpush2.msra.mxu0 %v274
    %1168 = vmatprep.subr.mxu0 %v267
    %1169 = vmatpush2.msra.mxu0 %v266
    %1170 = vmatprep.subr.mxu0 %v259
    %1171 = vmatpush2.msra.mxu0 %v258
    %1172 = vmatprep.subr.mxu0 %v251
    %1173 = vmatpush2.msra.mxu0 %v250
    %1174 = vmatprep.subr.mxu0 %v243
    %1175 = vmatpush2.msra.mxu0 %v242
    %1176 = vmatprep.subr.mxu0 %v235
    %1177 = vmatpush2.msra.mxu0 %v234
    %1178 = vmatprep.subr.mxu0 %v227
    %1179 = vmatpush2.msra.mxu0 %v226
    %1180 = vmatprep.subr.mxu0 %v219
    %1181 = vmatpush2.msra.mxu0 %v218
    %1182 = vmatprep.subr.mxu0 %v211
    %1183 = vmatpush2.msra.mxu0 %v210
    %1184 = vmatprep.subr.mxu0 %v203
    %1185 = vmatpush2.msra.mxu0 %v202
    %1186 = vmatprep.subr.mxu0 %v195
    %1187 = vmatpush2.msra.mxu0 %v194
    %1188 = vmatprep.subr.mxu0 %v187
    %1189 = vmatpush2.msra.mxu0 %v186
    %1190 = vmatprep.mubr.f32.mxu0 %v1099
    %1191 = vmatmul.mubr.f32.gmra.mxu0 %v1091
    %v1192 = vpop.f32.mrf.mxu0
    %v1193 = vadd.f32 0.0, %v1192
    %v1194 = vpop.f32.mrf.mxu0
    %v1195 = vadd.f32 0.0, %v1194
    %1196 = vdwg.mxu0
    %1197 = vmatprep.subr.mxu0 %v435
    %1198 = vmatpush1.msra.mxu0 %v434
    %1199 = vmatprep.subr.mxu0 %v427
    %1200 = vmatpush1.msra.mxu0 %v426
    %1201 = vmatprep.subr.mxu0 %v419
    %1202 = vmatpush1.msra.mxu0 %v418
    %1203 = vmatprep.subr.mxu0 %v411
    %1204 = vmatpush1.msra.mxu0 %v410
    %1205 = vmatprep.subr.mxu0 %v403
    %1206 = vmatpush1.msra.mxu0 %v402
    %1207 = vmatprep.subr.mxu0 %v395
    %1208 = vmatpush1.msra.mxu0 %v394
    %1209 = vmatprep.subr.mxu0 %v387
    %1210 = vmatpush1.msra.mxu0 %v386
    %1211 = vmatprep.subr.mxu0 %v379
    %1212 = vmatpush1.msra.mxu0 %v378
    %1213 = vmatprep.subr.mxu0 %v371
    %1214 = vmatpush1.msra.mxu0 %v370
    %1215 = vmatprep.subr.mxu0 %v363
    %1216 = vmatpush1.msra.mxu0 %v362
    %1217 = vmatprep.subr.mxu0 %v355
    %1218 = vmatpush1.msra.mxu0 %v354
    %1219 = vmatprep.subr.mxu0 %v347
    %1220 = vmatpush1.msra.mxu0 %v346
    %1221 = vmatprep.subr.mxu0 %v339
    %1222 = vmatpush1.msra.mxu0 %v338
    %1223 = vmatprep.subr.mxu0 %v331
    %1224 = vmatpush1.msra.mxu0 %v330
    %1225 = vmatprep.subr.mxu0 %v323
    %1226 = vmatpush1.msra.mxu0 %v322
    %1227 = vmatprep.subr.mxu0 %v315
    %1228 = vmatpush1.msra.mxu0 %v314
    %1229 = vmatprep.subr.mxu0 %v563
    %1230 = vmatpush2.msra.mxu0 %v562
    %1231 = vmatprep.subr.mxu0 %v555
    %1232 = vmatpush2.msra.mxu0 %v554
    %1233 = vmatprep.subr.mxu0 %v547
    %1234 = vmatpush2.msra.mxu0 %v546
    %1235 = vmatprep.subr.mxu0 %v539
    %1236 = vmatpush2.msra.mxu0 %v538
    %1237 = vmatprep.subr.mxu0 %v531
    %1238 = vmatpush2.msra.mxu0 %v530
    %1239 = vmatprep.subr.mxu0 %v523
    %1240 = vmatpush2.msra.mxu0 %v522
    %1241 = vmatprep.subr.mxu0 %v515
    %1242 = vmatpush2.msra.mxu0 %v514
    %1243 = vmatprep.subr.mxu0 %v507
    %1244 = vmatpush2.msra.mxu0 %v506
    %1245 = vmatprep.subr.mxu0 %v499
    %1246 = vmatpush2.msra.mxu0 %v498
    %1247 = vmatprep.subr.mxu0 %v491
    %1248 = vmatpush2.msra.mxu0 %v490
    %1249 = vmatprep.subr.mxu0 %v483
    %1250 = vmatpush2.msra.mxu0 %v482
    %1251 = vmatprep.subr.mxu0 %v475
    %1252 = vmatpush2.msra.mxu0 %v474
    %1253 = vmatprep.subr.mxu0 %v467
    %1254 = vmatpush2.msra.mxu0 %v466
    %1255 = vmatprep.subr.mxu0 %v459
    %1256 = vmatpush2.msra.mxu0 %v458
    %1257 = vmatprep.subr.mxu0 %v451
    %1258 = vmatpush2.msra.mxu0 %v450
    %1259 = vmatprep.subr.mxu0 %v443
    %1260 = vmatpush2.msra.mxu0 %v442
    %1261 = vmatprep.mubr.f32.mxu0 %v1100
    %1262 = vmatmul.mubr.f32.gmra.mxu0 %v1098
    %v1263 = vpop.f32.mrf.mxu0
    %v1264 = vadd.f32 %v1193, %v1263
    %v1265 = vpop.f32.mrf.mxu0
    %v1266 = vadd.f32 %v1195, %v1265
    %1267 = vdwg.mxu0
    %1268 = vmatprep.subr.mxu0 %v691
    %1269 = vmatpush1.msra.mxu0 %v690
    %1270 = vmatprep.subr.mxu0 %v683
    %1271 = vmatpush1.msra.mxu0 %v682
    %1272 = vmatprep.subr.mxu0 %v675
    %1273 = vmatpush1.msra.mxu0 %v674
    %1274 = vmatprep.subr.mxu0 %v667
    %1275 = vmatpush1.msra.mxu0 %v666
    %1276 = vmatprep.subr.mxu0 %v659
    %1277 = vmatpush1.msra.mxu0 %v658
    %1278 = vmatprep.subr.mxu0 %v651
    %1279 = vmatpush1.msra.mxu0 %v650
    %1280 = vmatprep.subr.mxu0 %v643
    %1281 = vmatpush1.msra.mxu0 %v642
    %1282 = vmatprep.subr.mxu0 %v635
    %1283 = vmatpush1.msra.mxu0 %v634
    %1284 = vmatprep.subr.mxu0 %v627
    %1285 = vmatpush1.msra.mxu0 %v626
    %1286 = vmatprep.subr.mxu0 %v619
    %1287 = vmatpush1.msra.mxu0 %v618
    %1288 = vmatprep.subr.mxu0 %v611
    %1289 = vmatpush1.msra.mxu0 %v610
    %1290 = vmatprep.subr.mxu0 %v603
    %1291 = vmatpush1.msra.mxu0 %v602
    %1292 = vmatprep.subr.mxu0 %v595
    %1293 = vmatpush1.msra.mxu0 %v594
    %1294 = vmatprep.subr.mxu0 %v587
    %1295 = vmatpush1.msra.mxu0 %v586
    %1296 = vmatprep.subr.mxu0 %v579
    %1297 = vmatpush1.msra.mxu0 %v578
    %1298 = vmatprep.subr.mxu0 %v571
    %1299 = vmatpush1.msra.mxu0 %v570
    %1300 = vmatprep.subr.mxu0 %v819
    %1301 = vmatpush2.msra.mxu0 %v818
    %1302 = vmatprep.subr.mxu0 %v811
    %1303 = vmatpush2.msra.mxu0 %v810
    %1304 = vmatprep.subr.mxu0 %v803
    %1305 = vmatpush2.msra.mxu0 %v802
    %1306 = vmatprep.subr.mxu0 %v795
    %1307 = vmatpush2.msra.mxu0 %v794
    %1308 = vmatprep.subr.mxu0 %v787
    %1309 = vmatpush2.msra.mxu0 %v786
    %1310 = vmatprep.subr.mxu0 %v779
    %1311 = vmatpush2.msra.mxu0 %v778
    %1312 = vmatprep.subr.mxu0 %v771
    %1313 = vmatpush2.msra.mxu0 %v770
    %1314 = vmatprep.subr.mxu0 %v763
    %1315 = vmatpush2.msra.mxu0 %v762
    %1316 = vmatprep.subr.mxu0 %v755
    %1317 = vmatpush2.msra.mxu0 %v754
    %1318 = vmatprep.subr.mxu0 %v747
    %1319 = vmatpush2.msra.mxu0 %v746
    %1320 = vmatprep.subr.mxu0 %v739
    %1321 = vmatpush2.msra.mxu0 %v738
    %1322 = vmatprep.subr.mxu0 %v731
    %1323 = vmatpush2.msra.mxu0 %v730
    %1324 = vmatprep.subr.mxu0 %v723
    %1325 = vmatpush2.msra.mxu0 %v722
    %1326 = vmatprep.subr.mxu0 %v715
    %1327 = vmatpush2.msra.mxu0 %v714
    %1328 = vmatprep.subr.mxu0 %v707
    %1329 = vmatpush2.msra.mxu0 %v706
    %1330 = vmatprep.subr.mxu0 %v699
    %1331 = vmatpush2.msra.mxu0 %v698
    %1332 = vmatprep.mubr.f32.mxu0 %v1116
    %1333 = vmatmul.mubr.f32.gmra.mxu0 %v1108
    %v1334 = vpop.f32.mrf.mxu0
    %v1335 = vadd.f32 %v1264, %v1334
    %v1336 = vpop.f32.mrf.mxu0
    %v1337 = vadd.f32 %v1266, %v1336
    %1338 = vdwg.mxu0
    %1339 = vmatprep.subr.mxu0 %v947
    %1340 = vmatpush1.msra.mxu0 %v946
    %1341 = vmatprep.subr.mxu0 %v939
    %1342 = vmatpush1.msra.mxu0 %v938
    %1343 = vmatprep.subr.mxu0 %v931
    %1344 = vmatpush1.msra.mxu0 %v930
    %1345 = vmatprep.subr.mxu0 %v923
    %1346 = vmatpush1.msra.mxu0 %v922
    %1347 = vmatprep.subr.mxu0 %v915
    %1348 = vmatpush1.msra.mxu0 %v914
    %1349 = vmatprep.subr.mxu0 %v907
    %1350 = vmatpush1.msra.mxu0 %v906
    %1351 = vmatprep.subr.mxu0 %v899
    %1352 = vmatpush1.msra.mxu0 %v898
    %1353 = vmatprep.subr.mxu0 %v891
    %1354 = vmatpush1.msra.mxu0 %v890
    %1355 = vmatprep.subr.mxu0 %v883
    %1356 = vmatpush1.msra.mxu0 %v882
    %1357 = vmatprep.subr.mxu0 %v875
    %1358 = vmatpush1.msra.mxu0 %v874
    %1359 = vmatprep.subr.mxu0 %v867
    %1360 = vmatpush1.msra.mxu0 %v866
    %1361 = vmatprep.subr.mxu0 %v859
    %1362 = vmatpush1.msra.mxu0 %v858
    %1363 = vmatprep.subr.mxu0 %v851
    %1364 = vmatpush1.msra.mxu0 %v850
    %1365 = vmatprep.subr.mxu0 %v843
    %1366 = vmatpush1.msra.mxu0 %v842
    %1367 = vmatprep.subr.mxu0 %v835
    %1368 = vmatpush1.msra.mxu0 %v834
    %1369 = vmatprep.subr.mxu0 %v827
    %1370 = vmatpush1.msra.mxu0 %v826
    %1371 = vmatprep.subr.mxu0 %v1075
    %1372 = vmatpush2.msra.mxu0 %v1074
    %1373 = vmatprep.subr.mxu0 %v1067
    %1374 = vmatpush2.msra.mxu0 %v1066
    %1375 = vmatprep.subr.mxu0 %v1059
    %1376 = vmatpush2.msra.mxu0 %v1058
    %1377 = vmatprep.subr.mxu0 %v1051
    %1378 = vmatpush2.msra.mxu0 %v1050
    %1379 = vmatprep.subr.mxu0 %v1043
    %1380 = vmatpush2.msra.mxu0 %v1042
    %1381 = vmatprep.subr.mxu0 %v1035
    %1382 = vmatpush2.msra.mxu0 %v1034
    %1383 = vmatprep.subr.mxu0 %v1027
    %1384 = vmatpush2.msra.mxu0 %v1026
    %1385 = vmatprep.subr.mxu0 %v1019
    %1386 = vmatpush2.msra.mxu0 %v1018
    %1387 = vmatprep.subr.mxu0 %v1011
    %1388 = vmatpush2.msra.mxu0 %v1010
    %1389 = vmatprep.subr.mxu0 %v1003
    %1390 = vmatpush2.msra.mxu0 %v1002
    %1391 = vmatprep.subr.mxu0 %v995
    %1392 = vmatpush2.msra.mxu0 %v994
    %1393 = vmatprep.subr.mxu0 %v987
    %1394 = vmatpush2.msra.mxu0 %v986
    %1395 = vmatprep.subr.mxu0 %v979
    %1396 = vmatpush2.msra.mxu0 %v978
    %1397 = vmatprep.subr.mxu0 %v971
    %1398 = vmatpush2.msra.mxu0 %v970
    %1399 = vmatprep.subr.mxu0 %v963
    %1400 = vmatpush2.msra.mxu0 %v962
    %1401 = vmatprep.subr.mxu0 %v955
    %1402 = vmatpush2.msra.mxu0 %v954
    %1403 = vmatprep.mubr.f32.mxu0 %v1117
    %1404 = vmatmul.mubr.f32.gmra.mxu0 %v1115
    %v1405 = vpop.f32.mrf.mxu0
    %v1406 = vadd.f32 %v1335, %v1405
    %v1407 = vpop.f32.mrf.mxu0
    %v1408 = vadd.f32 %v1337, %v1407
    %1409 = vdwg.mxu0
    %1410 = vmatprep.subr.mxu0 %v181
    %1411 = vmatpush1.msra.mxu0 %v180
    %1412 = vmatprep.subr.mxu0 %v173
    %1413 = vmatpush1.msra.mxu0 %v172
    %1414 = vmatprep.subr.mxu0 %v165
    %1415 = vmatpush1.msra.mxu0 %v164
    %1416 = vmatprep.subr.mxu0 %v157
    %1417 = vmatpush1.msra.mxu0 %v156
    %1418 = vmatprep.subr.mxu0 %v149
    %1419 = vmatpush1.msra.mxu0 %v148
    %1420 = vmatprep.subr.mxu0 %v141
    %1421 = vmatpush1.msra.mxu0 %v140
    %1422 = vmatprep.subr.mxu0 %v133
    %1423 = vmatpush1.msra.mxu0 %v132
    %1424 = vmatprep.subr.mxu0 %v125
    %1425 = vmatpush1.msra.mxu0 %v124
    %1426 = vmatprep.subr.mxu0 %v117
    %1427 = vmatpush1.msra.mxu0 %v116
    %1428 = vmatprep.subr.mxu0 %v109
    %1429 = vmatpush1.msra.mxu0 %v108
    %1430 = vmatprep.subr.mxu0 %v101
    %1431 = vmatpush1.msra.mxu0 %v100
    %1432 = vmatprep.subr.mxu0 %v93
    %1433 = vmatpush1.msra.mxu0 %v92
    %1434 = vmatprep.subr.mxu0 %v85
    %1435 = vmatpush1.msra.mxu0 %v84
    %1436 = vmatprep.subr.mxu0 %v77
    %1437 = vmatpush1.msra.mxu0 %v76
    %1438 = vmatprep.subr.mxu0 %v69
    %1439 = vmatpush1.msra.mxu0 %v68
    %1440 = vmatprep.subr.mxu0 %v61
    %1441 = vmatpush1.msra.mxu0 %v60
    %1442 = vmatprep.subr.mxu0 %v309
    %1443 = vmatpush2.msra.mxu0 %v308
    %1444 = vmatprep.subr.mxu0 %v301
    %1445 = vmatpush2.msra.mxu0 %v300
    %1446 = vmatprep.subr.mxu0 %v293
    %1447 = vmatpush2.msra.mxu0 %v292
    %1448 = vmatprep.subr.mxu0 %v285
    %1449 = vmatpush2.msra.mxu0 %v284
    %1450 = vmatprep.subr.mxu0 %v277
    %1451 = vmatpush2.msra.mxu0 %v276
    %1452 = vmatprep.subr.mxu0 %v269
    %1453 = vmatpush2.msra.mxu0 %v268
    %1454 = vmatprep.subr.mxu0 %v261
    %1455 = vmatpush2.msra.mxu0 %v260
    %1456 = vmatprep.subr.mxu0 %v253
    %1457 = vmatpush2.msra.mxu0 %v252
    %1458 = vmatprep.subr.mxu0 %v245
    %1459 = vmatpush2.msra.mxu0 %v244
    %1460 = vmatprep.subr.mxu0 %v237
    %1461 = vmatpush2.msra.mxu0 %v236
    %1462 = vmatprep.subr.mxu0 %v229
    %1463 = vmatpush2.msra.mxu0 %v228
    %1464 = vmatprep.subr.mxu0 %v221
    %1465 = vmatpush2.msra.mxu0 %v220
    %1466 = vmatprep.subr.mxu0 %v213
    %1467 = vmatpush2.msra.mxu0 %v212
    %1468 = vmatprep.subr.mxu0 %v205
    %1469 = vmatpush2.msra.mxu0 %v204
    %1470 = vmatprep.subr.mxu0 %v197
    %1471 = vmatpush2.msra.mxu0 %v196
    %1472 = vmatprep.subr.mxu0 %v189
    %1473 = vmatpush2.msra.mxu0 %v188
    %1474 = vmatprep.mubr.f32.mxu0 %v1099
    %1475 = vmatmul.mubr.f32.gmra.mxu0 %v1091
    %v1476 = vpop.f32.mrf.mxu0
    %v1477 = vadd.f32 0.0, %v1476
    %v1478 = vpop.f32.mrf.mxu0
    %v1479 = vadd.f32 0.0, %v1478
    %1480 = vdwg.mxu0
    %1481 = vmatprep.subr.mxu0 %v437
    %1482 = vmatpush1.msra.mxu0 %v436
    %1483 = vmatprep.subr.mxu0 %v429
    %1484 = vmatpush1.msra.mxu0 %v428
    %1485 = vmatprep.subr.mxu0 %v421
    %1486 = vmatpush1.msra.mxu0 %v420
    %1487 = vmatprep.subr.mxu0 %v413
    %1488 = vmatpush1.msra.mxu0 %v412
    %1489 = vmatprep.subr.mxu0 %v405
    %1490 = vmatpush1.msra.mxu0 %v404
    %1491 = vmatprep.subr.mxu0 %v397
    %1492 = vmatpush1.msra.mxu0 %v396
    %1493 = vmatprep.subr.mxu0 %v389
    %1494 = vmatpush1.msra.mxu0 %v388
    %1495 = vmatprep.subr.mxu0 %v381
    %1496 = vmatpush1.msra.mxu0 %v380
    %1497 = vmatprep.subr.mxu0 %v373
    %1498 = vmatpush1.msra.mxu0 %v372
    %1499 = vmatprep.subr.mxu0 %v365
    %1500 = vmatpush1.msra.mxu0 %v364
    %1501 = vmatprep.subr.mxu0 %v357
    %1502 = vmatpush1.msra.mxu0 %v356
    %1503 = vmatprep.subr.mxu0 %v349
    %1504 = vmatpush1.msra.mxu0 %v348
    %1505 = vmatprep.subr.mxu0 %v341
    %1506 = vmatpush1.msra.mxu0 %v340
    %1507 = vmatprep.subr.mxu0 %v333
    %1508 = vmatpush1.msra.mxu0 %v332
    %1509 = vmatprep.subr.mxu0 %v325
    %1510 = vmatpush1.msra.mxu0 %v324
    %1511 = vmatprep.subr.mxu0 %v317
    %1512 = vmatpush1.msra.mxu0 %v316
    %1513 = vmatprep.subr.mxu0 %v565
    %1514 = vmatpush2.msra.mxu0 %v564
    %1515 = vmatprep.subr.mxu0 %v557
    %1516 = vmatpush2.msra.mxu0 %v556
    %1517 = vmatprep.subr.mxu0 %v549
    %1518 = vmatpush2.msra.mxu0 %v548
    %1519 = vmatprep.subr.mxu0 %v541
    %1520 = vmatpush2.msra.mxu0 %v540
    %1521 = vmatprep.subr.mxu0 %v533
    %1522 = vmatpush2.msra.mxu0 %v532
    %1523 = vmatprep.subr.mxu0 %v525
    %1524 = vmatpush2.msra.mxu0 %v524
    %1525 = vmatprep.subr.mxu0 %v517
    %1526 = vmatpush2.msra.mxu0 %v516
    %1527 = vmatprep.subr.mxu0 %v509
    %1528 = vmatpush2.msra.mxu0 %v508
    %1529 = vmatprep.subr.mxu0 %v501
    %1530 = vmatpush2.msra.mxu0 %v500
    %1531 = vmatprep.subr.mxu0 %v493
    %1532 = vmatpush2.msra.mxu0 %v492
    %1533 = vmatprep.subr.mxu0 %v485
    %1534 = vmatpush2.msra.mxu0 %v484
    %1535 = vmatprep.subr.mxu0 %v477
    %1536 = vmatpush2.msra.mxu0 %v476
    %1537 = vmatprep.subr.mxu0 %v469
    %1538 = vmatpush2.msra.mxu0 %v468
    %1539 = vmatprep.subr.mxu0 %v461
    %1540 = vmatpush2.msra.mxu0 %v460
    %1541 = vmatprep.subr.mxu0 %v453
    %1542 = vmatpush2.msra.mxu0 %v452
    %1543 = vmatprep.subr.mxu0 %v445
    %1544 = vmatpush2.msra.mxu0 %v444
    %1545 = vmatprep.mubr.f32.mxu0 %v1100
    %1546 = vmatmul.mubr.f32.gmra.mxu0 %v1098
    %v1547 = vpop.f32.mrf.mxu0
    %v1548 = vadd.f32 %v1477, %v1547
    %v1549 = vpop.f32.mrf.mxu0
    %v1550 = vadd.f32 %v1479, %v1549
    %1551 = vdwg.mxu0
    %1552 = vmatprep.subr.mxu0 %v693
    %1553 = vmatpush1.msra.mxu0 %v692
    %1554 = vmatprep.subr.mxu0 %v685
    %1555 = vmatpush1.msra.mxu0 %v684
    %1556 = vmatprep.subr.mxu0 %v677
    %1557 = vmatpush1.msra.mxu0 %v676
    %1558 = vmatprep.subr.mxu0 %v669
    %1559 = vmatpush1.msra.mxu0 %v668
    %1560 = vmatprep.subr.mxu0 %v661
    %1561 = vmatpush1.msra.mxu0 %v660
    %1562 = vmatprep.subr.mxu0 %v653
    %1563 = vmatpush1.msra.mxu0 %v652
    %1564 = vmatprep.subr.mxu0 %v645
    %1565 = vmatpush1.msra.mxu0 %v644
    %1566 = vmatprep.subr.mxu0 %v637
    %1567 = vmatpush1.msra.mxu0 %v636
    %1568 = vmatprep.subr.mxu0 %v629
    %1569 = vmatpush1.msra.mxu0 %v628
    %1570 = vmatprep.subr.mxu0 %v621
    %1571 = vmatpush1.msra.mxu0 %v620
    %1572 = vmatprep.subr.mxu0 %v613
    %1573 = vmatpush1.msra.mxu0 %v612
    %1574 = vmatprep.subr.mxu0 %v605
    %1575 = vmatpush1.msra.mxu0 %v604
    %1576 = vmatprep.subr.mxu0 %v597
    %1577 = vmatpush1.msra.mxu0 %v596
    %1578 = vmatprep.subr.mxu0 %v589
    %1579 = vmatpush1.msra.mxu0 %v588
    %1580 = vmatprep.subr.mxu0 %v581
    %1581 = vmatpush1.msra.mxu0 %v580
    %1582 = vmatprep.subr.mxu0 %v573
    %1583 = vmatpush1.msra.mxu0 %v572
    %1584 = vmatprep.subr.mxu0 %v821
    %1585 = vmatpush2.msra.mxu0 %v820
    %1586 = vmatprep.subr.mxu0 %v813
    %1587 = vmatpush2.msra.mxu0 %v812
    %1588 = vmatprep.subr.mxu0 %v805
    %1589 = vmatpush2.msra.mxu0 %v804
    %1590 = vmatprep.subr.mxu0 %v797
    %1591 = vmatpush2.msra.mxu0 %v796
    %1592 = vmatprep.subr.mxu0 %v789
    %1593 = vmatpush2.msra.mxu0 %v788
    %1594 = vmatprep.subr.mxu0 %v781
    %1595 = vmatpush2.msra.mxu0 %v780
    %1596 = vmatprep.subr.mxu0 %v773
    %1597 = vmatpush2.msra.mxu0 %v772
    %1598 = vmatprep.subr.mxu0 %v765
    %1599 = vmatpush2.msra.mxu0 %v764
    %1600 = vmatprep.subr.mxu0 %v757
    %1601 = vmatpush2.msra.mxu0 %v756
    %1602 = vmatprep.subr.mxu0 %v749
    %1603 = vmatpush2.msra.mxu0 %v748
    %1604 = vmatprep.subr.mxu0 %v741
    %1605 = vmatpush2.msra.mxu0 %v740
    %1606 = vmatprep.subr.mxu0 %v733
    %1607 = vmatpush2.msra.mxu0 %v732
    %1608 = vmatprep.subr.mxu0 %v725
    %1609 = vmatpush2.msra.mxu0 %v724
    %1610 = vmatprep.subr.mxu0 %v717
    %1611 = vmatpush2.msra.mxu0 %v716
    %1612 = vmatprep.subr.mxu0 %v709
    %1613 = vmatpush2.msra.mxu0 %v708
    %1614 = vmatprep.subr.mxu0 %v701
    %1615 = vmatpush2.msra.mxu0 %v700
    %1616 = vmatprep.mubr.f32.mxu0 %v1116
    %1617 = vmatmul.mubr.f32.gmra.mxu0 %v1108
    %v1618 = vpop.f32.mrf.mxu0
    %v1619 = vadd.f32 %v1548, %v1618
    %v1620 = vpop.f32.mrf.mxu0
    %v1621 = vadd.f32 %v1550, %v1620
    %1622 = vdwg.mxu0
    %1623 = vmatprep.subr.mxu0 %v949
    %1624 = vmatpush1.msra.mxu0 %v948
    %1625 = vmatprep.subr.mxu0 %v941
    %1626 = vmatpush1.msra.mxu0 %v940
    %1627 = vmatprep.subr.mxu0 %v933
    %1628 = vmatpush1.msra.mxu0 %v932
    %1629 = vmatprep.subr.mxu0 %v925
    %1630 = vmatpush1.msra.mxu0 %v924
    %1631 = vmatprep.subr.mxu0 %v917
    %1632 = vmatpush1.msra.mxu0 %v916
    %1633 = vmatprep.subr.mxu0 %v909
    %1634 = vmatpush1.msra.mxu0 %v908
    %1635 = vmatprep.subr.mxu0 %v901
    %1636 = vmatpush1.msra.mxu0 %v900
    %1637 = vmatprep.subr.mxu0 %v893
    %1638 = vmatpush1.msra.mxu0 %v892
    %1639 = vmatprep.subr.mxu0 %v885
    %1640 = vmatpush1.msra.mxu0 %v884
    %1641 = vmatprep.subr.mxu0 %v877
    %1642 = vmatpush1.msra.mxu0 %v876
    %1643 = vmatprep.subr.mxu0 %v869
    %1644 = vmatpush1.msra.mxu0 %v868
    %1645 = vmatprep.subr.mxu0 %v861
    %1646 = vmatpush1.msra.mxu0 %v860
    %1647 = vmatprep.subr.mxu0 %v853
    %1648 = vmatpush1.msra.mxu0 %v852
    %1649 = vmatprep.subr.mxu0 %v845
    %1650 = vmatpush1.msra.mxu0 %v844
    %1651 = vmatprep.subr.mxu0 %v837
    %1652 = vmatpush1.msra.mxu0 %v836
    %1653 = vmatprep.subr.mxu0 %v829
    %1654 = vmatpush1.msra.mxu0 %v828
    %1655 = vmatprep.subr.mxu0 %v1077
    %1656 = vmatpush2.msra.mxu0 %v1076
    %1657 = vmatprep.subr.mxu0 %v1069
    %1658 = vmatpush2.msra.mxu0 %v1068
    %1659 = vmatprep.subr.mxu0 %v1061
    %1660 = vmatpush2.msra.mxu0 %v1060
    %1661 = vmatprep.subr.mxu0 %v1053
    %1662 = vmatpush2.msra.mxu0 %v1052
    %1663 = vmatprep.subr.mxu0 %v1045
    %1664 = vmatpush2.msra.mxu0 %v1044
    %1665 = vmatprep.subr.mxu0 %v1037
    %1666 = vmatpush2.msra.mxu0 %v1036
    %1667 = vmatprep.subr.mxu0 %v1029
    %1668 = vmatpush2.msra.mxu0 %v1028
    %1669 = vmatprep.subr.mxu0 %v1021
    %1670 = vmatpush2.msra.mxu0 %v1020
    %1671 = vmatprep.subr.mxu0 %v1013
    %1672 = vmatpush2.msra.mxu0 %v1012
    %1673 = vmatprep.subr.mxu0 %v1005
    %1674 = vmatpush2.msra.mxu0 %v1004
    %1675 = vmatprep.subr.mxu0 %v997
    %1676 = vmatpush2.msra.mxu0 %v996
    %1677 = vmatprep.subr.mxu0 %v989
    %1678 = vmatpush2.msra.mxu0 %v988
    %1679 = vmatprep.subr.mxu0 %v981
    %1680 = vmatpush2.msra.mxu0 %v980
    %1681 = vmatprep.subr.mxu0 %v973
    %1682 = vmatpush2.msra.mxu0 %v972
    %1683 = vmatprep.subr.mxu0 %v965
    %1684 = vmatpush2.msra.mxu0 %v964
    %1685 = vmatprep.subr.mxu0 %v957
    %1686 = vmatpush2.msra.mxu0 %v956
    %1687 = vmatprep.mubr.f32.mxu0 %v1117
    %1688 = vmatmul.mubr.f32.gmra.mxu0 %v1115
    %v1689 = vpop.f32.mrf.mxu0
    %v1690 = vadd.f32 %v1619, %v1689
    %v1691 = vpop.f32.mrf.mxu0
    %v1692 = vadd.f32 %v1621, %v1691
    %1693 = vdwg.mxu0
    %1694 = vmatprep.subr.mxu0 %v183
    %1695 = vmatpush1.msra.mxu0 %v182
    %1696 = vmatprep.subr.mxu0 %v175
    %1697 = vmatpush1.msra.mxu0 %v174
    %1698 = vmatprep.subr.mxu0 %v167
    %1699 = vmatpush1.msra.mxu0 %v166
    %1700 = vmatprep.subr.mxu0 %v159
    %1701 = vmatpush1.msra.mxu0 %v158
    %1702 = vmatprep.subr.mxu0 %v151
    %1703 = vmatpush1.msra.mxu0 %v150
    %1704 = vmatprep.subr.mxu0 %v143
    %1705 = vmatpush1.msra.mxu0 %v142
    %1706 = vmatprep.subr.mxu0 %v135
    %1707 = vmatpush1.msra.mxu0 %v134
    %1708 = vmatprep.subr.mxu0 %v127
    %1709 = vmatpush1.msra.mxu0 %v126
    %1710 = vmatprep.subr.mxu0 %v119
    %1711 = vmatpush1.msra.mxu0 %v118
    %1712 = vmatprep.subr.mxu0 %v111
    %1713 = vmatpush1.msra.mxu0 %v110
    %1714 = vmatprep.subr.mxu0 %v103
    %1715 = vmatpush1.msra.mxu0 %v102
    %1716 = vmatprep.subr.mxu0 %v95
    %1717 = vmatpush1.msra.mxu0 %v94
    %1718 = vmatprep.subr.mxu0 %v87
    %1719 = vmatpush1.msra.mxu0 %v86
    %1720 = vmatprep.subr.mxu0 %v79
    %1721 = vmatpush1.msra.mxu0 %v78
    %1722 = vmatprep.subr.mxu0 %v71
    %1723 = vmatpush1.msra.mxu0 %v70
    %1724 = vmatprep.subr.mxu0 %v63
    %1725 = vmatpush1.msra.mxu0 %v62
    %1726 = vmatprep.subr.mxu0 %v311
    %1727 = vmatpush2.msra.mxu0 %v310
    %1728 = vmatprep.subr.mxu0 %v303
    %1729 = vmatpush2.msra.mxu0 %v302
    %1730 = vmatprep.subr.mxu0 %v295
    %1731 = vmatpush2.msra.mxu0 %v294
    %1732 = vmatprep.subr.mxu0 %v287
    %1733 = vmatpush2.msra.mxu0 %v286
    %1734 = vmatprep.subr.mxu0 %v279
    %1735 = vmatpush2.msra.mxu0 %v278
    %1736 = vmatprep.subr.mxu0 %v271
    %1737 = vmatpush2.msra.mxu0 %v270
    %1738 = vmatprep.subr.mxu0 %v263
    %1739 = vmatpush2.msra.mxu0 %v262
    %1740 = vmatprep.subr.mxu0 %v255
    %1741 = vmatpush2.msra.mxu0 %v254
    %1742 = vmatprep.subr.mxu0 %v247
    %1743 = vmatpush2.msra.mxu0 %v246
    %1744 = vmatprep.subr.mxu0 %v239
    %1745 = vmatpush2.msra.mxu0 %v238
    %1746 = vmatprep.subr.mxu0 %v231
    %1747 = vmatpush2.msra.mxu0 %v230
    %1748 = vmatprep.subr.mxu0 %v223
    %1749 = vmatpush2.msra.mxu0 %v222
    %1750 = vmatprep.subr.mxu0 %v215
    %1751 = vmatpush2.msra.mxu0 %v214
    %1752 = vmatprep.subr.mxu0 %v207
    %1753 = vmatpush2.msra.mxu0 %v206
    %1754 = vmatprep.subr.mxu0 %v199
    %1755 = vmatpush2.msra.mxu0 %v198
    %1756 = vmatprep.subr.mxu0 %v191
    %1757 = vmatpush2.msra.mxu0 %v190
    %1758 = vmatprep.mubr.f32.mxu0 %v1099
    %1759 = vmatmul.mubr.f32.gmra.mxu0 %v1091
    %v1760 = vpop.f32.mrf.mxu0
    %v1761 = vadd.f32 0.0, %v1760
    %v1762 = vpop.f32.mrf.mxu0
    %v1763 = vadd.f32 0.0, %v1762
    %1764 = vdwg.mxu0
    %1765 = vmatprep.subr.mxu0 %v439
    %1766 = vmatpush1.msra.mxu0 %v438
    %1767 = vmatprep.subr.mxu0 %v431
    %1768 = vmatpush1.msra.mxu0 %v430
    %1769 = vmatprep.subr.mxu0 %v423
    %1770 = vmatpush1.msra.mxu0 %v422
    %1771 = vmatprep.subr.mxu0 %v415
    %1772 = vmatpush1.msra.mxu0 %v414
    %1773 = vmatprep.subr.mxu0 %v407
    %1774 = vmatpush1.msra.mxu0 %v406
    %1775 = vmatprep.subr.mxu0 %v399
    %1776 = vmatpush1.msra.mxu0 %v398
    %1777 = vmatprep.subr.mxu0 %v391
    %1778 = vmatpush1.msra.mxu0 %v390
    %1779 = vmatprep.subr.mxu0 %v383
    %1780 = vmatpush1.msra.mxu0 %v382
    %1781 = vmatprep.subr.mxu0 %v375
    %1782 = vmatpush1.msra.mxu0 %v374
    %1783 = vmatprep.subr.mxu0 %v367
    %1784 = vmatpush1.msra.mxu0 %v366
    %1785 = vmatprep.subr.mxu0 %v359
    %1786 = vmatpush1.msra.mxu0 %v358
    %1787 = vmatprep.subr.mxu0 %v351
    %1788 = vmatpush1.msra.mxu0 %v350
    %1789 = vmatprep.subr.mxu0 %v343
    %1790 = vmatpush1.msra.mxu0 %v342
    %1791 = vmatprep.subr.mxu0 %v335
    %1792 = vmatpush1.msra.mxu0 %v334
    %1793 = vmatprep.subr.mxu0 %v327
    %1794 = vmatpush1.msra.mxu0 %v326
    %1795 = vmatprep.subr.mxu0 %v319
    %1796 = vmatpush1.msra.mxu0 %v318
    %1797 = vmatprep.subr.mxu0 %v567
    %1798 = vmatpush2.msra.mxu0 %v566
    %1799 = vmatprep.subr.mxu0 %v559
    %1800 = vmatpush2.msra.mxu0 %v558
    %1801 = vmatprep.subr.mxu0 %v551
    %1802 = vmatpush2.msra.mxu0 %v550
    %1803 = vmatprep.subr.mxu0 %v543
    %1804 = vmatpush2.msra.mxu0 %v542
    %1805 = vmatprep.subr.mxu0 %v535
    %1806 = vmatpush2.msra.mxu0 %v534
    %1807 = vmatprep.subr.mxu0 %v527
    %1808 = vmatpush2.msra.mxu0 %v526
    %1809 = vmatprep.subr.mxu0 %v519
    %1810 = vmatpush2.msra.mxu0 %v518
    %1811 = vmatprep.subr.mxu0 %v511
    %1812 = vmatpush2.msra.mxu0 %v510
    %1813 = vmatprep.subr.mxu0 %v503
    %1814 = vmatpush2.msra.mxu0 %v502
    %1815 = vmatprep.subr.mxu0 %v495
    %1816 = vmatpush2.msra.mxu0 %v494
    %1817 = vmatprep.subr.mxu0 %v487
    %1818 = vmatpush2.msra.mxu0 %v486
    %1819 = vmatprep.subr.mxu0 %v479
    %1820 = vmatpush2.msra.mxu0 %v478
    %1821 = vmatprep.subr.mxu0 %v471
    %1822 = vmatpush2.msra.mxu0 %v470
    %1823 = vmatprep.subr.mxu0 %v463
    %1824 = vmatpush2.msra.mxu0 %v462
    %1825 = vmatprep.subr.mxu0 %v455
    %1826 = vmatpush2.msra.mxu0 %v454
    %1827 = vmatprep.subr.mxu0 %v447
    %1828 = vmatpush2.msra.mxu0 %v446
    %1829 = vmatprep.mubr.f32.mxu0 %v1100
    %1830 = vmatmul.mubr.f32.gmra.mxu0 %v1098
    %v1831 = vpop.f32.mrf.mxu0
    %v1832 = vadd.f32 %v1761, %v1831
    %v1833 = vpop.f32.mrf.mxu0
    %v1834 = vadd.f32 %v1763, %v1833
    %1835 = vdwg.mxu0
    %1836 = vmatprep.subr.mxu0 %v695
    %1837 = vmatpush1.msra.mxu0 %v694
    %1838 = vmatprep.subr.mxu0 %v687
    %1839 = vmatpush1.msra.mxu0 %v686
    %1840 = vmatprep.subr.mxu0 %v679
    %1841 = vmatpush1.msra.mxu0 %v678
    %1842 = vmatprep.subr.mxu0 %v671
    %1843 = vmatpush1.msra.mxu0 %v670
    %1844 = vmatprep.subr.mxu0 %v663
    %1845 = vmatpush1.msra.mxu0 %v662
    %1846 = vmatprep.subr.mxu0 %v655
    %1847 = vmatpush1.msra.mxu0 %v654
    %1848 = vmatprep.subr.mxu0 %v647
    %1849 = vmatpush1.msra.mxu0 %v646
    %1850 = vmatprep.subr.mxu0 %v639
    %1851 = vmatpush1.msra.mxu0 %v638
    %1852 = vmatprep.subr.mxu0 %v631
    %1853 = vmatpush1.msra.mxu0 %v630
    %1854 = vmatprep.subr.mxu0 %v623
    %1855 = vmatpush1.msra.mxu0 %v622
    %1856 = vmatprep.subr.mxu0 %v615
    %1857 = vmatpush1.msra.mxu0 %v614
    %1858 = vmatprep.subr.mxu0 %v607
    %1859 = vmatpush1.msra.mxu0 %v606
    %1860 = vmatprep.subr.mxu0 %v599
    %1861 = vmatpush1.msra.mxu0 %v598
    %1862 = vmatprep.subr.mxu0 %v591
    %1863 = vmatpush1.msra.mxu0 %v590
    %1864 = vmatprep.subr.mxu0 %v583
    %1865 = vmatpush1.msra.mxu0 %v582
    %1866 = vmatprep.subr.mxu0 %v575
    %1867 = vmatpush1.msra.mxu0 %v574
    %1868 = vmatprep.subr.mxu0 %v823
    %1869 = vmatpush2.msra.mxu0 %v822
    %1870 = vmatprep.subr.mxu0 %v815
    %1871 = vmatpush2.msra.mxu0 %v814
    %1872 = vmatprep.subr.mxu0 %v807
    %1873 = vmatpush2.msra.mxu0 %v806
    %1874 = vmatprep.subr.mxu0 %v799
    %1875 = vmatpush2.msra.mxu0 %v798
    %1876 = vmatprep.subr.mxu0 %v791
    %1877 = vmatpush2.msra.mxu0 %v790
    %1878 = vmatprep.subr.mxu0 %v783
    %1879 = vmatpush2.msra.mxu0 %v782
    %1880 = vmatprep.subr.mxu0 %v775
    %1881 = vmatpush2.msra.mxu0 %v774
    %1882 = vmatprep.subr.mxu0 %v767
    %1883 = vmatpush2.msra.mxu0 %v766
    %1884 = vmatprep.subr.mxu0 %v759
    %1885 = vmatpush2.msra.mxu0 %v758
    %1886 = vmatprep.subr.mxu0 %v751
    %1887 = vmatpush2.msra.mxu0 %v750
    %1888 = vmatprep.subr.mxu0 %v743
    %1889 = vmatpush2.msra.mxu0 %v742
    %1890 = vmatprep.subr.mxu0 %v735
    %1891 = vmatpush2.msra.mxu0 %v734
    %1892 = vmatprep.subr.mxu0 %v727
    %1893 = vmatpush2.msra.mxu0 %v726
    %1894 = vmatprep.subr.mxu0 %v719
    %1895 = vmatpush2.msra.mxu0 %v718
    %1896 = vmatprep.subr.mxu0 %v711
    %1897 = vmatpush2.msra.mxu0 %v710
    %1898 = vmatprep.subr.mxu0 %v703
    %1899 = vmatpush2.msra.mxu0 %v702
    %1900 = vmatprep.mubr.f32.mxu0 %v1116
    %1901 = vmatmul.mubr.f32.gmra.mxu0 %v1108
    %v1902 = vpop.f32.mrf.mxu0
    %v1903 = vadd.f32 %v1832, %v1902
    %v1904 = vpop.f32.mrf.mxu0
    %v1905 = vadd.f32 %v1834, %v1904
    %1906 = vdwg.mxu0
    %1907 = vmatprep.subr.mxu0 %v951
    %1908 = vmatpush1.msra.mxu0 %v950
    %1909 = vmatprep.subr.mxu0 %v943
    %1910 = vmatpush1.msra.mxu0 %v942
    %1911 = vmatprep.subr.mxu0 %v935
    %1912 = vmatpush1.msra.mxu0 %v934
    %1913 = vmatprep.subr.mxu0 %v927
    %1914 = vmatpush1.msra.mxu0 %v926
    %1915 = vmatprep.subr.mxu0 %v919
    %1916 = vmatpush1.msra.mxu0 %v918
    %1917 = vmatprep.subr.mxu0 %v911
    %1918 = vmatpush1.msra.mxu0 %v910
    %1919 = vmatprep.subr.mxu0 %v903
    %1920 = vmatpush1.msra.mxu0 %v902
    %1921 = vmatprep.subr.mxu0 %v895
    %1922 = vmatpush1.msra.mxu0 %v894
    %1923 = vmatprep.subr.mxu0 %v887
    %1924 = vmatpush1.msra.mxu0 %v886
    %1925 = vmatprep.subr.mxu0 %v879
    %1926 = vmatpush1.msra.mxu0 %v878
    %1927 = vmatprep.subr.mxu0 %v871
    %1928 = vmatpush1.msra.mxu0 %v870
    %1929 = vmatprep.subr.mxu0 %v863
    %1930 = vmatpush1.msra.mxu0 %v862
    %1931 = vmatprep.subr.mxu0 %v855
    %1932 = vmatpush1.msra.mxu0 %v854
    %1933 = vmatprep.subr.mxu0 %v847
    %1934 = vmatpush1.msra.mxu0 %v846
    %1935 = vmatprep.subr.mxu0 %v839
    %1936 = vmatpush1.msra.mxu0 %v838
    %1937 = vmatprep.subr.mxu0 %v831
    %1938 = vmatpush1.msra.mxu0 %v830
    %1939 = vmatprep.subr.mxu0 %v1079
    %1940 = vmatpush2.msra.mxu0 %v1078
    %1941 = vmatprep.subr.mxu0 %v1071
    %1942 = vmatpush2.msra.mxu0 %v1070
    %1943 = vmatprep.subr.mxu0 %v1063
    %1944 = vmatpush2.msra.mxu0 %v1062
    %1945 = vmatprep.subr.mxu0 %v1055
    %1946 = vmatpush2.msra.mxu0 %v1054
    %1947 = vmatprep.subr.mxu0 %v1047
    %1948 = vmatpush2.msra.mxu0 %v1046
    %1949 = vmatprep.subr.mxu0 %v1039
    %1950 = vmatpush2.msra.mxu0 %v1038
    %1951 = vmatprep.subr.mxu0 %v1031
    %1952 = vmatpush2.msra.mxu0 %v1030
    %1953 = vmatprep.subr.mxu0 %v1023
    %1954 = vmatpush2.msra.mxu0 %v1022
    %1955 = vmatprep.subr.mxu0 %v1015
    %1956 = vmatpush2.msra.mxu0 %v1014
    %1957 = vmatprep.subr.mxu0 %v1007
    %1958 = vmatpush2.msra.mxu0 %v1006
    %1959 = vmatprep.subr.mxu0 %v999
    %1960 = vmatpush2.msra.mxu0 %v998
    %1961 = vmatprep.subr.mxu0 %v991
    %1962 = vmatpush2.msra.mxu0 %v990
    %1963 = vmatprep.subr.mxu0 %v983
    %1964 = vmatpush2.msra.mxu0 %v982
    %1965 = vmatprep.subr.mxu0 %v975
    %1966 = vmatpush2.msra.mxu0 %v974
    %1967 = vmatprep.subr.mxu0 %v967
    %1968 = vmatpush2.msra.mxu0 %v966
    %1969 = vmatprep.subr.mxu0 %v959
    %1970 = vmatpush2.msra.mxu0 %v958
    %1971 = vmatprep.mubr.f32.mxu0 %v1117
    %1972 = vmatmul.mubr.f32.gmra.mxu0 %v1115
    %v1973 = vpop.f32.mrf.mxu0
    %v1974 = vadd.f32 %v1903, %v1973
    %v1975 = vpop.f32.mrf.mxu0
    %v1976 = vadd.f32 %v1905, %v1975
    %1977 = vdwg.mxu0
    %1978 = vmatprep.subr.mxu0 %v185
    %1979 = vmatpush1.msra.mxu0 %v184
    %1980 = vmatprep.subr.mxu0 %v177
    %1981 = vmatpush1.msra.mxu0 %v176
    %1982 = vmatprep.subr.mxu0 %v169
    %1983 = vmatpush1.msra.mxu0 %v168
    %1984 = vmatprep.subr.mxu0 %v161
    %1985 = vmatpush1.msra.mxu0 %v160
    %1986 = vmatprep.subr.mxu0 %v153
    %1987 = vmatpush1.msra.mxu0 %v152
    %1988 = vmatprep.subr.mxu0 %v145
    %1989 = vmatpush1.msra.mxu0 %v144
    %1990 = vmatprep.subr.mxu0 %v137
    %1991 = vmatpush1.msra.mxu0 %v136
    %1992 = vmatprep.subr.mxu0 %v129
    %1993 = vmatpush1.msra.mxu0 %v128
    %1994 = vmatprep.subr.mxu0 %v121
    %1995 = vmatpush1.msra.mxu0 %v120
    %1996 = vmatprep.subr.mxu0 %v113
    %1997 = vmatpush1.msra.mxu0 %v112
    %1998 = vmatprep.subr.mxu0 %v105
    %1999 = vmatpush1.msra.mxu0 %v104
    %2000 = vmatprep.subr.mxu0 %v97
    %2001 = vmatpush1.msra.mxu0 %v96
    %2002 = vmatprep.subr.mxu0 %v89
    %2003 = vmatpush1.msra.mxu0 %v88
    %2004 = vmatprep.subr.mxu0 %v81
    %2005 = vmatpush1.msra.mxu0 %v80
    %2006 = vmatprep.subr.mxu0 %v73
    %2007 = vmatpush1.msra.mxu0 %v72
    %2008 = vmatprep.subr.mxu0 %v65
    %2009 = vmatpush1.msra.mxu0 %v64
    %2010 = vmatprep.subr.mxu0 %v313
    %2011 = vmatpush2.msra.mxu0 %v312
    %2012 = vmatprep.subr.mxu0 %v305
    %2013 = vmatpush2.msra.mxu0 %v304
    %2014 = vmatprep.subr.mxu0 %v297
    %2015 = vmatpush2.msra.mxu0 %v296
    %2016 = vmatprep.subr.mxu0 %v289
    %2017 = vmatpush2.msra.mxu0 %v288
    %2018 = vmatprep.subr.mxu0 %v281
    %2019 = vmatpush2.msra.mxu0 %v280
    %2020 = vmatprep.subr.mxu0 %v273
    %2021 = vmatpush2.msra.mxu0 %v272
    %2022 = vmatprep.subr.mxu0 %v265
    %2023 = vmatpush2.msra.mxu0 %v264
    %2024 = vmatprep.subr.mxu0 %v257
    %2025 = vmatpush2.msra.mxu0 %v256
    %2026 = vmatprep.subr.mxu0 %v249
    %2027 = vmatpush2.msra.mxu0 %v248
    %2028 = vmatprep.subr.mxu0 %v241
    %2029 = vmatpush2.msra.mxu0 %v240
    %2030 = vmatprep.subr.mxu0 %v233
    %2031 = vmatpush2.msra.mxu0 %v232
    %2032 = vmatprep.subr.mxu0 %v225
    %2033 = vmatpush2.msra.mxu0 %v224
    %2034 = vmatprep.subr.mxu0 %v217
    %2035 = vmatpush2.msra.mxu0 %v216
    %2036 = vmatprep.subr.mxu0 %v209
    %2037 = vmatpush2.msra.mxu0 %v208
    %2038 = vmatprep.subr.mxu0 %v201
    %2039 = vmatpush2.msra.mxu0 %v200
    %2040 = vmatprep.subr.mxu0 %v193
    %2041 = vmatpush2.msra.mxu0 %v192
    %2042 = vmatprep.mubr.f32.mxu0 %v1099
    %2043 = vmatmul.mubr.f32.gmra.mxu0 %v1091
    %v2044 = vpop.f32.mrf.mxu0
    %v2045 = vadd.f32 0.0, %v2044
    %v2046 = vpop.f32.mrf.mxu0
    %v2047 = vadd.f32 0.0, %v2046
    %2048 = vdwg.mxu0
    %2049 = vmatprep.subr.mxu0 %v441
    %2050 = vmatpush1.msra.mxu0 %v440
    %2051 = vmatprep.subr.mxu0 %v433
    %2052 = vmatpush1.msra.mxu0 %v432
    %2053 = vmatprep.subr.mxu0 %v425
    %2054 = vmatpush1.msra.mxu0 %v424
    %2055 = vmatprep.subr.mxu0 %v417
    %2056 = vmatpush1.msra.mxu0 %v416
    %2057 = vmatprep.subr.mxu0 %v409
    %2058 = vmatpush1.msra.mxu0 %v408
    %2059 = vmatprep.subr.mxu0 %v401
    %2060 = vmatpush1.msra.mxu0 %v400
    %2061 = vmatprep.subr.mxu0 %v393
    %2062 = vmatpush1.msra.mxu0 %v392
    %2063 = vmatprep.subr.mxu0 %v385
    %2064 = vmatpush1.msra.mxu0 %v384
    %2065 = vmatprep.subr.mxu0 %v377
    %2066 = vmatpush1.msra.mxu0 %v376
    %2067 = vmatprep.subr.mxu0 %v369
    %2068 = vmatpush1.msra.mxu0 %v368
    %2069 = vmatprep.subr.mxu0 %v361
    %2070 = vmatpush1.msra.mxu0 %v360
    %2071 = vmatprep.subr.mxu0 %v353
    %2072 = vmatpush1.msra.mxu0 %v352
    %2073 = vmatprep.subr.mxu0 %v345
    %2074 = vmatpush1.msra.mxu0 %v344
    %2075 = vmatprep.subr.mxu0 %v337
    %2076 = vmatpush1.msra.mxu0 %v336
    %2077 = vmatprep.subr.mxu0 %v329
    %2078 = vmatpush1.msra.mxu0 %v328
    %2079 = vmatprep.subr.mxu0 %v321
    %2080 = vmatpush1.msra.mxu0 %v320
    %2081 = vmatprep.subr.mxu0 %v569
    %2082 = vmatpush2.msra.mxu0 %v568
    %2083 = vmatprep.subr.mxu0 %v561
    %2084 = vmatpush2.msra.mxu0 %v560
    %2085 = vmatprep.subr.mxu0 %v553
    %2086 = vmatpush2.msra.mxu0 %v552
    %2087 = vmatprep.subr.mxu0 %v545
    %2088 = vmatpush2.msra.mxu0 %v544
    %2089 = vmatprep.subr.mxu0 %v537
    %2090 = vmatpush2.msra.mxu0 %v536
    %2091 = vmatprep.subr.mxu0 %v529
    %2092 = vmatpush2.msra.mxu0 %v528
    %2093 = vmatprep.subr.mxu0 %v521
    %2094 = vmatpush2.msra.mxu0 %v520
    %2095 = vmatprep.subr.mxu0 %v513
    %2096 = vmatpush2.msra.mxu0 %v512
    %2097 = vmatprep.subr.mxu0 %v505
    %2098 = vmatpush2.msra.mxu0 %v504
    %2099 = vmatprep.subr.mxu0 %v497
    %2100 = vmatpush2.msra.mxu0 %v496
    %2101 = vmatprep.subr.mxu0 %v489
    %2102 = vmatpush2.msra.mxu0 %v488
    %2103 = vmatprep.subr.mxu0 %v481
    %2104 = vmatpush2.msra.mxu0 %v480
    %2105 = vmatprep.subr.mxu0 %v473
    %2106 = vmatpush2.msra.mxu0 %v472
    %2107 = vmatprep.subr.mxu0 %v465
    %2108 = vmatpush2.msra.mxu0 %v464
    %2109 = vmatprep.subr.mxu0 %v457
    %2110 = vmatpush2.msra.mxu0 %v456
    %2111 = vmatprep.subr.mxu0 %v449
    %2112 = vmatpush2.msra.mxu0 %v448
    %2113 = vmatprep.mubr.f32.mxu0 %v1100
    %2114 = vmatmul.mubr.f32.gmra.mxu0 %v1098
    %v2115 = vpop.f32.mrf.mxu0
    %v2116 = vadd.f32 %v2045, %v2115
    %v2117 = vpop.f32.mrf.mxu0
    %v2118 = vadd.f32 %v2047, %v2117
    %2119 = vdwg.mxu0
    %2120 = vmatprep.subr.mxu0 %v697
    %2121 = vmatpush1.msra.mxu0 %v696
    %2122 = vmatprep.subr.mxu0 %v689
    %2123 = vmatpush1.msra.mxu0 %v688
    %2124 = vmatprep.subr.mxu0 %v681
    %2125 = vmatpush1.msra.mxu0 %v680
    %2126 = vmatprep.subr.mxu0 %v673
    %2127 = vmatpush1.msra.mxu0 %v672
    %2128 = vmatprep.subr.mxu0 %v665
    %2129 = vmatpush1.msra.mxu0 %v664
    %2130 = vmatprep.subr.mxu0 %v657
    %2131 = vmatpush1.msra.mxu0 %v656
    %2132 = vmatprep.subr.mxu0 %v649
    %2133 = vmatpush1.msra.mxu0 %v648
    %2134 = vmatprep.subr.mxu0 %v641
    %2135 = vmatpush1.msra.mxu0 %v640
    %2136 = vmatprep.subr.mxu0 %v633
    %2137 = vmatpush1.msra.mxu0 %v632
    %2138 = vmatprep.subr.mxu0 %v625
    %2139 = vmatpush1.msra.mxu0 %v624
    %2140 = vmatprep.subr.mxu0 %v617
    %2141 = vmatpush1.msra.mxu0 %v616
    %2142 = vmatprep.subr.mxu0 %v609
    %2143 = vmatpush1.msra.mxu0 %v608
    %2144 = vmatprep.subr.mxu0 %v601
    %2145 = vmatpush1.msra.mxu0 %v600
    %2146 = vmatprep.subr.mxu0 %v593
    %2147 = vmatpush1.msra.mxu0 %v592
    %2148 = vmatprep.subr.mxu0 %v585
    %2149 = vmatpush1.msra.mxu0 %v584
    %2150 = vmatprep.subr.mxu0 %v577
    %2151 = vmatpush1.msra.mxu0 %v576
    %2152 = vmatprep.subr.mxu0 %v825
    %2153 = vmatpush2.msra.mxu0 %v824
    %2154 = vmatprep.subr.mxu0 %v817
    %2155 = vmatpush2.msra.mxu0 %v816
    %2156 = vmatprep.subr.mxu0 %v809
    %2157 = vmatpush2.msra.mxu0 %v808
    %2158 = vmatprep.subr.mxu0 %v801
    %2159 = vmatpush2.msra.mxu0 %v800
    %2160 = vmatprep.subr.mxu0 %v793
    %2161 = vmatpush2.msra.mxu0 %v792
    %2162 = vmatprep.subr.mxu0 %v785
    %2163 = vmatpush2.msra.mxu0 %v784
    %2164 = vmatprep.subr.mxu0 %v777
    %2165 = vmatpush2.msra.mxu0 %v776
    %2166 = vmatprep.subr.mxu0 %v769
    %2167 = vmatpush2.msra.mxu0 %v768
    %2168 = vmatprep.subr.mxu0 %v761
    %2169 = vmatpush2.msra.mxu0 %v760
    %2170 = vmatprep.subr.mxu0 %v753
    %2171 = vmatpush2.msra.mxu0 %v752
    %2172 = vmatprep.subr.mxu0 %v745
    %2173 = vmatpush2.msra.mxu0 %v744
    %2174 = vmatprep.subr.mxu0 %v737
    %2175 = vmatpush2.msra.mxu0 %v736
    %2176 = vmatprep.subr.mxu0 %v729
    %2177 = vmatpush2.msra.mxu0 %v728
    %2178 = vmatprep.subr.mxu0 %v721
    %2179 = vmatpush2.msra.mxu0 %v720
    %2180 = vmatprep.subr.mxu0 %v713
    %2181 = vmatpush2.msra.mxu0 %v712
    %2182 = vmatprep.subr.mxu0 %v705
    %2183 = vmatpush2.msra.mxu0 %v704
    %2184 = vmatprep.mubr.f32.mxu0 %v1116
    %2185 = vmatmul.mubr.f32.gmra.mxu0 %v1108
    %v2186 = vpop.f32.mrf.mxu0
    %v2187 = vadd.f32 %v2116, %v2186
    %v2188 = vpop.f32.mrf.mxu0
    %v2189 = vadd.f32 %v2118, %v2188
    %2190 = vdwg.mxu0
    %2191 = vmatprep.subr.mxu0 %v953
    %2192 = vmatpush1.msra.mxu0 %v952
    %2193 = vmatprep.subr.mxu0 %v945
    %2194 = vmatpush1.msra.mxu0 %v944
    %2195 = vmatprep.subr.mxu0 %v937
    %2196 = vmatpush1.msra.mxu0 %v936
    %2197 = vmatprep.subr.mxu0 %v929
    %2198 = vmatpush1.msra.mxu0 %v928
    %2199 = vmatprep.subr.mxu0 %v921
    %2200 = vmatpush1.msra.mxu0 %v920
    %2201 = vmatprep.subr.mxu0 %v913
    %2202 = vmatpush1.msra.mxu0 %v912
    %2203 = vmatprep.subr.mxu0 %v905
    %2204 = vmatpush1.msra.mxu0 %v904
    %2205 = vmatprep.subr.mxu0 %v897
    %2206 = vmatpush1.msra.mxu0 %v896
    %2207 = vmatprep.subr.mxu0 %v889
    %2208 = vmatpush1.msra.mxu0 %v888
    %2209 = vmatprep.subr.mxu0 %v881
    %2210 = vmatpush1.msra.mxu0 %v880
    %2211 = vmatprep.subr.mxu0 %v873
    %2212 = vmatpush1.msra.mxu0 %v872
    %2213 = vmatprep.subr.mxu0 %v865
    %2214 = vmatpush1.msra.mxu0 %v864
    %2215 = vmatprep.subr.mxu0 %v857
    %2216 = vmatpush1.msra.mxu0 %v856
    %2217 = vmatprep.subr.mxu0 %v849
    %2218 = vmatpush1.msra.mxu0 %v848
    %2219 = vmatprep.subr.mxu0 %v841
    %2220 = vmatpush1.msra.mxu0 %v840
    %2221 = vmatprep.subr.mxu0 %v833
    %2222 = vmatpush1.msra.mxu0 %v832
    %2223 = vmatprep.subr.mxu0 %v1081
    %2224 = vmatpush2.msra.mxu0 %v1080
    %2225 = vmatprep.subr.mxu0 %v1073
    %2226 = vmatpush2.msra.mxu0 %v1072
    %2227 = vmatprep.subr.mxu0 %v1065
    %2228 = vmatpush2.msra.mxu0 %v1064
    %2229 = vmatprep.subr.mxu0 %v1057
    %2230 = vmatpush2.msra.mxu0 %v1056
    %2231 = vmatprep.subr.mxu0 %v1049
    %2232 = vmatpush2.msra.mxu0 %v1048
    %2233 = vmatprep.subr.mxu0 %v1041
    %2234 = vmatpush2.msra.mxu0 %v1040
    %2235 = vmatprep.subr.mxu0 %v1033
    %2236 = vmatpush2.msra.mxu0 %v1032
    %2237 = vmatprep.subr.mxu0 %v1025
    %2238 = vmatpush2.msra.mxu0 %v1024
    %2239 = vmatprep.subr.mxu0 %v1017
    %2240 = vmatpush2.msra.mxu0 %v1016
    %2241 = vmatprep.subr.mxu0 %v1009
    %2242 = vmatpush2.msra.mxu0 %v1008
    %2243 = vmatprep.subr.mxu0 %v1001
    %2244 = vmatpush2.msra.mxu0 %v1000
    %2245 = vmatprep.subr.mxu0 %v993
    %2246 = vmatpush2.msra.mxu0 %v992
    %2247 = vmatprep.subr.mxu0 %v985
    %2248 = vmatpush2.msra.mxu0 %v984
    %2249 = vmatprep.subr.mxu0 %v977
    %2250 = vmatpush2.msra.mxu0 %v976
    %2251 = vmatprep.subr.mxu0 %v969
    %2252 = vmatpush2.msra.mxu0 %v968
    %2253 = vmatprep.subr.mxu0 %v961
    %2254 = vmatpush2.msra.mxu0 %v960
    %2255 = vmatprep.mubr.f32.mxu0 %v1117
    %2256 = vmatmul.mubr.f32.gmra.mxu0 %v1115
    %v2257 = vpop.f32.mrf.mxu0
    %v2258 = vadd.f32 %v2187, %v2257
    %v2259 = vpop.f32.mrf.mxu0
    %v2260 = vadd.f32 %v2189, %v2259
    %2261 = vdwg.mxu0
    %vm2262 = vcmask 1041408
    %v2263 = vsel %vm2262, %v1406, 0.0
    %v2264 = vsel %vm2262, %v1408, 0.0
    %v2265 = vadd.f32 %v2263, %v2264
    %v2266 = vsel %vm2262, %v1690, 0.0
    %v2267 = vadd.f32 %v2265, %v2266
    %v2268 = vsel %vm2262, %v1692, 0.0
    %v2269 = vadd.f32 %v2267, %v2268
    %2270 = vadd.xlane.f32.xlu0 %v2269
    %v2271 = vpop.xlane.xlu0 %2270
    %v2272 = vmul.f32 %v1406, %v1406
    %v2273 = vmul.f32 %v1408, %v1408
    %v2274 = vmul.f32 %v1690, %v1690
    %v2275 = vmul.f32 %v1692, %v1692
    %v2276 = vsel %vm2262, %v2272, 0.0
    %v2277 = vsel %vm2262, %v2273, 0.0
    %v2278 = vadd.f32 %v2276, %v2277
    %v2279 = vsel %vm2262, %v2274, 0.0
    %v2280 = vadd.f32 %v2278, %v2279
    %v2281 = vsel %vm2262, %v2275, 0.0
    %v2282 = vadd.f32 %v2280, %v2281
    %2283 = vadd.xlane.f32.xlu0 %v2282
    %v2284 = vpop.xlane.xlu0 %2283
    %v2285 = vmul.f32 %v2271, 0.001953125
    %v2286 = vmul.f32 %v2284, 0.001953125
    %v2287 = vmul.f32 %v2285, %v2285
    %v2288 = vsub.f32 %v2286, %v2287
    %v2289 = vadd.f32 %v2288, 0.0001
    %v2290 = vrsqrt.pop %v2289
    %s2291 = sld [smem:[#allocation7]]
    %v2292 = vstv %s2291
    %v2293 = vmul.f32 %v2290, %v2292
    %s2294 = sld [smem:[#allocation7 + $0x80]]
    %v2295 = vmul.f32 %v2285, %v2293
    %v2296 = vstv %s2294
    %v2297 = vsub.f32 %v2296, %v2295
    %v2298 = vmul.f32 %v1406, %v2293
    %v2299 = vmul.f32 %v1408, %v2293
    %v2300 = vadd.f32 %v2298, %v2297
    %v2301 = vadd.f32 %v2299, %v2297
    %v2302 = vmax.f32 %v2300, 0.0
    %v2303 = vmax.f32 %v2301, 0.0
    %s2304 = sld [smem:[#allocation7 + $0x1]]
    %v2305 = vstv %s2304
    %v2306 = vmul.f32 %v2290, %v2305
    %s2307 = sld [smem:[#allocation7 + $0x81]]
    %v2308 = vmul.f32 %v2285, %v2306
    %v2309 = vstv %s2307
    %v2310 = vsub.f32 %v2309, %v2308
    %v2311 = vmul.f32 %v1690, %v2306
    %v2312 = vmul.f32 %v1692, %v2306
    %v2313 = vadd.f32 %v2311, %v2310
    %v2314 = vadd.f32 %v2312, %v2310
    %v2315 = vmax.f32 %v2313, 0.0
    %v2316 = vmax.f32 %v2314, 0.0
    %v2317 = vsel %vm2262, %v1974, 0.0
    %v2318 = vsel %vm2262, %v1976, 0.0
    %v2319 = vadd.f32 %v2317, %v2318
    %v2320 = vsel %vm2262, %v2258, 0.0
    %v2321 = vadd.f32 %v2319, %v2320
    %v2322 = vsel %vm2262, %v2260, 0.0
    %v2323 = vadd.f32 %v2321, %v2322
    %2324 = vadd.xlane.f32.xlu0 %v2323
    %v2325 = vpop.xlane.xlu0 %2324
    %v2326 = vmul.f32 %v1974, %v1974
    %v2327 = vmul.f32 %v1976, %v1976
    %v2328 = vmul.f32 %v2258, %v2258
    %v2329 = vmul.f32 %v2260, %v2260
    %v2330 = vsel %vm2262, %v2326, 0.0
    %v2331 = vsel %vm2262, %v2327, 0.0
    %v2332 = vadd.f32 %v2330, %v2331
    %v2333 = vsel %vm2262, %v2328, 0.0
    %v2334 = vadd.f32 %v2332, %v2333
    %v2335 = vsel %vm2262, %v2329, 0.0
    %v2336 = vadd.f32 %v2334, %v2335
    %2337 = vadd.xlane.f32.xlu0 %v2336
    %v2338 = vpop.xlane.xlu0 %2337
    %v2339 = vmul.f32 %v2325, 0.001953125
    %v2340 = vmul.f32 %v2338, 0.001953125
    %v2341 = vmul.f32 %v2339, %v2339
    %v2342 = vsub.f32 %v2340, %v2341
    %v2343 = vadd.f32 %v2342, 0.0001
    %v2344 = vrsqrt.pop %v2343
    %s2345 = sld [smem:[#allocation7 + $0x2]]
    %v2346 = vstv %s2345
    %v2347 = vmul.f32 %v2344, %v2346
    %s2348 = sld [smem:[#allocation7 + $0x82]]
    %v2349 = vmul.f32 %v2339, %v2347
    %v2350 = vstv %s2348
    %v2351 = vsub.f32 %v2350, %v2349
    %v2352 = vmul.f32 %v1974, %v2347
    %v2353 = vmul.f32 %v1976, %v2347
    %v2354 = vadd.f32 %v2352, %v2351
    %v2355 = vadd.f32 %v2353, %v2351
    %v2356 = vmax.f32 %v2354, 0.0
    %v2357 = vmax.f32 %v2355, 0.0
    %s2358 = sld [smem:[#allocation7 + $0x3]]
    %v2359 = vstv %s2358
    %v2360 = vmul.f32 %v2344, %v2359
    %s2361 = sld [smem:[#allocation7 + $0x83]]
    %v2362 = vmul.f32 %v2339, %v2360
    %v2363 = vstv %s2361
    %v2364 = vsub.f32 %v2363, %v2362
    %v2365 = vmul.f32 %v2258, %v2360
    %v2366 = vmul.f32 %v2260, %v2360
    %v2367 = vadd.f32 %v2365, %v2364
    %v2368 = vadd.f32 %v2366, %v2364
    %v2369 = vmax.f32 %v2367, 0.0
    %v2370 = vmax.f32 %v2368, 0.0
    %v2371 = vld [vmem:[#allocation5] sm:$0xff]
    %v2372 = vld [vmem:[#allocation5 + $0x8] sm:$0xff]
    %v2373 = vld [vmem:[#allocation5 + $0x10] sm:$0xff]
    %v2374 = vld [vmem:[#allocation5 + $0x18] sm:$0xff]
    %v2375 = vld [vmem:[#allocation5 + $0x20] sm:$0xff]
    %v2376 = vld [vmem:[#allocation5 + $0x28] sm:$0xff]
    %v2377 = vld [vmem:[#allocation5 + $0x30] sm:$0xff]
    %v2378 = vld [vmem:[#allocation5 + $0x38] sm:$0xff]
    %v2379 = vld [vmem:[#allocation5 + $0x40] sm:$0xff]
    %v2380 = vld [vmem:[#allocation5 + $0x48] sm:$0xff]
    %v2381 = vld [vmem:[#allocation5 + $0x50] sm:$0xff]
    %v2382 = vld [vmem:[#allocation5 + $0x58] sm:$0xff]
    %v2383 = vld [vmem:[#allocation5 + $0x60] sm:$0xff]
    %v2384 = vld [vmem:[#allocation5 + $0x68] sm:$0xff]
    %v2385 = vld [vmem:[#allocation5 + $0x70] sm:$0xff]
    %v2386 = vld [vmem:[#allocation5 + $0x78] sm:$0xff]
    %v2387 = vld [vmem:[#allocation5 + $0x80] sm:$0xff]
    %v2388 = vld [vmem:[#allocation5 + $0x88] sm:$0xff]
    %v2389 = vld [vmem:[#allocation5 + $0x90] sm:$0xff]
    %v2390 = vld [vmem:[#allocation5 + $0x98] sm:$0xff]
    %v2391 = vld [vmem:[#allocation5 + $0xa0] sm:$0xff]
    %v2392 = vld [vmem:[#allocation5 + $0xa8] sm:$0xff]
    %v2393 = vld [vmem:[#allocation5 + $0xb0] sm:$0xff]
    %v2394 = vld [vmem:[#allocation5 + $0xb8] sm:$0xff]
    %v2395 = vld [vmem:[#allocation5 + $0xc0] sm:$0xff]
    %v2396 = vld [vmem:[#allocation5 + $0xc8] sm:$0xff]
    %v2397 = vld [vmem:[#allocation5 + $0xd0] sm:$0xff]
    %v2398 = vld [vmem:[#allocation5 + $0xd8] sm:$0xff]
    %v2399 = vld [vmem:[#allocation5 + $0xe0] sm:$0xff]
    %v2400 = vld [vmem:[#allocation5 + $0xe8] sm:$0xff]
    %v2401 = vld [vmem:[#allocation5 + $0xf0] sm:$0xff]
    %v2402 = vld [vmem:[#allocation5 + $0xf8] sm:$0xff]
    %v2403 = vld [vmem:[#allocation5 + $0x100] sm:$0xff]
    %v2404 = vld [vmem:[#allocation5 + $0x108] sm:$0xff]
    %v2405 = vld [vmem:[#allocation5 + $0x110] sm:$0xff]
    %v2406 = vld [vmem:[#allocation5 + $0x118] sm:$0xff]
    %v2407 = vld [vmem:[#allocation5 + $0x120] sm:$0xff]
    %v2408 = vld [vmem:[#allocation5 + $0x128] sm:$0xff]
    %v2409 = vld [vmem:[#allocation5 + $0x130] sm:$0xff]
    %v2410 = vld [vmem:[#allocation5 + $0x138] sm:$0xff]
    %v2411 = vld [vmem:[#allocation5 + $0x140] sm:$0xff]
    %v2412 = vld [vmem:[#allocation5 + $0x148] sm:$0xff]
    %v2413 = vld [vmem:[#allocation5 + $0x150] sm:$0xff]
    %v2414 = vld [vmem:[#allocation5 + $0x158] sm:$0xff]
    %v2415 = vld [vmem:[#allocation5 + $0x160] sm:$0xff]
    %v2416 = vld [vmem:[#allocation5 + $0x168] sm:$0xff]
    %v2417 = vld [vmem:[#allocation5 + $0x170] sm:$0xff]
    %v2418 = vld [vmem:[#allocation5 + $0x178] sm:$0xff]
    %v2419 = vld [vmem:[#allocation5 + $0x180] sm:$0xff]
    %v2420 = vld [vmem:[#allocation5 + $0x188] sm:$0xff]
    %v2421 = vld [vmem:[#allocation5 + $0x190] sm:$0xff]
    %v2422 = vld [vmem:[#allocation5 + $0x198] sm:$0xff]
    %v2423 = vld [vmem:[#allocation5 + $0x1a0] sm:$0xff]
    %v2424 = vld [vmem:[#allocation5 + $0x1a8] sm:$0xff]
    %v2425 = vld [vmem:[#allocation5 + $0x1b0] sm:$0xff]
    %v2426 = vld [vmem:[#allocation5 + $0x1b8] sm:$0xff]
    %v2427 = vld [vmem:[#allocation5 + $0x1c0] sm:$0xff]
    %v2428 = vld [vmem:[#allocation5 + $0x1c8] sm:$0xff]
    %v2429 = vld [vmem:[#allocation5 + $0x1d0] sm:$0xff]
    %v2430 = vld [vmem:[#allocation5 + $0x1d8] sm:$0xff]
    %v2431 = vld [vmem:[#allocation5 + $0x1e0] sm:$0xff]
    %v2432 = vld [vmem:[#allocation5 + $0x1e8] sm:$0xff]
    %v2433 = vld [vmem:[#allocation5 + $0x1f0] sm:$0xff]
    %v2434 = vld [vmem:[#allocation5 + $0x1f8] sm:$0xff]
    %v2435 = vld [vmem:[#allocation5 + $0x200] sm:$0xff]
    %v2436 = vld [vmem:[#allocation5 + $0x208] sm:$0xff]
    %v2437 = vld [vmem:[#allocation5 + $0x210] sm:$0xff]
    %v2438 = vld [vmem:[#allocation5 + $0x218] sm:$0xff]
    %v2439 = vld [vmem:[#allocation5 + $0x220] sm:$0xff]
    %v2440 = vld [vmem:[#allocation5 + $0x228] sm:$0xff]
    %v2441 = vld [vmem:[#allocation5 + $0x230] sm:$0xff]
    %v2442 = vld [vmem:[#allocation5 + $0x238] sm:$0xff]
    %v2443 = vld [vmem:[#allocation5 + $0x240] sm:$0xff]
    %v2444 = vld [vmem:[#allocation5 + $0x248] sm:$0xff]
    %v2445 = vld [vmem:[#allocation5 + $0x250] sm:$0xff]
    %v2446 = vld [vmem:[#allocation5 + $0x258] sm:$0xff]
    %v2447 = vld [vmem:[#allocation5 + $0x260] sm:$0xff]
    %v2448 = vld [vmem:[#allocation5 + $0x268] sm:$0xff]
    %v2449 = vld [vmem:[#allocation5 + $0x270] sm:$0xff]
    %v2450 = vld [vmem:[#allocation5 + $0x278] sm:$0xff]
    %v2451 = vld [vmem:[#allocation5 + $0x280] sm:$0xff]
    %v2452 = vld [vmem:[#allocation5 + $0x288] sm:$0xff]
    %v2453 = vld [vmem:[#allocation5 + $0x290] sm:$0xff]
    %v2454 = vld [vmem:[#allocation5 + $0x298] sm:$0xff]
    %v2455 = vld [vmem:[#allocation5 + $0x2a0] sm:$0xff]
    %v2456 = vld [vmem:[#allocation5 + $0x2a8] sm:$0xff]
    %v2457 = vld [vmem:[#allocation5 + $0x2b0] sm:$0xff]
    %v2458 = vld [vmem:[#allocation5 + $0x2b8] sm:$0xff]
    %v2459 = vld [vmem:[#allocation5 + $0x2c0] sm:$0xff]
    %v2460 = vld [vmem:[#allocation5 + $0x2c8] sm:$0xff]
    %v2461 = vld [vmem:[#allocation5 + $0x2d0] sm:$0xff]
    %v2462 = vld [vmem:[#allocation5 + $0x2d8] sm:$0xff]
    %v2463 = vld [vmem:[#allocation5 + $0x2e0] sm:$0xff]
    %v2464 = vld [vmem:[#allocation5 + $0x2e8] sm:$0xff]
    %v2465 = vld [vmem:[#allocation5 + $0x2f0] sm:$0xff]
    %v2466 = vld [vmem:[#allocation5 + $0x2f8] sm:$0xff]
    %v2467 = vld [vmem:[#allocation5 + $0x300] sm:$0xff]
    %v2468 = vld [vmem:[#allocation5 + $0x308] sm:$0xff]
    %v2469 = vld [vmem:[#allocation5 + $0x310] sm:$0xff]
    %v2470 = vld [vmem:[#allocation5 + $0x318] sm:$0xff]
    %v2471 = vld [vmem:[#allocation5 + $0x320] sm:$0xff]
    %v2472 = vld [vmem:[#allocation5 + $0x328] sm:$0xff]
    %v2473 = vld [vmem:[#allocation5 + $0x330] sm:$0xff]
    %v2474 = vld [vmem:[#allocation5 + $0x338] sm:$0xff]
    %v2475 = vld [vmem:[#allocation5 + $0x340] sm:$0xff]
    %v2476 = vld [vmem:[#allocation5 + $0x348] sm:$0xff]
    %v2477 = vld [vmem:[#allocation5 + $0x350] sm:$0xff]
    %v2478 = vld [vmem:[#allocation5 + $0x358] sm:$0xff]
    %v2479 = vld [vmem:[#allocation5 + $0x360] sm:$0xff]
    %v2480 = vld [vmem:[#allocation5 + $0x368] sm:$0xff]
    %v2481 = vld [vmem:[#allocation5 + $0x370] sm:$0xff]
    %v2482 = vld [vmem:[#allocation5 + $0x378] sm:$0xff]
    %v2483 = vld [vmem:[#allocation5 + $0x380] sm:$0xff]
    %v2484 = vld [vmem:[#allocation5 + $0x388] sm:$0xff]
    %v2485 = vld [vmem:[#allocation5 + $0x390] sm:$0xff]
    %v2486 = vld [vmem:[#allocation5 + $0x398] sm:$0xff]
    %v2487 = vld [vmem:[#allocation5 + $0x3a0] sm:$0xff]
    %v2488 = vld [vmem:[#allocation5 + $0x3a8] sm:$0xff]
    %v2489 = vld [vmem:[#allocation5 + $0x3b0] sm:$0xff]
    %v2490 = vld [vmem:[#allocation5 + $0x3b8] sm:$0xff]
    %v2491 = vld [vmem:[#allocation5 + $0x3c0] sm:$0xff]
    %v2492 = vld [vmem:[#allocation5 + $0x3c8] sm:$0xff]
    %v2493 = vld [vmem:[#allocation5 + $0x3d0] sm:$0xff]
    %v2494 = vld [vmem:[#allocation5 + $0x3d8] sm:$0xff]
    %v2495 = vld [vmem:[#allocation5 + $0x3e0] sm:$0xff]
    %v2496 = vld [vmem:[#allocation5 + $0x3e8] sm:$0xff]
    %v2497 = vld [vmem:[#allocation5 + $0x3f0] sm:$0xff]
    %v2498 = vld [vmem:[#allocation5 + $0x3f8] sm:$0xff]
    %v2499 = vld [vmem:[#allocation5 + $0x400] sm:$0xff]
    %v2500 = vld [vmem:[#allocation5 + $0x408] sm:$0xff]
    %v2501 = vld [vmem:[#allocation5 + $0x410] sm:$0xff]
    %v2502 = vld [vmem:[#allocation5 + $0x418] sm:$0xff]
    %v2503 = vld [vmem:[#allocation5 + $0x420] sm:$0xff]
    %v2504 = vld [vmem:[#allocation5 + $0x428] sm:$0xff]
    %v2505 = vld [vmem:[#allocation5 + $0x430] sm:$0xff]
    %v2506 = vld [vmem:[#allocation5 + $0x438] sm:$0xff]
    %v2507 = vld [vmem:[#allocation5 + $0x440] sm:$0xff]
    %v2508 = vld [vmem:[#allocation5 + $0x448] sm:$0xff]
    %v2509 = vld [vmem:[#allocation5 + $0x450] sm:$0xff]
    %v2510 = vld [vmem:[#allocation5 + $0x458] sm:$0xff]
    %v2511 = vld [vmem:[#allocation5 + $0x460] sm:$0xff]
    %v2512 = vld [vmem:[#allocation5 + $0x468] sm:$0xff]
    %v2513 = vld [vmem:[#allocation5 + $0x470] sm:$0xff]
    %v2514 = vld [vmem:[#allocation5 + $0x478] sm:$0xff]
    %v2515 = vld [vmem:[#allocation5 + $0x480] sm:$0xff]
    %v2516 = vld [vmem:[#allocation5 + $0x488] sm:$0xff]
    %v2517 = vld [vmem:[#allocation5 + $0x490] sm:$0xff]
    %v2518 = vld [vmem:[#allocation5 + $0x498] sm:$0xff]
    %v2519 = vld [vmem:[#allocation5 + $0x4a0] sm:$0xff]
    %v2520 = vld [vmem:[#allocation5 + $0x4a8] sm:$0xff]
    %v2521 = vld [vmem:[#allocation5 + $0x4b0] sm:$0xff]
    %v2522 = vld [vmem:[#allocation5 + $0x4b8] sm:$0xff]
    %v2523 = vld [vmem:[#allocation5 + $0x4c0] sm:$0xff]
    %v2524 = vld [vmem:[#allocation5 + $0x4c8] sm:$0xff]
    %v2525 = vld [vmem:[#allocation5 + $0x4d0] sm:$0xff]
    %v2526 = vld [vmem:[#allocation5 + $0x4d8] sm:$0xff]
    %v2527 = vld [vmem:[#allocation5 + $0x4e0] sm:$0xff]
    %v2528 = vld [vmem:[#allocation5 + $0x4e8] sm:$0xff]
    %v2529 = vld [vmem:[#allocation5 + $0x4f0] sm:$0xff]
    %v2530 = vld [vmem:[#allocation5 + $0x4f8] sm:$0xff]
    %v2531 = vld [vmem:[#allocation5 + $0x500] sm:$0xff]
    %v2532 = vld [vmem:[#allocation5 + $0x508] sm:$0xff]
    %v2533 = vld [vmem:[#allocation5 + $0x510] sm:$0xff]
    %v2534 = vld [vmem:[#allocation5 + $0x518] sm:$0xff]
    %v2535 = vld [vmem:[#allocation5 + $0x520] sm:$0xff]
    %v2536 = vld [vmem:[#allocation5 + $0x528] sm:$0xff]
    %v2537 = vld [vmem:[#allocation5 + $0x530] sm:$0xff]
    %v2538 = vld [vmem:[#allocation5 + $0x538] sm:$0xff]
    %v2539 = vld [vmem:[#allocation5 + $0x540] sm:$0xff]
    %v2540 = vld [vmem:[#allocation5 + $0x548] sm:$0xff]
    %v2541 = vld [vmem:[#allocation5 + $0x550] sm:$0xff]
    %v2542 = vld [vmem:[#allocation5 + $0x558] sm:$0xff]
    %v2543 = vld [vmem:[#allocation5 + $0x560] sm:$0xff]
    %v2544 = vld [vmem:[#allocation5 + $0x568] sm:$0xff]
    %v2545 = vld [vmem:[#allocation5 + $0x570] sm:$0xff]
    %v2546 = vld [vmem:[#allocation5 + $0x578] sm:$0xff]
    %v2547 = vld [vmem:[#allocation5 + $0x580] sm:$0xff]
    %v2548 = vld [vmem:[#allocation5 + $0x588] sm:$0xff]
    %v2549 = vld [vmem:[#allocation5 + $0x590] sm:$0xff]
    %v2550 = vld [vmem:[#allocation5 + $0x598] sm:$0xff]
    %v2551 = vld [vmem:[#allocation5 + $0x5a0] sm:$0xff]
    %v2552 = vld [vmem:[#allocation5 + $0x5a8] sm:$0xff]
    %v2553 = vld [vmem:[#allocation5 + $0x5b0] sm:$0xff]
    %v2554 = vld [vmem:[#allocation5 + $0x5b8] sm:$0xff]
    %v2555 = vld [vmem:[#allocation5 + $0x5c0] sm:$0xff]
    %v2556 = vld [vmem:[#allocation5 + $0x5c8] sm:$0xff]
    %v2557 = vld [vmem:[#allocation5 + $0x5d0] sm:$0xff]
    %v2558 = vld [vmem:[#allocation5 + $0x5d8] sm:$0xff]
    %v2559 = vld [vmem:[#allocation5 + $0x5e0] sm:$0xff]
    %v2560 = vld [vmem:[#allocation5 + $0x5e8] sm:$0xff]
    %v2561 = vld [vmem:[#allocation5 + $0x5f0] sm:$0xff]
    %v2562 = vld [vmem:[#allocation5 + $0x5f8] sm:$0xff]
    %v2563 = vld [vmem:[#allocation5 + $0x600] sm:$0xff]
    %v2564 = vld [vmem:[#allocation5 + $0x608] sm:$0xff]
    %v2565 = vld [vmem:[#allocation5 + $0x610] sm:$0xff]
    %v2566 = vld [vmem:[#allocation5 + $0x618] sm:$0xff]
    %v2567 = vld [vmem:[#allocation5 + $0x620] sm:$0xff]
    %v2568 = vld [vmem:[#allocation5 + $0x628] sm:$0xff]
    %v2569 = vld [vmem:[#allocation5 + $0x630] sm:$0xff]
    %v2570 = vld [vmem:[#allocation5 + $0x638] sm:$0xff]
    %v2571 = vld [vmem:[#allocation5 + $0x640] sm:$0xff]
    %v2572 = vld [vmem:[#allocation5 + $0x648] sm:$0xff]
    %v2573 = vld [vmem:[#allocation5 + $0x650] sm:$0xff]
    %v2574 = vld [vmem:[#allocation5 + $0x658] sm:$0xff]
    %v2575 = vld [vmem:[#allocation5 + $0x660] sm:$0xff]
    %v2576 = vld [vmem:[#allocation5 + $0x668] sm:$0xff]
    %v2577 = vld [vmem:[#allocation5 + $0x670] sm:$0xff]
    %v2578 = vld [vmem:[#allocation5 + $0x678] sm:$0xff]
    %v2579 = vld [vmem:[#allocation5 + $0x680] sm:$0xff]
    %v2580 = vld [vmem:[#allocation5 + $0x688] sm:$0xff]
    %v2581 = vld [vmem:[#allocation5 + $0x690] sm:$0xff]
    %v2582 = vld [vmem:[#allocation5 + $0x698] sm:$0xff]
    %v2583 = vld [vmem:[#allocation5 + $0x6a0] sm:$0xff]
    %v2584 = vld [vmem:[#allocation5 + $0x6a8] sm:$0xff]
    %v2585 = vld [vmem:[#allocation5 + $0x6b0] sm:$0xff]
    %v2586 = vld [vmem:[#allocation5 + $0x6b8] sm:$0xff]
    %v2587 = vld [vmem:[#allocation5 + $0x6c0] sm:$0xff]
    %v2588 = vld [vmem:[#allocation5 + $0x6c8] sm:$0xff]
    %v2589 = vld [vmem:[#allocation5 + $0x6d0] sm:$0xff]
    %v2590 = vld [vmem:[#allocation5 + $0x6d8] sm:$0xff]
    %v2591 = vld [vmem:[#allocation5 + $0x6e0] sm:$0xff]
    %v2592 = vld [vmem:[#allocation5 + $0x6e8] sm:$0xff]
    %v2593 = vld [vmem:[#allocation5 + $0x6f0] sm:$0xff]
    %v2594 = vld [vmem:[#allocation5 + $0x6f8] sm:$0xff]
    %v2595 = vld [vmem:[#allocation5 + $0x700] sm:$0xff]
    %v2596 = vld [vmem:[#allocation5 + $0x708] sm:$0xff]
    %v2597 = vld [vmem:[#allocation5 + $0x710] sm:$0xff]
    %v2598 = vld [vmem:[#allocation5 + $0x718] sm:$0xff]
    %v2599 = vld [vmem:[#allocation5 + $0x720] sm:$0xff]
    %v2600 = vld [vmem:[#allocation5 + $0x728] sm:$0xff]
    %v2601 = vld [vmem:[#allocation5 + $0x730] sm:$0xff]
    %v2602 = vld [vmem:[#allocation5 + $0x738] sm:$0xff]
    %v2603 = vld [vmem:[#allocation5 + $0x740] sm:$0xff]
    %v2604 = vld [vmem:[#allocation5 + $0x748] sm:$0xff]
    %v2605 = vld [vmem:[#allocation5 + $0x750] sm:$0xff]
    %v2606 = vld [vmem:[#allocation5 + $0x758] sm:$0xff]
    %v2607 = vld [vmem:[#allocation5 + $0x760] sm:$0xff]
    %v2608 = vld [vmem:[#allocation5 + $0x768] sm:$0xff]
    %v2609 = vld [vmem:[#allocation5 + $0x770] sm:$0xff]
    %v2610 = vld [vmem:[#allocation5 + $0x778] sm:$0xff]
    %v2611 = vld [vmem:[#allocation5 + $0x780] sm:$0xff]
    %v2612 = vld [vmem:[#allocation5 + $0x788] sm:$0xff]
    %v2613 = vld [vmem:[#allocation5 + $0x790] sm:$0xff]
    %v2614 = vld [vmem:[#allocation5 + $0x798] sm:$0xff]
    %v2615 = vld [vmem:[#allocation5 + $0x7a0] sm:$0xff]
    %v2616 = vld [vmem:[#allocation5 + $0x7a8] sm:$0xff]
    %v2617 = vld [vmem:[#allocation5 + $0x7b0] sm:$0xff]
    %v2618 = vld [vmem:[#allocation5 + $0x7b8] sm:$0xff]
    %v2619 = vld [vmem:[#allocation5 + $0x7c0] sm:$0xff]
    %v2620 = vld [vmem:[#allocation5 + $0x7c8] sm:$0xff]
    %v2621 = vld [vmem:[#allocation5 + $0x7d0] sm:$0xff]
    %v2622 = vld [vmem:[#allocation5 + $0x7d8] sm:$0xff]
    %v2623 = vld [vmem:[#allocation5 + $0x7e0] sm:$0xff]
    %v2624 = vld [vmem:[#allocation5 + $0x7e8] sm:$0xff]
    %v2625 = vld [vmem:[#allocation5 + $0x7f0] sm:$0xff]
    %v2626 = vld [vmem:[#allocation5 + $0x7f8] sm:$0xff]
    %v2627 = vld [vmem:[#allocation5 + $0x800] sm:$0xff]
    %v2628 = vld [vmem:[#allocation5 + $0x808] sm:$0xff]
    %v2629 = vld [vmem:[#allocation5 + $0x810] sm:$0xff]
    %v2630 = vld [vmem:[#allocation5 + $0x818] sm:$0xff]
    %v2631 = vld [vmem:[#allocation5 + $0x820] sm:$0xff]
    %v2632 = vld [vmem:[#allocation5 + $0x828] sm:$0xff]
    %v2633 = vld [vmem:[#allocation5 + $0x830] sm:$0xff]
    %v2634 = vld [vmem:[#allocation5 + $0x838] sm:$0xff]
    %v2635 = vld [vmem:[#allocation5 + $0x840] sm:$0xff]
    %v2636 = vld [vmem:[#allocation5 + $0x848] sm:$0xff]
    %v2637 = vld [vmem:[#allocation5 + $0x850] sm:$0xff]
    %v2638 = vld [vmem:[#allocation5 + $0x858] sm:$0xff]
    %v2639 = vld [vmem:[#allocation5 + $0x860] sm:$0xff]
    %v2640 = vld [vmem:[#allocation5 + $0x868] sm:$0xff]
    %v2641 = vld [vmem:[#allocation5 + $0x870] sm:$0xff]
    %v2642 = vld [vmem:[#allocation5 + $0x878] sm:$0xff]
    %v2643 = vld [vmem:[#allocation5 + $0x880] sm:$0xff]
    %v2644 = vld [vmem:[#allocation5 + $0x888] sm:$0xff]
    %v2645 = vld [vmem:[#allocation5 + $0x890] sm:$0xff]
    %v2646 = vld [vmem:[#allocation5 + $0x898] sm:$0xff]
    %v2647 = vld [vmem:[#allocation5 + $0x8a0] sm:$0xff]
    %v2648 = vld [vmem:[#allocation5 + $0x8a8] sm:$0xff]
    %v2649 = vld [vmem:[#allocation5 + $0x8b0] sm:$0xff]
    %v2650 = vld [vmem:[#allocation5 + $0x8b8] sm:$0xff]
    %v2651 = vld [vmem:[#allocation5 + $0x8c0] sm:$0xff]
    %v2652 = vld [vmem:[#allocation5 + $0x8c8] sm:$0xff]
    %v2653 = vld [vmem:[#allocation5 + $0x8d0] sm:$0xff]
    %v2654 = vld [vmem:[#allocation5 + $0x8d8] sm:$0xff]
    %v2655 = vld [vmem:[#allocation5 + $0x8e0] sm:$0xff]
    %v2656 = vld [vmem:[#allocation5 + $0x8e8] sm:$0xff]
    %v2657 = vld [vmem:[#allocation5 + $0x8f0] sm:$0xff]
    %v2658 = vld [vmem:[#allocation5 + $0x8f8] sm:$0xff]
    %v2659 = vld [vmem:[#allocation5 + $0x900] sm:$0xff]
    %v2660 = vld [vmem:[#allocation5 + $0x908] sm:$0xff]
    %v2661 = vld [vmem:[#allocation5 + $0x910] sm:$0xff]
    %v2662 = vld [vmem:[#allocation5 + $0x918] sm:$0xff]
    %v2663 = vld [vmem:[#allocation5 + $0x920] sm:$0xff]
    %v2664 = vld [vmem:[#allocation5 + $0x928] sm:$0xff]
    %v2665 = vld [vmem:[#allocation5 + $0x930] sm:$0xff]
    %v2666 = vld [vmem:[#allocation5 + $0x938] sm:$0xff]
    %v2667 = vld [vmem:[#allocation5 + $0x940] sm:$0xff]
    %v2668 = vld [vmem:[#allocation5 + $0x948] sm:$0xff]
    %v2669 = vld [vmem:[#allocation5 + $0x950] sm:$0xff]
    %v2670 = vld [vmem:[#allocation5 + $0x958] sm:$0xff]
    %v2671 = vld [vmem:[#allocation5 + $0x960] sm:$0xff]
    %v2672 = vld [vmem:[#allocation5 + $0x968] sm:$0xff]
    %v2673 = vld [vmem:[#allocation5 + $0x970] sm:$0xff]
    %v2674 = vld [vmem:[#allocation5 + $0x978] sm:$0xff]
    %v2675 = vld [vmem:[#allocation5 + $0x980] sm:$0xff]
    %v2676 = vld [vmem:[#allocation5 + $0x988] sm:$0xff]
    %v2677 = vld [vmem:[#allocation5 + $0x990] sm:$0xff]
    %v2678 = vld [vmem:[#allocation5 + $0x998] sm:$0xff]
    %v2679 = vld [vmem:[#allocation5 + $0x9a0] sm:$0xff]
    %v2680 = vld [vmem:[#allocation5 + $0x9a8] sm:$0xff]
    %v2681 = vld [vmem:[#allocation5 + $0x9b0] sm:$0xff]
    %v2682 = vld [vmem:[#allocation5 + $0x9b8] sm:$0xff]
    %v2683 = vld [vmem:[#allocation5 + $0x9c0] sm:$0xff]
    %v2684 = vld [vmem:[#allocation5 + $0x9c8] sm:$0xff]
    %v2685 = vld [vmem:[#allocation5 + $0x9d0] sm:$0xff]
    %v2686 = vld [vmem:[#allocation5 + $0x9d8] sm:$0xff]
    %v2687 = vld [vmem:[#allocation5 + $0x9e0] sm:$0xff]
    %v2688 = vld [vmem:[#allocation5 + $0x9e8] sm:$0xff]
    %v2689 = vld [vmem:[#allocation5 + $0x9f0] sm:$0xff]
    %v2690 = vld [vmem:[#allocation5 + $0x9f8] sm:$0xff]
    %v2691 = vld [vmem:[#allocation5 + $0xa00] sm:$0xff]
    %v2692 = vld [vmem:[#allocation5 + $0xa08] sm:$0xff]
    %v2693 = vld [vmem:[#allocation5 + $0xa10] sm:$0xff]
    %v2694 = vld [vmem:[#allocation5 + $0xa18] sm:$0xff]
    %v2695 = vld [vmem:[#allocation5 + $0xa20] sm:$0xff]
    %v2696 = vld [vmem:[#allocation5 + $0xa28] sm:$0xff]
    %v2697 = vld [vmem:[#allocation5 + $0xa30] sm:$0xff]
    %v2698 = vld [vmem:[#allocation5 + $0xa38] sm:$0xff]
    %v2699 = vld [vmem:[#allocation5 + $0xa40] sm:$0xff]
    %v2700 = vld [vmem:[#allocation5 + $0xa48] sm:$0xff]
    %v2701 = vld [vmem:[#allocation5 + $0xa50] sm:$0xff]
    %v2702 = vld [vmem:[#allocation5 + $0xa58] sm:$0xff]
    %v2703 = vld [vmem:[#allocation5 + $0xa60] sm:$0xff]
    %v2704 = vld [vmem:[#allocation5 + $0xa68] sm:$0xff]
    %v2705 = vld [vmem:[#allocation5 + $0xa70] sm:$0xff]
    %v2706 = vld [vmem:[#allocation5 + $0xa78] sm:$0xff]
    %v2707 = vld [vmem:[#allocation5 + $0xa80] sm:$0xff]
    %v2708 = vld [vmem:[#allocation5 + $0xa88] sm:$0xff]
    %v2709 = vld [vmem:[#allocation5 + $0xa90] sm:$0xff]
    %v2710 = vld [vmem:[#allocation5 + $0xa98] sm:$0xff]
    %v2711 = vld [vmem:[#allocation5 + $0xaa0] sm:$0xff]
    %v2712 = vld [vmem:[#allocation5 + $0xaa8] sm:$0xff]
    %v2713 = vld [vmem:[#allocation5 + $0xab0] sm:$0xff]
    %v2714 = vld [vmem:[#allocation5 + $0xab8] sm:$0xff]
    %v2715 = vld [vmem:[#allocation5 + $0xac0] sm:$0xff]
    %v2716 = vld [vmem:[#allocation5 + $0xac8] sm:$0xff]
    %v2717 = vld [vmem:[#allocation5 + $0xad0] sm:$0xff]
    %v2718 = vld [vmem:[#allocation5 + $0xad8] sm:$0xff]
    %v2719 = vld [vmem:[#allocation5 + $0xae0] sm:$0xff]
    %v2720 = vld [vmem:[#allocation5 + $0xae8] sm:$0xff]
    %v2721 = vld [vmem:[#allocation5 + $0xaf0] sm:$0xff]
    %v2722 = vld [vmem:[#allocation5 + $0xaf8] sm:$0xff]
    %v2723 = vld [vmem:[#allocation5 + $0xb00] sm:$0xff]
    %v2724 = vld [vmem:[#allocation5 + $0xb08] sm:$0xff]
    %v2725 = vld [vmem:[#allocation5 + $0xb10] sm:$0xff]
    %v2726 = vld [vmem:[#allocation5 + $0xb18] sm:$0xff]
    %v2727 = vld [vmem:[#allocation5 + $0xb20] sm:$0xff]
    %v2728 = vld [vmem:[#allocation5 + $0xb28] sm:$0xff]
    %v2729 = vld [vmem:[#allocation5 + $0xb30] sm:$0xff]
    %v2730 = vld [vmem:[#allocation5 + $0xb38] sm:$0xff]
    %v2731 = vld [vmem:[#allocation5 + $0xb40] sm:$0xff]
    %v2732 = vld [vmem:[#allocation5 + $0xb48] sm:$0xff]
    %v2733 = vld [vmem:[#allocation5 + $0xb50] sm:$0xff]
    %v2734 = vld [vmem:[#allocation5 + $0xb58] sm:$0xff]
    %v2735 = vld [vmem:[#allocation5 + $0xb60] sm:$0xff]
    %v2736 = vld [vmem:[#allocation5 + $0xb68] sm:$0xff]
    %v2737 = vld [vmem:[#allocation5 + $0xb70] sm:$0xff]
    %v2738 = vld [vmem:[#allocation5 + $0xb78] sm:$0xff]
    %v2739 = vld [vmem:[#allocation5 + $0xb80] sm:$0xff]
    %v2740 = vld [vmem:[#allocation5 + $0xb88] sm:$0xff]
    %v2741 = vld [vmem:[#allocation5 + $0xb90] sm:$0xff]
    %v2742 = vld [vmem:[#allocation5 + $0xb98] sm:$0xff]
    %v2743 = vld [vmem:[#allocation5 + $0xba0] sm:$0xff]
    %v2744 = vld [vmem:[#allocation5 + $0xba8] sm:$0xff]
    %v2745 = vld [vmem:[#allocation5 + $0xbb0] sm:$0xff]
    %v2746 = vld [vmem:[#allocation5 + $0xbb8] sm:$0xff]
    %v2747 = vld [vmem:[#allocation5 + $0xbc0] sm:$0xff]
    %v2748 = vld [vmem:[#allocation5 + $0xbc8] sm:$0xff]
    %v2749 = vld [vmem:[#allocation5 + $0xbd0] sm:$0xff]
    %v2750 = vld [vmem:[#allocation5 + $0xbd8] sm:$0xff]
    %v2751 = vld [vmem:[#allocation5 + $0xbe0] sm:$0xff]
    %v2752 = vld [vmem:[#allocation5 + $0xbe8] sm:$0xff]
    %v2753 = vld [vmem:[#allocation5 + $0xbf0] sm:$0xff]
    %v2754 = vld [vmem:[#allocation5 + $0xbf8] sm:$0xff]
    %v2755 = vld [vmem:[#allocation5 + $0xc00] sm:$0xff]
    %v2756 = vld [vmem:[#allocation5 + $0xc08] sm:$0xff]
    %v2757 = vld [vmem:[#allocation5 + $0xc10] sm:$0xff]
    %v2758 = vld [vmem:[#allocation5 + $0xc18] sm:$0xff]
    %v2759 = vld [vmem:[#allocation5 + $0xc20] sm:$0xff]
    %v2760 = vld [vmem:[#allocation5 + $0xc28] sm:$0xff]
    %v2761 = vld [vmem:[#allocation5 + $0xc30] sm:$0xff]
    %v2762 = vld [vmem:[#allocation5 + $0xc38] sm:$0xff]
    %v2763 = vld [vmem:[#allocation5 + $0xc40] sm:$0xff]
    %v2764 = vld [vmem:[#allocation5 + $0xc48] sm:$0xff]
    %v2765 = vld [vmem:[#allocation5 + $0xc50] sm:$0xff]
    %v2766 = vld [vmem:[#allocation5 + $0xc58] sm:$0xff]
    %v2767 = vld [vmem:[#allocation5 + $0xc60] sm:$0xff]
    %v2768 = vld [vmem:[#allocation5 + $0xc68] sm:$0xff]
    %v2769 = vld [vmem:[#allocation5 + $0xc70] sm:$0xff]
    %v2770 = vld [vmem:[#allocation5 + $0xc78] sm:$0xff]
    %v2771 = vld [vmem:[#allocation5 + $0xc80] sm:$0xff]
    %v2772 = vld [vmem:[#allocation5 + $0xc88] sm:$0xff]
    %v2773 = vld [vmem:[#allocation5 + $0xc90] sm:$0xff]
    %v2774 = vld [vmem:[#allocation5 + $0xc98] sm:$0xff]
    %v2775 = vld [vmem:[#allocation5 + $0xca0] sm:$0xff]
    %v2776 = vld [vmem:[#allocation5 + $0xca8] sm:$0xff]
    %v2777 = vld [vmem:[#allocation5 + $0xcb0] sm:$0xff]
    %v2778 = vld [vmem:[#allocation5 + $0xcb8] sm:$0xff]
    %v2779 = vld [vmem:[#allocation5 + $0xcc0] sm:$0xff]
    %v2780 = vld [vmem:[#allocation5 + $0xcc8] sm:$0xff]
    %v2781 = vld [vmem:[#allocation5 + $0xcd0] sm:$0xff]
    %v2782 = vld [vmem:[#allocation5 + $0xcd8] sm:$0xff]
    %v2783 = vld [vmem:[#allocation5 + $0xce0] sm:$0xff]
    %v2784 = vld [vmem:[#allocation5 + $0xce8] sm:$0xff]
    %v2785 = vld [vmem:[#allocation5 + $0xcf0] sm:$0xff]
    %v2786 = vld [vmem:[#allocation5 + $0xcf8] sm:$0xff]
    %v2787 = vld [vmem:[#allocation5 + $0xd00] sm:$0xff]
    %v2788 = vld [vmem:[#allocation5 + $0xd08] sm:$0xff]
    %v2789 = vld [vmem:[#allocation5 + $0xd10] sm:$0xff]
    %v2790 = vld [vmem:[#allocation5 + $0xd18] sm:$0xff]
    %v2791 = vld [vmem:[#allocation5 + $0xd20] sm:$0xff]
    %v2792 = vld [vmem:[#allocation5 + $0xd28] sm:$0xff]
    %v2793 = vld [vmem:[#allocation5 + $0xd30] sm:$0xff]
    %v2794 = vld [vmem:[#allocation5 + $0xd38] sm:$0xff]
    %v2795 = vld [vmem:[#allocation5 + $0xd40] sm:$0xff]
    %v2796 = vld [vmem:[#allocation5 + $0xd48] sm:$0xff]
    %v2797 = vld [vmem:[#allocation5 + $0xd50] sm:$0xff]
    %v2798 = vld [vmem:[#allocation5 + $0xd58] sm:$0xff]
    %v2799 = vld [vmem:[#allocation5 + $0xd60] sm:$0xff]
    %v2800 = vld [vmem:[#allocation5 + $0xd68] sm:$0xff]
    %v2801 = vld [vmem:[#allocation5 + $0xd70] sm:$0xff]
    %v2802 = vld [vmem:[#allocation5 + $0xd78] sm:$0xff]
    %v2803 = vld [vmem:[#allocation5 + $0xd80] sm:$0xff]
    %v2804 = vld [vmem:[#allocation5 + $0xd88] sm:$0xff]
    %v2805 = vld [vmem:[#allocation5 + $0xd90] sm:$0xff]
    %v2806 = vld [vmem:[#allocation5 + $0xd98] sm:$0xff]
    %v2807 = vld [vmem:[#allocation5 + $0xda0] sm:$0xff]
    %v2808 = vld [vmem:[#allocation5 + $0xda8] sm:$0xff]
    %v2809 = vld [vmem:[#allocation5 + $0xdb0] sm:$0xff]
    %v2810 = vld [vmem:[#allocation5 + $0xdb8] sm:$0xff]
    %v2811 = vld [vmem:[#allocation5 + $0xdc0] sm:$0xff]
    %v2812 = vld [vmem:[#allocation5 + $0xdc8] sm:$0xff]
    %v2813 = vld [vmem:[#allocation5 + $0xdd0] sm:$0xff]
    %v2814 = vld [vmem:[#allocation5 + $0xdd8] sm:$0xff]
    %v2815 = vld [vmem:[#allocation5 + $0xde0] sm:$0xff]
    %v2816 = vld [vmem:[#allocation5 + $0xde8] sm:$0xff]
    %v2817 = vld [vmem:[#allocation5 + $0xdf0] sm:$0xff]
    %v2818 = vld [vmem:[#allocation5 + $0xdf8] sm:$0xff]
    %v2819 = vld [vmem:[#allocation5 + $0xe00] sm:$0xff]
    %v2820 = vld [vmem:[#allocation5 + $0xe08] sm:$0xff]
    %v2821 = vld [vmem:[#allocation5 + $0xe10] sm:$0xff]
    %v2822 = vld [vmem:[#allocation5 + $0xe18] sm:$0xff]
    %v2823 = vld [vmem:[#allocation5 + $0xe20] sm:$0xff]
    %v2824 = vld [vmem:[#allocation5 + $0xe28] sm:$0xff]
    %v2825 = vld [vmem:[#allocation5 + $0xe30] sm:$0xff]
    %v2826 = vld [vmem:[#allocation5 + $0xe38] sm:$0xff]
    %v2827 = vld [vmem:[#allocation5 + $0xe40] sm:$0xff]
    %v2828 = vld [vmem:[#allocation5 + $0xe48] sm:$0xff]
    %v2829 = vld [vmem:[#allocation5 + $0xe50] sm:$0xff]
    %v2830 = vld [vmem:[#allocation5 + $0xe58] sm:$0xff]
    %v2831 = vld [vmem:[#allocation5 + $0xe60] sm:$0xff]
    %v2832 = vld [vmem:[#allocation5 + $0xe68] sm:$0xff]
    %v2833 = vld [vmem:[#allocation5 + $0xe70] sm:$0xff]
    %v2834 = vld [vmem:[#allocation5 + $0xe78] sm:$0xff]
    %v2835 = vld [vmem:[#allocation5 + $0xe80] sm:$0xff]
    %v2836 = vld [vmem:[#allocation5 + $0xe88] sm:$0xff]
    %v2837 = vld [vmem:[#allocation5 + $0xe90] sm:$0xff]
    %v2838 = vld [vmem:[#allocation5 + $0xe98] sm:$0xff]
    %v2839 = vld [vmem:[#allocation5 + $0xea0] sm:$0xff]
    %v2840 = vld [vmem:[#allocation5 + $0xea8] sm:$0xff]
    %v2841 = vld [vmem:[#allocation5 + $0xeb0] sm:$0xff]
    %v2842 = vld [vmem:[#allocation5 + $0xeb8] sm:$0xff]
    %v2843 = vld [vmem:[#allocation5 + $0xec0] sm:$0xff]
    %v2844 = vld [vmem:[#allocation5 + $0xec8] sm:$0xff]
    %v2845 = vld [vmem:[#allocation5 + $0xed0] sm:$0xff]
    %v2846 = vld [vmem:[#allocation5 + $0xed8] sm:$0xff]
    %v2847 = vld [vmem:[#allocation5 + $0xee0] sm:$0xff]
    %v2848 = vld [vmem:[#allocation5 + $0xee8] sm:$0xff]
    %v2849 = vld [vmem:[#allocation5 + $0xef0] sm:$0xff]
    %v2850 = vld [vmem:[#allocation5 + $0xef8] sm:$0xff]
    %v2851 = vld [vmem:[#allocation5 + $0xf00] sm:$0xff]
    %v2852 = vld [vmem:[#allocation5 + $0xf08] sm:$0xff]
    %v2853 = vld [vmem:[#allocation5 + $0xf10] sm:$0xff]
    %v2854 = vld [vmem:[#allocation5 + $0xf18] sm:$0xff]
    %v2855 = vld [vmem:[#allocation5 + $0xf20] sm:$0xff]
    %v2856 = vld [vmem:[#allocation5 + $0xf28] sm:$0xff]
    %v2857 = vld [vmem:[#allocation5 + $0xf30] sm:$0xff]
    %v2858 = vld [vmem:[#allocation5 + $0xf38] sm:$0xff]
    %v2859 = vld [vmem:[#allocation5 + $0xf40] sm:$0xff]
    %v2860 = vld [vmem:[#allocation5 + $0xf48] sm:$0xff]
    %v2861 = vld [vmem:[#allocation5 + $0xf50] sm:$0xff]
    %v2862 = vld [vmem:[#allocation5 + $0xf58] sm:$0xff]
    %v2863 = vld [vmem:[#allocation5 + $0xf60] sm:$0xff]
    %v2864 = vld [vmem:[#allocation5 + $0xf68] sm:$0xff]
    %v2865 = vld [vmem:[#allocation5 + $0xf70] sm:$0xff]
    %v2866 = vld [vmem:[#allocation5 + $0xf78] sm:$0xff]
    %v2867 = vld [vmem:[#allocation5 + $0xf80] sm:$0xff]
    %v2868 = vld [vmem:[#allocation5 + $0xf88] sm:$0xff]
    %v2869 = vld [vmem:[#allocation5 + $0xf90] sm:$0xff]
    %v2870 = vld [vmem:[#allocation5 + $0xf98] sm:$0xff]
    %v2871 = vld [vmem:[#allocation5 + $0xfa0] sm:$0xff]
    %v2872 = vld [vmem:[#allocation5 + $0xfa8] sm:$0xff]
    %v2873 = vld [vmem:[#allocation5 + $0xfb0] sm:$0xff]
    %v2874 = vld [vmem:[#allocation5 + $0xfb8] sm:$0xff]
    %v2875 = vld [vmem:[#allocation5 + $0xfc0] sm:$0xff]
    %v2876 = vld [vmem:[#allocation5 + $0xfc8] sm:$0xff]
    %v2877 = vld [vmem:[#allocation5 + $0xfd0] sm:$0xff]
    %v2878 = vld [vmem:[#allocation5 + $0xfd8] sm:$0xff]
    %v2879 = vld [vmem:[#allocation5 + $0xfe0] sm:$0xff]
    %v2880 = vld [vmem:[#allocation5 + $0xfe8] sm:$0xff]
    %v2881 = vld [vmem:[#allocation5 + $0xff0] sm:$0xff]
    %v2882 = vld [vmem:[#allocation5 + $0xff8] sm:$0xff]
    %v2883 = vld [vmem:[#allocation5 + $0x1000] sm:$0xff]
    %v2884 = vld [vmem:[#allocation5 + $0x1008] sm:$0xff]
    %v2885 = vld [vmem:[#allocation5 + $0x1010] sm:$0xff]
    %v2886 = vld [vmem:[#allocation5 + $0x1018] sm:$0xff]
    %v2887 = vld [vmem:[#allocation5 + $0x1020] sm:$0xff]
    %v2888 = vld [vmem:[#allocation5 + $0x1028] sm:$0xff]
    %v2889 = vld [vmem:[#allocation5 + $0x1030] sm:$0xff]
    %v2890 = vld [vmem:[#allocation5 + $0x1038] sm:$0xff]
    %v2891 = vld [vmem:[#allocation5 + $0x1040] sm:$0xff]
    %v2892 = vld [vmem:[#allocation5 + $0x1048] sm:$0xff]
    %v2893 = vld [vmem:[#allocation5 + $0x1050] sm:$0xff]
    %v2894 = vld [vmem:[#allocation5 + $0x1058] sm:$0xff]
    %v2895 = vld [vmem:[#allocation5 + $0x1060] sm:$0xff]
    %v2896 = vld [vmem:[#allocation5 + $0x1068] sm:$0xff]
    %v2897 = vld [vmem:[#allocation5 + $0x1070] sm:$0xff]
    %v2898 = vld [vmem:[#allocation5 + $0x1078] sm:$0xff]
    %v2899 = vld [vmem:[#allocation5 + $0x1080] sm:$0xff]
    %v2900 = vld [vmem:[#allocation5 + $0x1088] sm:$0xff]
    %v2901 = vld [vmem:[#allocation5 + $0x1090] sm:$0xff]
    %v2902 = vld [vmem:[#allocation5 + $0x1098] sm:$0xff]
    %v2903 = vld [vmem:[#allocation5 + $0x10a0] sm:$0xff]
    %v2904 = vld [vmem:[#allocation5 + $0x10a8] sm:$0xff]
    %v2905 = vld [vmem:[#allocation5 + $0x10b0] sm:$0xff]
    %v2906 = vld [vmem:[#allocation5 + $0x10b8] sm:$0xff]
    %v2907 = vld [vmem:[#allocation5 + $0x10c0] sm:$0xff]
    %v2908 = vld [vmem:[#allocation5 + $0x10c8] sm:$0xff]
    %v2909 = vld [vmem:[#allocation5 + $0x10d0] sm:$0xff]
    %v2910 = vld [vmem:[#allocation5 + $0x10d8] sm:$0xff]
    %v2911 = vld [vmem:[#allocation5 + $0x10e0] sm:$0xff]
    %v2912 = vld [vmem:[#allocation5 + $0x10e8] sm:$0xff]
    %v2913 = vld [vmem:[#allocation5 + $0x10f0] sm:$0xff]
    %v2914 = vld [vmem:[#allocation5 + $0x10f8] sm:$0xff]
    %v2915 = vld [vmem:[#allocation5 + $0x1100] sm:$0xff]
    %v2916 = vld [vmem:[#allocation5 + $0x1108] sm:$0xff]
    %v2917 = vld [vmem:[#allocation5 + $0x1110] sm:$0xff]
    %v2918 = vld [vmem:[#allocation5 + $0x1118] sm:$0xff]
    %v2919 = vld [vmem:[#allocation5 + $0x1120] sm:$0xff]
    %v2920 = vld [vmem:[#allocation5 + $0x1128] sm:$0xff]
    %v2921 = vld [vmem:[#allocation5 + $0x1130] sm:$0xff]
    %v2922 = vld [vmem:[#allocation5 + $0x1138] sm:$0xff]
    %v2923 = vld [vmem:[#allocation5 + $0x1140] sm:$0xff]
    %v2924 = vld [vmem:[#allocation5 + $0x1148] sm:$0xff]
    %v2925 = vld [vmem:[#allocation5 + $0x1150] sm:$0xff]
    %v2926 = vld [vmem:[#allocation5 + $0x1158] sm:$0xff]
    %v2927 = vld [vmem:[#allocation5 + $0x1160] sm:$0xff]
    %v2928 = vld [vmem:[#allocation5 + $0x1168] sm:$0xff]
    %v2929 = vld [vmem:[#allocation5 + $0x1170] sm:$0xff]
    %v2930 = vld [vmem:[#allocation5 + $0x1178] sm:$0xff]
    %v2931 = vld [vmem:[#allocation5 + $0x1180] sm:$0xff]
    %v2932 = vld [vmem:[#allocation5 + $0x1188] sm:$0xff]
    %v2933 = vld [vmem:[#allocation5 + $0x1190] sm:$0xff]
    %v2934 = vld [vmem:[#allocation5 + $0x1198] sm:$0xff]
    %v2935 = vld [vmem:[#allocation5 + $0x11a0] sm:$0xff]
    %v2936 = vld [vmem:[#allocation5 + $0x11a8] sm:$0xff]
    %v2937 = vld [vmem:[#allocation5 + $0x11b0] sm:$0xff]
    %v2938 = vld [vmem:[#allocation5 + $0x11b8] sm:$0xff]
    %v2939 = vld [vmem:[#allocation5 + $0x11c0] sm:$0xff]
    %v2940 = vld [vmem:[#allocation5 + $0x11c8] sm:$0xff]
    %v2941 = vld [vmem:[#allocation5 + $0x11d0] sm:$0xff]
    %v2942 = vld [vmem:[#allocation5 + $0x11d8] sm:$0xff]
    %v2943 = vld [vmem:[#allocation5 + $0x11e0] sm:$0xff]
    %v2944 = vld [vmem:[#allocation5 + $0x11e8] sm:$0xff]
    %v2945 = vld [vmem:[#allocation5 + $0x11f0] sm:$0xff]
    %v2946 = vld [vmem:[#allocation5 + $0x11f8] sm:$0xff]
    %v2947 = vld [vmem:[#allocation5 + $0x1200] sm:$0xff]
    %v2948 = vld [vmem:[#allocation5 + $0x1208] sm:$0xff]
    %v2949 = vld [vmem:[#allocation5 + $0x1210] sm:$0xff]
    %v2950 = vld [vmem:[#allocation5 + $0x1218] sm:$0xff]
    %v2951 = vld [vmem:[#allocation5 + $0x1220] sm:$0xff]
    %v2952 = vld [vmem:[#allocation5 + $0x1228] sm:$0xff]
    %v2953 = vld [vmem:[#allocation5 + $0x1230] sm:$0xff]
    %v2954 = vld [vmem:[#allocation5 + $0x1238] sm:$0xff]
    %v2955 = vld [vmem:[#allocation5 + $0x1240] sm:$0xff]
    %v2956 = vld [vmem:[#allocation5 + $0x1248] sm:$0xff]
    %v2957 = vld [vmem:[#allocation5 + $0x1250] sm:$0xff]
    %v2958 = vld [vmem:[#allocation5 + $0x1258] sm:$0xff]
    %v2959 = vld [vmem:[#allocation5 + $0x1260] sm:$0xff]
    %v2960 = vld [vmem:[#allocation5 + $0x1268] sm:$0xff]
    %v2961 = vld [vmem:[#allocation5 + $0x1270] sm:$0xff]
    %v2962 = vld [vmem:[#allocation5 + $0x1278] sm:$0xff]
    %v2963 = vld [vmem:[#allocation5 + $0x1280] sm:$0xff]
    %v2964 = vld [vmem:[#allocation5 + $0x1288] sm:$0xff]
    %v2965 = vld [vmem:[#allocation5 + $0x1290] sm:$0xff]
    %v2966 = vld [vmem:[#allocation5 + $0x1298] sm:$0xff]
    %v2967 = vld [vmem:[#allocation5 + $0x12a0] sm:$0xff]
    %v2968 = vld [vmem:[#allocation5 + $0x12a8] sm:$0xff]
    %v2969 = vld [vmem:[#allocation5 + $0x12b0] sm:$0xff]
    %v2970 = vld [vmem:[#allocation5 + $0x12b8] sm:$0xff]
    %v2971 = vld [vmem:[#allocation5 + $0x12c0] sm:$0xff]
    %v2972 = vld [vmem:[#allocation5 + $0x12c8] sm:$0xff]
    %v2973 = vld [vmem:[#allocation5 + $0x12d0] sm:$0xff]
    %v2974 = vld [vmem:[#allocation5 + $0x12d8] sm:$0xff]
    %v2975 = vld [vmem:[#allocation5 + $0x12e0] sm:$0xff]
    %v2976 = vld [vmem:[#allocation5 + $0x12e8] sm:$0xff]
    %v2977 = vld [vmem:[#allocation5 + $0x12f0] sm:$0xff]
    %v2978 = vld [vmem:[#allocation5 + $0x12f8] sm:$0xff]
    %v2979 = vld [vmem:[#allocation5 + $0x1300] sm:$0xff]
    %v2980 = vld [vmem:[#allocation5 + $0x1308] sm:$0xff]
    %v2981 = vld [vmem:[#allocation5 + $0x1310] sm:$0xff]
    %v2982 = vld [vmem:[#allocation5 + $0x1318] sm:$0xff]
    %v2983 = vld [vmem:[#allocation5 + $0x1320] sm:$0xff]
    %v2984 = vld [vmem:[#allocation5 + $0x1328] sm:$0xff]
    %v2985 = vld [vmem:[#allocation5 + $0x1330] sm:$0xff]
    %v2986 = vld [vmem:[#allocation5 + $0x1338] sm:$0xff]
    %v2987 = vld [vmem:[#allocation5 + $0x1340] sm:$0xff]
    %v2988 = vld [vmem:[#allocation5 + $0x1348] sm:$0xff]
    %v2989 = vld [vmem:[#allocation5 + $0x1350] sm:$0xff]
    %v2990 = vld [vmem:[#allocation5 + $0x1358] sm:$0xff]
    %v2991 = vld [vmem:[#allocation5 + $0x1360] sm:$0xff]
    %v2992 = vld [vmem:[#allocation5 + $0x1368] sm:$0xff]
    %v2993 = vld [vmem:[#allocation5 + $0x1370] sm:$0xff]
    %v2994 = vld [vmem:[#allocation5 + $0x1378] sm:$0xff]
    %v2995 = vld [vmem:[#allocation5 + $0x1380] sm:$0xff]
    %v2996 = vld [vmem:[#allocation5 + $0x1388] sm:$0xff]
    %v2997 = vld [vmem:[#allocation5 + $0x1390] sm:$0xff]
    %v2998 = vld [vmem:[#allocation5 + $0x1398] sm:$0xff]
    %v2999 = vld [vmem:[#allocation5 + $0x13a0] sm:$0xff]
    %v3000 = vld [vmem:[#allocation5 + $0x13a8] sm:$0xff]
    %v3001 = vld [vmem:[#allocation5 + $0x13b0] sm:$0xff]
    %v3002 = vld [vmem:[#allocation5 + $0x13b8] sm:$0xff]
    %v3003 = vld [vmem:[#allocation5 + $0x13c0] sm:$0xff]
    %v3004 = vld [vmem:[#allocation5 + $0x13c8] sm:$0xff]
    %v3005 = vld [vmem:[#allocation5 + $0x13d0] sm:$0xff]
    %v3006 = vld [vmem:[#allocation5 + $0x13d8] sm:$0xff]
    %v3007 = vld [vmem:[#allocation5 + $0x13e0] sm:$0xff]
    %v3008 = vld [vmem:[#allocation5 + $0x13e8] sm:$0xff]
    %v3009 = vld [vmem:[#allocation5 + $0x13f0] sm:$0xff]
    %v3010 = vld [vmem:[#allocation5 + $0x13f8] sm:$0xff]
    %v3011 = vld [vmem:[#allocation5 + $0x1400] sm:$0xff]
    %v3012 = vld [vmem:[#allocation5 + $0x1408] sm:$0xff]
    %v3013 = vld [vmem:[#allocation5 + $0x1410] sm:$0xff]
    %v3014 = vld [vmem:[#allocation5 + $0x1418] sm:$0xff]
    %v3015 = vld [vmem:[#allocation5 + $0x1420] sm:$0xff]
    %v3016 = vld [vmem:[#allocation5 + $0x1428] sm:$0xff]
    %v3017 = vld [vmem:[#allocation5 + $0x1430] sm:$0xff]
    %v3018 = vld [vmem:[#allocation5 + $0x1438] sm:$0xff]
    %v3019 = vld [vmem:[#allocation5 + $0x1440] sm:$0xff]
    %v3020 = vld [vmem:[#allocation5 + $0x1448] sm:$0xff]
    %v3021 = vld [vmem:[#allocation5 + $0x1450] sm:$0xff]
    %v3022 = vld [vmem:[#allocation5 + $0x1458] sm:$0xff]
    %v3023 = vld [vmem:[#allocation5 + $0x1460] sm:$0xff]
    %v3024 = vld [vmem:[#allocation5 + $0x1468] sm:$0xff]
    %v3025 = vld [vmem:[#allocation5 + $0x1470] sm:$0xff]
    %v3026 = vld [vmem:[#allocation5 + $0x1478] sm:$0xff]
    %v3027 = vld [vmem:[#allocation5 + $0x1480] sm:$0xff]
    %v3028 = vld [vmem:[#allocation5 + $0x1488] sm:$0xff]
    %v3029 = vld [vmem:[#allocation5 + $0x1490] sm:$0xff]
    %v3030 = vld [vmem:[#allocation5 + $0x1498] sm:$0xff]
    %v3031 = vld [vmem:[#allocation5 + $0x14a0] sm:$0xff]
    %v3032 = vld [vmem:[#allocation5 + $0x14a8] sm:$0xff]
    %v3033 = vld [vmem:[#allocation5 + $0x14b0] sm:$0xff]
    %v3034 = vld [vmem:[#allocation5 + $0x14b8] sm:$0xff]
    %v3035 = vld [vmem:[#allocation5 + $0x14c0] sm:$0xff]
    %v3036 = vld [vmem:[#allocation5 + $0x14c8] sm:$0xff]
    %v3037 = vld [vmem:[#allocation5 + $0x14d0] sm:$0xff]
    %v3038 = vld [vmem:[#allocation5 + $0x14d8] sm:$0xff]
    %v3039 = vld [vmem:[#allocation5 + $0x14e0] sm:$0xff]
    %v3040 = vld [vmem:[#allocation5 + $0x14e8] sm:$0xff]
    %v3041 = vld [vmem:[#allocation5 + $0x14f0] sm:$0xff]
    %v3042 = vld [vmem:[#allocation5 + $0x14f8] sm:$0xff]
    %v3043 = vld [vmem:[#allocation5 + $0x1500] sm:$0xff]
    %v3044 = vld [vmem:[#allocation5 + $0x1508] sm:$0xff]
    %v3045 = vld [vmem:[#allocation5 + $0x1510] sm:$0xff]
    %v3046 = vld [vmem:[#allocation5 + $0x1518] sm:$0xff]
    %v3047 = vld [vmem:[#allocation5 + $0x1520] sm:$0xff]
    %v3048 = vld [vmem:[#allocation5 + $0x1528] sm:$0xff]
    %v3049 = vld [vmem:[#allocation5 + $0x1530] sm:$0xff]
    %v3050 = vld [vmem:[#allocation5 + $0x1538] sm:$0xff]
    %v3051 = vld [vmem:[#allocation5 + $0x1540] sm:$0xff]
    %v3052 = vld [vmem:[#allocation5 + $0x1548] sm:$0xff]
    %v3053 = vld [vmem:[#allocation5 + $0x1550] sm:$0xff]
    %v3054 = vld [vmem:[#allocation5 + $0x1558] sm:$0xff]
    %v3055 = vld [vmem:[#allocation5 + $0x1560] sm:$0xff]
    %v3056 = vld [vmem:[#allocation5 + $0x1568] sm:$0xff]
    %v3057 = vld [vmem:[#allocation5 + $0x1570] sm:$0xff]
    %v3058 = vld [vmem:[#allocation5 + $0x1578] sm:$0xff]
    %v3059 = vld [vmem:[#allocation5 + $0x1580] sm:$0xff]
    %v3060 = vld [vmem:[#allocation5 + $0x1588] sm:$0xff]
    %v3061 = vld [vmem:[#allocation5 + $0x1590] sm:$0xff]
    %v3062 = vld [vmem:[#allocation5 + $0x1598] sm:$0xff]
    %v3063 = vld [vmem:[#allocation5 + $0x15a0] sm:$0xff]
    %v3064 = vld [vmem:[#allocation5 + $0x15a8] sm:$0xff]
    %v3065 = vld [vmem:[#allocation5 + $0x15b0] sm:$0xff]
    %v3066 = vld [vmem:[#allocation5 + $0x15b8] sm:$0xff]
    %v3067 = vld [vmem:[#allocation5 + $0x15c0] sm:$0xff]
    %v3068 = vld [vmem:[#allocation5 + $0x15c8] sm:$0xff]
    %v3069 = vld [vmem:[#allocation5 + $0x15d0] sm:$0xff]
    %v3070 = vld [vmem:[#allocation5 + $0x15d8] sm:$0xff]
    %v3071 = vld [vmem:[#allocation5 + $0x15e0] sm:$0xff]
    %v3072 = vld [vmem:[#allocation5 + $0x15e8] sm:$0xff]
    %v3073 = vld [vmem:[#allocation5 + $0x15f0] sm:$0xff]
    %v3074 = vld [vmem:[#allocation5 + $0x15f8] sm:$0xff]
    %v3075 = vld [vmem:[#allocation5 + $0x1600] sm:$0xff]
    %v3076 = vld [vmem:[#allocation5 + $0x1608] sm:$0xff]
    %v3077 = vld [vmem:[#allocation5 + $0x1610] sm:$0xff]
    %v3078 = vld [vmem:[#allocation5 + $0x1618] sm:$0xff]
    %v3079 = vld [vmem:[#allocation5 + $0x1620] sm:$0xff]
    %v3080 = vld [vmem:[#allocation5 + $0x1628] sm:$0xff]
    %v3081 = vld [vmem:[#allocation5 + $0x1630] sm:$0xff]
    %v3082 = vld [vmem:[#allocation5 + $0x1638] sm:$0xff]
    %v3083 = vld [vmem:[#allocation5 + $0x1640] sm:$0xff]
    %v3084 = vld [vmem:[#allocation5 + $0x1648] sm:$0xff]
    %v3085 = vld [vmem:[#allocation5 + $0x1650] sm:$0xff]
    %v3086 = vld [vmem:[#allocation5 + $0x1658] sm:$0xff]
    %v3087 = vld [vmem:[#allocation5 + $0x1660] sm:$0xff]
    %v3088 = vld [vmem:[#allocation5 + $0x1668] sm:$0xff]
    %v3089 = vld [vmem:[#allocation5 + $0x1670] sm:$0xff]
    %v3090 = vld [vmem:[#allocation5 + $0x1678] sm:$0xff]
    %v3091 = vld [vmem:[#allocation5 + $0x1680] sm:$0xff]
    %v3092 = vld [vmem:[#allocation5 + $0x1688] sm:$0xff]
    %v3093 = vld [vmem:[#allocation5 + $0x1690] sm:$0xff]
    %v3094 = vld [vmem:[#allocation5 + $0x1698] sm:$0xff]
    %v3095 = vld [vmem:[#allocation5 + $0x16a0] sm:$0xff]
    %v3096 = vld [vmem:[#allocation5 + $0x16a8] sm:$0xff]
    %v3097 = vld [vmem:[#allocation5 + $0x16b0] sm:$0xff]
    %v3098 = vld [vmem:[#allocation5 + $0x16b8] sm:$0xff]
    %v3099 = vld [vmem:[#allocation5 + $0x16c0] sm:$0xff]
    %v3100 = vld [vmem:[#allocation5 + $0x16c8] sm:$0xff]
    %v3101 = vld [vmem:[#allocation5 + $0x16d0] sm:$0xff]
    %v3102 = vld [vmem:[#allocation5 + $0x16d8] sm:$0xff]
    %v3103 = vld [vmem:[#allocation5 + $0x16e0] sm:$0xff]
    %v3104 = vld [vmem:[#allocation5 + $0x16e8] sm:$0xff]
    %v3105 = vld [vmem:[#allocation5 + $0x16f0] sm:$0xff]
    %v3106 = vld [vmem:[#allocation5 + $0x16f8] sm:$0xff]
    %v3107 = vld [vmem:[#allocation5 + $0x1700] sm:$0xff]
    %v3108 = vld [vmem:[#allocation5 + $0x1708] sm:$0xff]
    %v3109 = vld [vmem:[#allocation5 + $0x1710] sm:$0xff]
    %v3110 = vld [vmem:[#allocation5 + $0x1718] sm:$0xff]
    %v3111 = vld [vmem:[#allocation5 + $0x1720] sm:$0xff]
    %v3112 = vld [vmem:[#allocation5 + $0x1728] sm:$0xff]
    %v3113 = vld [vmem:[#allocation5 + $0x1730] sm:$0xff]
    %v3114 = vld [vmem:[#allocation5 + $0x1738] sm:$0xff]
    %v3115 = vld [vmem:[#allocation5 + $0x1740] sm:$0xff]
    %v3116 = vld [vmem:[#allocation5 + $0x1748] sm:$0xff]
    %v3117 = vld [vmem:[#allocation5 + $0x1750] sm:$0xff]
    %v3118 = vld [vmem:[#allocation5 + $0x1758] sm:$0xff]
    %v3119 = vld [vmem:[#allocation5 + $0x1760] sm:$0xff]
    %v3120 = vld [vmem:[#allocation5 + $0x1768] sm:$0xff]
    %v3121 = vld [vmem:[#allocation5 + $0x1770] sm:$0xff]
    %v3122 = vld [vmem:[#allocation5 + $0x1778] sm:$0xff]
    %v3123 = vld [vmem:[#allocation5 + $0x1780] sm:$0xff]
    %v3124 = vld [vmem:[#allocation5 + $0x1788] sm:$0xff]
    %v3125 = vld [vmem:[#allocation5 + $0x1790] sm:$0xff]
    %v3126 = vld [vmem:[#allocation5 + $0x1798] sm:$0xff]
    %v3127 = vld [vmem:[#allocation5 + $0x17a0] sm:$0xff]
    %v3128 = vld [vmem:[#allocation5 + $0x17a8] sm:$0xff]
    %v3129 = vld [vmem:[#allocation5 + $0x17b0] sm:$0xff]
    %v3130 = vld [vmem:[#allocation5 + $0x17b8] sm:$0xff]
    %v3131 = vld [vmem:[#allocation5 + $0x17c0] sm:$0xff]
    %v3132 = vld [vmem:[#allocation5 + $0x17c8] sm:$0xff]
    %v3133 = vld [vmem:[#allocation5 + $0x17d0] sm:$0xff]
    %v3134 = vld [vmem:[#allocation5 + $0x17d8] sm:$0xff]
    %v3135 = vld [vmem:[#allocation5 + $0x17e0] sm:$0xff]
    %v3136 = vld [vmem:[#allocation5 + $0x17e8] sm:$0xff]
    %v3137 = vld [vmem:[#allocation5 + $0x17f0] sm:$0xff]
    %v3138 = vld [vmem:[#allocation5 + $0x17f8] sm:$0xff]
    %v3139 = vld [vmem:[#allocation5 + $0x1800] sm:$0xff]
    %v3140 = vld [vmem:[#allocation5 + $0x1808] sm:$0xff]
    %v3141 = vld [vmem:[#allocation5 + $0x1810] sm:$0xff]
    %v3142 = vld [vmem:[#allocation5 + $0x1818] sm:$0xff]
    %v3143 = vld [vmem:[#allocation5 + $0x1820] sm:$0xff]
    %v3144 = vld [vmem:[#allocation5 + $0x1828] sm:$0xff]
    %v3145 = vld [vmem:[#allocation5 + $0x1830] sm:$0xff]
    %v3146 = vld [vmem:[#allocation5 + $0x1838] sm:$0xff]
    %v3147 = vld [vmem:[#allocation5 + $0x1840] sm:$0xff]
    %v3148 = vld [vmem:[#allocation5 + $0x1848] sm:$0xff]
    %v3149 = vld [vmem:[#allocation5 + $0x1850] sm:$0xff]
    %v3150 = vld [vmem:[#allocation5 + $0x1858] sm:$0xff]
    %v3151 = vld [vmem:[#allocation5 + $0x1860] sm:$0xff]
    %v3152 = vld [vmem:[#allocation5 + $0x1868] sm:$0xff]
    %v3153 = vld [vmem:[#allocation5 + $0x1870] sm:$0xff]
    %v3154 = vld [vmem:[#allocation5 + $0x1878] sm:$0xff]
    %v3155 = vld [vmem:[#allocation5 + $0x1880] sm:$0xff]
    %v3156 = vld [vmem:[#allocation5 + $0x1888] sm:$0xff]
    %v3157 = vld [vmem:[#allocation5 + $0x1890] sm:$0xff]
    %v3158 = vld [vmem:[#allocation5 + $0x1898] sm:$0xff]
    %v3159 = vld [vmem:[#allocation5 + $0x18a0] sm:$0xff]
    %v3160 = vld [vmem:[#allocation5 + $0x18a8] sm:$0xff]
    %v3161 = vld [vmem:[#allocation5 + $0x18b0] sm:$0xff]
    %v3162 = vld [vmem:[#allocation5 + $0x18b8] sm:$0xff]
    %v3163 = vld [vmem:[#allocation5 + $0x18c0] sm:$0xff]
    %v3164 = vld [vmem:[#allocation5 + $0x18c8] sm:$0xff]
    %v3165 = vld [vmem:[#allocation5 + $0x18d0] sm:$0xff]
    %v3166 = vld [vmem:[#allocation5 + $0x18d8] sm:$0xff]
    %v3167 = vld [vmem:[#allocation5 + $0x18e0] sm:$0xff]
    %v3168 = vld [vmem:[#allocation5 + $0x18e8] sm:$0xff]
    %v3169 = vld [vmem:[#allocation5 + $0x18f0] sm:$0xff]
    %v3170 = vld [vmem:[#allocation5 + $0x18f8] sm:$0xff]
    %v3171 = vld [vmem:[#allocation5 + $0x1900] sm:$0xff]
    %v3172 = vld [vmem:[#allocation5 + $0x1908] sm:$0xff]
    %v3173 = vld [vmem:[#allocation5 + $0x1910] sm:$0xff]
    %v3174 = vld [vmem:[#allocation5 + $0x1918] sm:$0xff]
    %v3175 = vld [vmem:[#allocation5 + $0x1920] sm:$0xff]
    %v3176 = vld [vmem:[#allocation5 + $0x1928] sm:$0xff]
    %v3177 = vld [vmem:[#allocation5 + $0x1930] sm:$0xff]
    %v3178 = vld [vmem:[#allocation5 + $0x1938] sm:$0xff]
    %v3179 = vld [vmem:[#allocation5 + $0x1940] sm:$0xff]
    %v3180 = vld [vmem:[#allocation5 + $0x1948] sm:$0xff]
    %v3181 = vld [vmem:[#allocation5 + $0x1950] sm:$0xff]
    %v3182 = vld [vmem:[#allocation5 + $0x1958] sm:$0xff]
    %v3183 = vld [vmem:[#allocation5 + $0x1960] sm:$0xff]
    %v3184 = vld [vmem:[#allocation5 + $0x1968] sm:$0xff]
    %v3185 = vld [vmem:[#allocation5 + $0x1970] sm:$0xff]
    %v3186 = vld [vmem:[#allocation5 + $0x1978] sm:$0xff]
    %v3187 = vld [vmem:[#allocation5 + $0x1980] sm:$0xff]
    %v3188 = vld [vmem:[#allocation5 + $0x1988] sm:$0xff]
    %v3189 = vld [vmem:[#allocation5 + $0x1990] sm:$0xff]
    %v3190 = vld [vmem:[#allocation5 + $0x1998] sm:$0xff]
    %v3191 = vld [vmem:[#allocation5 + $0x19a0] sm:$0xff]
    %v3192 = vld [vmem:[#allocation5 + $0x19a8] sm:$0xff]
    %v3193 = vld [vmem:[#allocation5 + $0x19b0] sm:$0xff]
    %v3194 = vld [vmem:[#allocation5 + $0x19b8] sm:$0xff]
    %v3195 = vld [vmem:[#allocation5 + $0x19c0] sm:$0xff]
    %v3196 = vld [vmem:[#allocation5 + $0x19c8] sm:$0xff]
    %v3197 = vld [vmem:[#allocation5 + $0x19d0] sm:$0xff]
    %v3198 = vld [vmem:[#allocation5 + $0x19d8] sm:$0xff]
    %v3199 = vld [vmem:[#allocation5 + $0x19e0] sm:$0xff]
    %v3200 = vld [vmem:[#allocation5 + $0x19e8] sm:$0xff]
    %v3201 = vld [vmem:[#allocation5 + $0x19f0] sm:$0xff]
    %v3202 = vld [vmem:[#allocation5 + $0x19f8] sm:$0xff]
    %v3203 = vld [vmem:[#allocation5 + $0x1a00] sm:$0xff]
    %v3204 = vld [vmem:[#allocation5 + $0x1a08] sm:$0xff]
    %v3205 = vld [vmem:[#allocation5 + $0x1a10] sm:$0xff]
    %v3206 = vld [vmem:[#allocation5 + $0x1a18] sm:$0xff]
    %v3207 = vld [vmem:[#allocation5 + $0x1a20] sm:$0xff]
    %v3208 = vld [vmem:[#allocation5 + $0x1a28] sm:$0xff]
    %v3209 = vld [vmem:[#allocation5 + $0x1a30] sm:$0xff]
    %v3210 = vld [vmem:[#allocation5 + $0x1a38] sm:$0xff]
    %v3211 = vld [vmem:[#allocation5 + $0x1a40] sm:$0xff]
    %v3212 = vld [vmem:[#allocation5 + $0x1a48] sm:$0xff]
    %v3213 = vld [vmem:[#allocation5 + $0x1a50] sm:$0xff]
    %v3214 = vld [vmem:[#allocation5 + $0x1a58] sm:$0xff]
    %v3215 = vld [vmem:[#allocation5 + $0x1a60] sm:$0xff]
    %v3216 = vld [vmem:[#allocation5 + $0x1a68] sm:$0xff]
    %v3217 = vld [vmem:[#allocation5 + $0x1a70] sm:$0xff]
    %v3218 = vld [vmem:[#allocation5 + $0x1a78] sm:$0xff]
    %v3219 = vld [vmem:[#allocation5 + $0x1a80] sm:$0xff]
    %v3220 = vld [vmem:[#allocation5 + $0x1a88] sm:$0xff]
    %v3221 = vld [vmem:[#allocation5 + $0x1a90] sm:$0xff]
    %v3222 = vld [vmem:[#allocation5 + $0x1a98] sm:$0xff]
    %v3223 = vld [vmem:[#allocation5 + $0x1aa0] sm:$0xff]
    %v3224 = vld [vmem:[#allocation5 + $0x1aa8] sm:$0xff]
    %v3225 = vld [vmem:[#allocation5 + $0x1ab0] sm:$0xff]
    %v3226 = vld [vmem:[#allocation5 + $0x1ab8] sm:$0xff]
    %v3227 = vld [vmem:[#allocation5 + $0x1ac0] sm:$0xff]
    %v3228 = vld [vmem:[#allocation5 + $0x1ac8] sm:$0xff]
    %v3229 = vld [vmem:[#allocation5 + $0x1ad0] sm:$0xff]
    %v3230 = vld [vmem:[#allocation5 + $0x1ad8] sm:$0xff]
    %v3231 = vld [vmem:[#allocation5 + $0x1ae0] sm:$0xff]
    %v3232 = vld [vmem:[#allocation5 + $0x1ae8] sm:$0xff]
    %v3233 = vld [vmem:[#allocation5 + $0x1af0] sm:$0xff]
    %v3234 = vld [vmem:[#allocation5 + $0x1af8] sm:$0xff]
    %v3235 = vld [vmem:[#allocation5 + $0x1b00] sm:$0xff]
    %v3236 = vld [vmem:[#allocation5 + $0x1b08] sm:$0xff]
    %v3237 = vld [vmem:[#allocation5 + $0x1b10] sm:$0xff]
    %v3238 = vld [vmem:[#allocation5 + $0x1b18] sm:$0xff]
    %v3239 = vld [vmem:[#allocation5 + $0x1b20] sm:$0xff]
    %v3240 = vld [vmem:[#allocation5 + $0x1b28] sm:$0xff]
    %v3241 = vld [vmem:[#allocation5 + $0x1b30] sm:$0xff]
    %v3242 = vld [vmem:[#allocation5 + $0x1b38] sm:$0xff]
    %v3243 = vld [vmem:[#allocation5 + $0x1b40] sm:$0xff]
    %v3244 = vld [vmem:[#allocation5 + $0x1b48] sm:$0xff]
    %v3245 = vld [vmem:[#allocation5 + $0x1b50] sm:$0xff]
    %v3246 = vld [vmem:[#allocation5 + $0x1b58] sm:$0xff]
    %v3247 = vld [vmem:[#allocation5 + $0x1b60] sm:$0xff]
    %v3248 = vld [vmem:[#allocation5 + $0x1b68] sm:$0xff]
    %v3249 = vld [vmem:[#allocation5 + $0x1b70] sm:$0xff]
    %v3250 = vld [vmem:[#allocation5 + $0x1b78] sm:$0xff]
    %v3251 = vld [vmem:[#allocation5 + $0x1b80] sm:$0xff]
    %v3252 = vld [vmem:[#allocation5 + $0x1b88] sm:$0xff]
    %v3253 = vld [vmem:[#allocation5 + $0x1b90] sm:$0xff]
    %v3254 = vld [vmem:[#allocation5 + $0x1b98] sm:$0xff]
    %v3255 = vld [vmem:[#allocation5 + $0x1ba0] sm:$0xff]
    %v3256 = vld [vmem:[#allocation5 + $0x1ba8] sm:$0xff]
    %v3257 = vld [vmem:[#allocation5 + $0x1bb0] sm:$0xff]
    %v3258 = vld [vmem:[#allocation5 + $0x1bb8] sm:$0xff]
    %v3259 = vld [vmem:[#allocation5 + $0x1bc0] sm:$0xff]
    %v3260 = vld [vmem:[#allocation5 + $0x1bc8] sm:$0xff]
    %v3261 = vld [vmem:[#allocation5 + $0x1bd0] sm:$0xff]
    %v3262 = vld [vmem:[#allocation5 + $0x1bd8] sm:$0xff]
    %v3263 = vld [vmem:[#allocation5 + $0x1be0] sm:$0xff]
    %v3264 = vld [vmem:[#allocation5 + $0x1be8] sm:$0xff]
    %v3265 = vld [vmem:[#allocation5 + $0x1bf0] sm:$0xff]
    %v3266 = vld [vmem:[#allocation5 + $0x1bf8] sm:$0xff]
    %v3267 = vld [vmem:[#allocation5 + $0x1c00] sm:$0xff]
    %v3268 = vld [vmem:[#allocation5 + $0x1c08] sm:$0xff]
    %v3269 = vld [vmem:[#allocation5 + $0x1c10] sm:$0xff]
    %v3270 = vld [vmem:[#allocation5 + $0x1c18] sm:$0xff]
    %v3271 = vld [vmem:[#allocation5 + $0x1c20] sm:$0xff]
    %v3272 = vld [vmem:[#allocation5 + $0x1c28] sm:$0xff]
    %v3273 = vld [vmem:[#allocation5 + $0x1c30] sm:$0xff]
    %v3274 = vld [vmem:[#allocation5 + $0x1c38] sm:$0xff]
    %v3275 = vld [vmem:[#allocation5 + $0x1c40] sm:$0xff]
    %v3276 = vld [vmem:[#allocation5 + $0x1c48] sm:$0xff]
    %v3277 = vld [vmem:[#allocation5 + $0x1c50] sm:$0xff]
    %v3278 = vld [vmem:[#allocation5 + $0x1c58] sm:$0xff]
    %v3279 = vld [vmem:[#allocation5 + $0x1c60] sm:$0xff]
    %v3280 = vld [vmem:[#allocation5 + $0x1c68] sm:$0xff]
    %v3281 = vld [vmem:[#allocation5 + $0x1c70] sm:$0xff]
    %v3282 = vld [vmem:[#allocation5 + $0x1c78] sm:$0xff]
    %v3283 = vld [vmem:[#allocation5 + $0x1c80] sm:$0xff]
    %v3284 = vld [vmem:[#allocation5 + $0x1c88] sm:$0xff]
    %v3285 = vld [vmem:[#allocation5 + $0x1c90] sm:$0xff]
    %v3286 = vld [vmem:[#allocation5 + $0x1c98] sm:$0xff]
    %v3287 = vld [vmem:[#allocation5 + $0x1ca0] sm:$0xff]
    %v3288 = vld [vmem:[#allocation5 + $0x1ca8] sm:$0xff]
    %v3289 = vld [vmem:[#allocation5 + $0x1cb0] sm:$0xff]
    %v3290 = vld [vmem:[#allocation5 + $0x1cb8] sm:$0xff]
    %v3291 = vld [vmem:[#allocation5 + $0x1cc0] sm:$0xff]
    %v3292 = vld [vmem:[#allocation5 + $0x1cc8] sm:$0xff]
    %v3293 = vld [vmem:[#allocation5 + $0x1cd0] sm:$0xff]
    %v3294 = vld [vmem:[#allocation5 + $0x1cd8] sm:$0xff]
    %v3295 = vld [vmem:[#allocation5 + $0x1ce0] sm:$0xff]
    %v3296 = vld [vmem:[#allocation5 + $0x1ce8] sm:$0xff]
    %v3297 = vld [vmem:[#allocation5 + $0x1cf0] sm:$0xff]
    %v3298 = vld [vmem:[#allocation5 + $0x1cf8] sm:$0xff]
    %v3299 = vld [vmem:[#allocation5 + $0x1d00] sm:$0xff]
    %v3300 = vld [vmem:[#allocation5 + $0x1d08] sm:$0xff]
    %v3301 = vld [vmem:[#allocation5 + $0x1d10] sm:$0xff]
    %v3302 = vld [vmem:[#allocation5 + $0x1d18] sm:$0xff]
    %v3303 = vld [vmem:[#allocation5 + $0x1d20] sm:$0xff]
    %v3304 = vld [vmem:[#allocation5 + $0x1d28] sm:$0xff]
    %v3305 = vld [vmem:[#allocation5 + $0x1d30] sm:$0xff]
    %v3306 = vld [vmem:[#allocation5 + $0x1d38] sm:$0xff]
    %v3307 = vld [vmem:[#allocation5 + $0x1d40] sm:$0xff]
    %v3308 = vld [vmem:[#allocation5 + $0x1d48] sm:$0xff]
    %v3309 = vld [vmem:[#allocation5 + $0x1d50] sm:$0xff]
    %v3310 = vld [vmem:[#allocation5 + $0x1d58] sm:$0xff]
    %v3311 = vld [vmem:[#allocation5 + $0x1d60] sm:$0xff]
    %v3312 = vld [vmem:[#allocation5 + $0x1d68] sm:$0xff]
    %v3313 = vld [vmem:[#allocation5 + $0x1d70] sm:$0xff]
    %v3314 = vld [vmem:[#allocation5 + $0x1d78] sm:$0xff]
    %v3315 = vld [vmem:[#allocation5 + $0x1d80] sm:$0xff]
    %v3316 = vld [vmem:[#allocation5 + $0x1d88] sm:$0xff]
    %v3317 = vld [vmem:[#allocation5 + $0x1d90] sm:$0xff]
    %v3318 = vld [vmem:[#allocation5 + $0x1d98] sm:$0xff]
    %v3319 = vld [vmem:[#allocation5 + $0x1da0] sm:$0xff]
    %v3320 = vld [vmem:[#allocation5 + $0x1da8] sm:$0xff]
    %v3321 = vld [vmem:[#allocation5 + $0x1db0] sm:$0xff]
    %v3322 = vld [vmem:[#allocation5 + $0x1db8] sm:$0xff]
    %v3323 = vld [vmem:[#allocation5 + $0x1dc0] sm:$0xff]
    %v3324 = vld [vmem:[#allocation5 + $0x1dc8] sm:$0xff]
    %v3325 = vld [vmem:[#allocation5 + $0x1dd0] sm:$0xff]
    %v3326 = vld [vmem:[#allocation5 + $0x1dd8] sm:$0xff]
    %v3327 = vld [vmem:[#allocation5 + $0x1de0] sm:$0xff]
    %v3328 = vld [vmem:[#allocation5 + $0x1de8] sm:$0xff]
    %v3329 = vld [vmem:[#allocation5 + $0x1df0] sm:$0xff]
    %v3330 = vld [vmem:[#allocation5 + $0x1df8] sm:$0xff]
    %v3331 = vld [vmem:[#allocation5 + $0x1e00] sm:$0xff]
    %v3332 = vld [vmem:[#allocation5 + $0x1e08] sm:$0xff]
    %v3333 = vld [vmem:[#allocation5 + $0x1e10] sm:$0xff]
    %v3334 = vld [vmem:[#allocation5 + $0x1e18] sm:$0xff]
    %v3335 = vld [vmem:[#allocation5 + $0x1e20] sm:$0xff]
    %v3336 = vld [vmem:[#allocation5 + $0x1e28] sm:$0xff]
    %v3337 = vld [vmem:[#allocation5 + $0x1e30] sm:$0xff]
    %v3338 = vld [vmem:[#allocation5 + $0x1e38] sm:$0xff]
    %v3339 = vld [vmem:[#allocation5 + $0x1e40] sm:$0xff]
    %v3340 = vld [vmem:[#allocation5 + $0x1e48] sm:$0xff]
    %v3341 = vld [vmem:[#allocation5 + $0x1e50] sm:$0xff]
    %v3342 = vld [vmem:[#allocation5 + $0x1e58] sm:$0xff]
    %v3343 = vld [vmem:[#allocation5 + $0x1e60] sm:$0xff]
    %v3344 = vld [vmem:[#allocation5 + $0x1e68] sm:$0xff]
    %v3345 = vld [vmem:[#allocation5 + $0x1e70] sm:$0xff]
    %v3346 = vld [vmem:[#allocation5 + $0x1e78] sm:$0xff]
    %v3347 = vld [vmem:[#allocation5 + $0x1e80] sm:$0xff]
    %v3348 = vld [vmem:[#allocation5 + $0x1e88] sm:$0xff]
    %v3349 = vld [vmem:[#allocation5 + $0x1e90] sm:$0xff]
    %v3350 = vld [vmem:[#allocation5 + $0x1e98] sm:$0xff]
    %v3351 = vld [vmem:[#allocation5 + $0x1ea0] sm:$0xff]
    %v3352 = vld [vmem:[#allocation5 + $0x1ea8] sm:$0xff]
    %v3353 = vld [vmem:[#allocation5 + $0x1eb0] sm:$0xff]
    %v3354 = vld [vmem:[#allocation5 + $0x1eb8] sm:$0xff]
    %v3355 = vld [vmem:[#allocation5 + $0x1ec0] sm:$0xff]
    %v3356 = vld [vmem:[#allocation5 + $0x1ec8] sm:$0xff]
    %v3357 = vld [vmem:[#allocation5 + $0x1ed0] sm:$0xff]
    %v3358 = vld [vmem:[#allocation5 + $0x1ed8] sm:$0xff]
    %v3359 = vld [vmem:[#allocation5 + $0x1ee0] sm:$0xff]
    %v3360 = vld [vmem:[#allocation5 + $0x1ee8] sm:$0xff]
    %v3361 = vld [vmem:[#allocation5 + $0x1ef0] sm:$0xff]
    %v3362 = vld [vmem:[#allocation5 + $0x1ef8] sm:$0xff]
    %v3363 = vld [vmem:[#allocation5 + $0x1f00] sm:$0xff]
    %v3364 = vld [vmem:[#allocation5 + $0x1f08] sm:$0xff]
    %v3365 = vld [vmem:[#allocation5 + $0x1f10] sm:$0xff]
    %v3366 = vld [vmem:[#allocation5 + $0x1f18] sm:$0xff]
    %v3367 = vld [vmem:[#allocation5 + $0x1f20] sm:$0xff]
    %v3368 = vld [vmem:[#allocation5 + $0x1f28] sm:$0xff]
    %v3369 = vld [vmem:[#allocation5 + $0x1f30] sm:$0xff]
    %v3370 = vld [vmem:[#allocation5 + $0x1f38] sm:$0xff]
    %v3371 = vld [vmem:[#allocation5 + $0x1f40] sm:$0xff]
    %v3372 = vld [vmem:[#allocation5 + $0x1f48] sm:$0xff]
    %v3373 = vld [vmem:[#allocation5 + $0x1f50] sm:$0xff]
    %v3374 = vld [vmem:[#allocation5 + $0x1f58] sm:$0xff]
    %v3375 = vld [vmem:[#allocation5 + $0x1f60] sm:$0xff]
    %v3376 = vld [vmem:[#allocation5 + $0x1f68] sm:$0xff]
    %v3377 = vld [vmem:[#allocation5 + $0x1f70] sm:$0xff]
    %v3378 = vld [vmem:[#allocation5 + $0x1f78] sm:$0xff]
    %v3379 = vld [vmem:[#allocation5 + $0x1f80] sm:$0xff]
    %v3380 = vld [vmem:[#allocation5 + $0x1f88] sm:$0xff]
    %v3381 = vld [vmem:[#allocation5 + $0x1f90] sm:$0xff]
    %v3382 = vld [vmem:[#allocation5 + $0x1f98] sm:$0xff]
    %v3383 = vld [vmem:[#allocation5 + $0x1fa0] sm:$0xff]
    %v3384 = vld [vmem:[#allocation5 + $0x1fa8] sm:$0xff]
    %v3385 = vld [vmem:[#allocation5 + $0x1fb0] sm:$0xff]
    %v3386 = vld [vmem:[#allocation5 + $0x1fb8] sm:$0xff]
    %v3387 = vld [vmem:[#allocation5 + $0x1fc0] sm:$0xff]
    %v3388 = vld [vmem:[#allocation5 + $0x1fc8] sm:$0xff]
    %v3389 = vld [vmem:[#allocation5 + $0x1fd0] sm:$0xff]
    %v3390 = vld [vmem:[#allocation5 + $0x1fd8] sm:$0xff]
    %v3391 = vld [vmem:[#allocation5 + $0x1fe0] sm:$0xff]
    %v3392 = vld [vmem:[#allocation5 + $0x1fe8] sm:$0xff]
    %v3393 = vld [vmem:[#allocation5 + $0x1ff0] sm:$0xff]
    %v3394 = vld [vmem:[#allocation5 + $0x1ff8] sm:$0xff]
    %3395 = vmatprep.subr.mxu0 %v2492
    %3396 = vmatpush1.msra.mxu0 %v2491
    %3397 = vmatprep.subr.mxu0 %v2484
    %3398 = vmatpush1.msra.mxu0 %v2483
    %3399 = vmatprep.subr.mxu0 %v2476
    %3400 = vmatpush1.msra.mxu0 %v2475
    %3401 = vmatprep.subr.mxu0 %v2468
    %3402 = vmatpush1.msra.mxu0 %v2467
    %3403 = vmatprep.subr.mxu0 %v2460
    %3404 = vmatpush1.msra.mxu0 %v2459
    %3405 = vmatprep.subr.mxu0 %v2452
    %3406 = vmatpush1.msra.mxu0 %v2451
    %3407 = vmatprep.subr.mxu0 %v2444
    %3408 = vmatpush1.msra.mxu0 %v2443
    %3409 = vmatprep.subr.mxu0 %v2436
    %3410 = vmatpush1.msra.mxu0 %v2435
    %3411 = vmatprep.subr.mxu0 %v2428
    %3412 = vmatpush1.msra.mxu0 %v2427
    %3413 = vmatprep.subr.mxu0 %v2420
    %3414 = vmatpush1.msra.mxu0 %v2419
    %3415 = vmatprep.subr.mxu0 %v2412
    %3416 = vmatpush1.msra.mxu0 %v2411
    %3417 = vmatprep.subr.mxu0 %v2404
    %3418 = vmatpush1.msra.mxu0 %v2403
    %3419 = vmatprep.subr.mxu0 %v2396
    %3420 = vmatpush1.msra.mxu0 %v2395
    %3421 = vmatprep.subr.mxu0 %v2388
    %3422 = vmatpush1.msra.mxu0 %v2387
    %3423 = vmatprep.subr.mxu0 %v2380
    %3424 = vmatpush1.msra.mxu0 %v2379
    %3425 = vmatprep.subr.mxu0 %v2372
    %3426 = vmatpush1.msra.mxu0 %v2371
    %3427 = vmatprep.subr.mxu0 %v2620
    %3428 = vmatpush2.msra.mxu0 %v2619
    %3429 = vmatprep.subr.mxu0 %v2612
    %3430 = vmatpush2.msra.mxu0 %v2611
    %3431 = vmatprep.subr.mxu0 %v2604
    %3432 = vmatpush2.msra.mxu0 %v2603
    %3433 = vmatprep.subr.mxu0 %v2596
    %3434 = vmatpush2.msra.mxu0 %v2595
    %3435 = vmatprep.subr.mxu0 %v2588
    %3436 = vmatpush2.msra.mxu0 %v2587
    %3437 = vmatprep.subr.mxu0 %v2580
    %3438 = vmatpush2.msra.mxu0 %v2579
    %3439 = vmatprep.subr.mxu0 %v2572
    %3440 = vmatpush2.msra.mxu0 %v2571
    %3441 = vmatprep.subr.mxu0 %v2564
    %3442 = vmatpush2.msra.mxu0 %v2563
    %3443 = vmatprep.subr.mxu0 %v2556
    %3444 = vmatpush2.msra.mxu0 %v2555
    %3445 = vmatprep.subr.mxu0 %v2548
    %3446 = vmatpush2.msra.mxu0 %v2547
    %3447 = vmatprep.subr.mxu0 %v2540
    %3448 = vmatpush2.msra.mxu0 %v2539
    %3449 = vmatprep.subr.mxu0 %v2532
    %3450 = vmatpush2.msra.mxu0 %v2531
    %3451 = vmatprep.subr.mxu0 %v2524
    %3452 = vmatpush2.msra.mxu0 %v2523
    %3453 = vmatprep.subr.mxu0 %v2516
    %3454 = vmatpush2.msra.mxu0 %v2515
    %3455 = vmatprep.subr.mxu0 %v2508
    %3456 = vmatpush2.msra.mxu0 %v2507
    %3457 = vmatprep.subr.mxu0 %v2500
    %3458 = vmatpush2.msra.mxu0 %v2499
    %3459 = vmatprep.mubr.f32.mxu0 %v2303
    %3460 = vmatmul.mubr.f32.gmra.mxu0 %v2302
    %v3461 = vpop.f32.mrf.mxu0
    %v3462 = vadd.f32 0.0, %v3461
    %v3463 = vpop.f32.mrf.mxu0
    %v3464 = vadd.f32 0.0, %v3463
    %3465 = vdwg.mxu0
    %3466 = vmatprep.subr.mxu0 %v2748
    %3467 = vmatpush1.msra.mxu0 %v2747
    %3468 = vmatprep.subr.mxu0 %v2740
    %3469 = vmatpush1.msra.mxu0 %v2739
    %3470 = vmatprep.subr.mxu0 %v2732
    %3471 = vmatpush1.msra.mxu0 %v2731
    %3472 = vmatprep.subr.mxu0 %v2724
    %3473 = vmatpush1.msra.mxu0 %v2723
    %3474 = vmatprep.subr.mxu0 %v2716
    %3475 = vmatpush1.msra.mxu0 %v2715
    %3476 = vmatprep.subr.mxu0 %v2708
    %3477 = vmatpush1.msra.mxu0 %v2707
    %3478 = vmatprep.subr.mxu0 %v2700
    %3479 = vmatpush1.msra.mxu0 %v2699
    %3480 = vmatprep.subr.mxu0 %v2692
    %3481 = vmatpush1.msra.mxu0 %v2691
    %3482 = vmatprep.subr.mxu0 %v2684
    %3483 = vmatpush1.msra.mxu0 %v2683
    %3484 = vmatprep.subr.mxu0 %v2676
    %3485 = vmatpush1.msra.mxu0 %v2675
    %3486 = vmatprep.subr.mxu0 %v2668
    %3487 = vmatpush1.msra.mxu0 %v2667
    %3488 = vmatprep.subr.mxu0 %v2660
    %3489 = vmatpush1.msra.mxu0 %v2659
    %3490 = vmatprep.subr.mxu0 %v2652
    %3491 = vmatpush1.msra.mxu0 %v2651
    %3492 = vmatprep.subr.mxu0 %v2644
    %3493 = vmatpush1.msra.mxu0 %v2643
    %3494 = vmatprep.subr.mxu0 %v2636
    %3495 = vmatpush1.msra.mxu0 %v2635
    %3496 = vmatprep.subr.mxu0 %v2628
    %3497 = vmatpush1.msra.mxu0 %v2627
    %3498 = vmatprep.subr.mxu0 %v2876
    %3499 = vmatpush2.msra.mxu0 %v2875
    %3500 = vmatprep.subr.mxu0 %v2868
    %3501 = vmatpush2.msra.mxu0 %v2867
    %3502 = vmatprep.subr.mxu0 %v2860
    %3503 = vmatpush2.msra.mxu0 %v2859
    %3504 = vmatprep.subr.mxu0 %v2852
    %3505 = vmatpush2.msra.mxu0 %v2851
    %3506 = vmatprep.subr.mxu0 %v2844
    %3507 = vmatpush2.msra.mxu0 %v2843
    %3508 = vmatprep.subr.mxu0 %v2836
    %3509 = vmatpush2.msra.mxu0 %v2835
    %3510 = vmatprep.subr.mxu0 %v2828
    %3511 = vmatpush2.msra.mxu0 %v2827
    %3512 = vmatprep.subr.mxu0 %v2820
    %3513 = vmatpush2.msra.mxu0 %v2819
    %3514 = vmatprep.subr.mxu0 %v2812
    %3515 = vmatpush2.msra.mxu0 %v2811
    %3516 = vmatprep.subr.mxu0 %v2804
    %3517 = vmatpush2.msra.mxu0 %v2803
    %3518 = vmatprep.subr.mxu0 %v2796
    %3519 = vmatpush2.msra.mxu0 %v2795
    %3520 = vmatprep.subr.mxu0 %v2788
    %3521 = vmatpush2.msra.mxu0 %v2787
    %3522 = vmatprep.subr.mxu0 %v2780
    %3523 = vmatpush2.msra.mxu0 %v2779
    %3524 = vmatprep.subr.mxu0 %v2772
    %3525 = vmatpush2.msra.mxu0 %v2771
    %3526 = vmatprep.subr.mxu0 %v2764
    %3527 = vmatpush2.msra.mxu0 %v2763
    %3528 = vmatprep.subr.mxu0 %v2756
    %3529 = vmatpush2.msra.mxu0 %v2755
    %3530 = vmatprep.mubr.f32.mxu0 %v2316
    %3531 = vmatmul.mubr.f32.gmra.mxu0 %v2315
    %v3532 = vpop.f32.mrf.mxu0
    %v3533 = vadd.f32 %v3462, %v3532
    %v3534 = vpop.f32.mrf.mxu0
    %v3535 = vadd.f32 %v3464, %v3534
    %3536 = vdwg.mxu0
    %3537 = vmatprep.subr.mxu0 %v3004
    %3538 = vmatpush1.msra.mxu0 %v3003
    %3539 = vmatprep.subr.mxu0 %v2996
    %3540 = vmatpush1.msra.mxu0 %v2995
    %3541 = vmatprep.subr.mxu0 %v2988
    %3542 = vmatpush1.msra.mxu0 %v2987
    %3543 = vmatprep.subr.mxu0 %v2980
    %3544 = vmatpush1.msra.mxu0 %v2979
    %3545 = vmatprep.subr.mxu0 %v2972
    %3546 = vmatpush1.msra.mxu0 %v2971
    %3547 = vmatprep.subr.mxu0 %v2964
    %3548 = vmatpush1.msra.mxu0 %v2963
    %3549 = vmatprep.subr.mxu0 %v2956
    %3550 = vmatpush1.msra.mxu0 %v2955
    %3551 = vmatprep.subr.mxu0 %v2948
    %3552 = vmatpush1.msra.mxu0 %v2947
    %3553 = vmatprep.subr.mxu0 %v2940
    %3554 = vmatpush1.msra.mxu0 %v2939
    %3555 = vmatprep.subr.mxu0 %v2932
    %3556 = vmatpush1.msra.mxu0 %v2931
    %3557 = vmatprep.subr.mxu0 %v2924
    %3558 = vmatpush1.msra.mxu0 %v2923
    %3559 = vmatprep.subr.mxu0 %v2916
    %3560 = vmatpush1.msra.mxu0 %v2915
    %3561 = vmatprep.subr.mxu0 %v2908
    %3562 = vmatpush1.msra.mxu0 %v2907
    %3563 = vmatprep.subr.mxu0 %v2900
    %3564 = vmatpush1.msra.mxu0 %v2899
    %3565 = vmatprep.subr.mxu0 %v2892
    %3566 = vmatpush1.msra.mxu0 %v2891
    %3567 = vmatprep.subr.mxu0 %v2884
    %3568 = vmatpush1.msra.mxu0 %v2883
    %3569 = vmatprep.subr.mxu0 %v3132
    %3570 = vmatpush2.msra.mxu0 %v3131
    %3571 = vmatprep.subr.mxu0 %v3124
    %3572 = vmatpush2.msra.mxu0 %v3123
    %3573 = vmatprep.subr.mxu0 %v3116
    %3574 = vmatpush2.msra.mxu0 %v3115
    %3575 = vmatprep.subr.mxu0 %v3108
    %3576 = vmatpush2.msra.mxu0 %v3107
    %3577 = vmatprep.subr.mxu0 %v3100
    %3578 = vmatpush2.msra.mxu0 %v3099
    %3579 = vmatprep.subr.mxu0 %v3092
    %3580 = vmatpush2.msra.mxu0 %v3091
    %3581 = vmatprep.subr.mxu0 %v3084
    %3582 = vmatpush2.msra.mxu0 %v3083
    %3583 = vmatprep.subr.mxu0 %v3076
    %3584 = vmatpush2.msra.mxu0 %v3075
    %3585 = vmatprep.subr.mxu0 %v3068
    %3586 = vmatpush2.msra.mxu0 %v3067
    %3587 = vmatprep.subr.mxu0 %v3060
    %3588 = vmatpush2.msra.mxu0 %v3059
    %3589 = vmatprep.subr.mxu0 %v3052
    %3590 = vmatpush2.msra.mxu0 %v3051
    %3591 = vmatprep.subr.mxu0 %v3044
    %3592 = vmatpush2.msra.mxu0 %v3043
    %3593 = vmatprep.subr.mxu0 %v3036
    %3594 = vmatpush2.msra.mxu0 %v3035
    %3595 = vmatprep.subr.mxu0 %v3028
    %3596 = vmatpush2.msra.mxu0 %v3027
    %3597 = vmatprep.subr.mxu0 %v3020
    %3598 = vmatpush2.msra.mxu0 %v3019
    %3599 = vmatprep.subr.mxu0 %v3012
    %3600 = vmatpush2.msra.mxu0 %v3011
    %3601 = vmatprep.mubr.f32.mxu0 %v2357
    %3602 = vmatmul.mubr.f32.gmra.mxu0 %v2356
    %v3603 = vpop.f32.mrf.mxu0
    %v3604 = vadd.f32 %v3533, %v3603
    %v3605 = vpop.f32.mrf.mxu0
    %v3606 = vadd.f32 %v3535, %v3605
    %3607 = vdwg.mxu0
    %3608 = vmatprep.subr.mxu0 %v3260
    %3609 = vmatpush1.msra.mxu0 %v3259
    %3610 = vmatprep.subr.mxu0 %v3252
    %3611 = vmatpush1.msra.mxu0 %v3251
    %3612 = vmatprep.subr.mxu0 %v3244
    %3613 = vmatpush1.msra.mxu0 %v3243
    %3614 = vmatprep.subr.mxu0 %v3236
    %3615 = vmatpush1.msra.mxu0 %v3235
    %3616 = vmatprep.subr.mxu0 %v3228
    %3617 = vmatpush1.msra.mxu0 %v3227
    %3618 = vmatprep.subr.mxu0 %v3220
    %3619 = vmatpush1.msra.mxu0 %v3219
    %3620 = vmatprep.subr.mxu0 %v3212
    %3621 = vmatpush1.msra.mxu0 %v3211
    %3622 = vmatprep.subr.mxu0 %v3204
    %3623 = vmatpush1.msra.mxu0 %v3203
    %3624 = vmatprep.subr.mxu0 %v3196
    %3625 = vmatpush1.msra.mxu0 %v3195
    %3626 = vmatprep.subr.mxu0 %v3188
    %3627 = vmatpush1.msra.mxu0 %v3187
    %3628 = vmatprep.subr.mxu0 %v3180
    %3629 = vmatpush1.msra.mxu0 %v3179
    %3630 = vmatprep.subr.mxu0 %v3172
    %3631 = vmatpush1.msra.mxu0 %v3171
    %3632 = vmatprep.subr.mxu0 %v3164
    %3633 = vmatpush1.msra.mxu0 %v3163
    %3634 = vmatprep.subr.mxu0 %v3156
    %3635 = vmatpush1.msra.mxu0 %v3155
    %3636 = vmatprep.subr.mxu0 %v3148
    %3637 = vmatpush1.msra.mxu0 %v3147
    %3638 = vmatprep.subr.mxu0 %v3140
    %3639 = vmatpush1.msra.mxu0 %v3139
    %3640 = vmatprep.subr.mxu0 %v3388
    %3641 = vmatpush2.msra.mxu0 %v3387
    %3642 = vmatprep.subr.mxu0 %v3380
    %3643 = vmatpush2.msra.mxu0 %v3379
    %3644 = vmatprep.subr.mxu0 %v3372
    %3645 = vmatpush2.msra.mxu0 %v3371
    %3646 = vmatprep.subr.mxu0 %v3364
    %3647 = vmatpush2.msra.mxu0 %v3363
    %3648 = vmatprep.subr.mxu0 %v3356
    %3649 = vmatpush2.msra.mxu0 %v3355
    %3650 = vmatprep.subr.mxu0 %v3348
    %3651 = vmatpush2.msra.mxu0 %v3347
    %3652 = vmatprep.subr.mxu0 %v3340
    %3653 = vmatpush2.msra.mxu0 %v3339
    %3654 = vmatprep.subr.mxu0 %v3332
    %3655 = vmatpush2.msra.mxu0 %v3331
    %3656 = vmatprep.subr.mxu0 %v3324
    %3657 = vmatpush2.msra.mxu0 %v3323
    %3658 = vmatprep.subr.mxu0 %v3316
    %3659 = vmatpush2.msra.mxu0 %v3315
    %3660 = vmatprep.subr.mxu0 %v3308
    %3661 = vmatpush2.msra.mxu0 %v3307
    %3662 = vmatprep.subr.mxu0 %v3300
    %3663 = vmatpush2.msra.mxu0 %v3299
    %3664 = vmatprep.subr.mxu0 %v3292
    %3665 = vmatpush2.msra.mxu0 %v3291
    %3666 = vmatprep.subr.mxu0 %v3284
    %3667 = vmatpush2.msra.mxu0 %v3283
    %3668 = vmatprep.subr.mxu0 %v3276
    %3669 = vmatpush2.msra.mxu0 %v3275
    %3670 = vmatprep.subr.mxu0 %v3268
    %3671 = vmatpush2.msra.mxu0 %v3267
    %3672 = vmatprep.mubr.f32.mxu0 %v2370
    %3673 = vmatmul.mubr.f32.gmra.mxu0 %v2369
    %v3674 = vpop.f32.mrf.mxu0
    %v3675 = vadd.f32 %v3604, %v3674
    %v3676 = vpop.f32.mrf.mxu0
    %v3677 = vadd.f32 %v3606, %v3676
    %3678 = vdwg.mxu0
    %3679 = vmatprep.subr.mxu0 %v2494
    %3680 = vmatpush1.msra.mxu0 %v2493
    %3681 = vmatprep.subr.mxu0 %v2486
    %3682 = vmatpush1.msra.mxu0 %v2485
    %3683 = vmatprep.subr.mxu0 %v2478
    %3684 = vmatpush1.msra.mxu0 %v2477
    %3685 = vmatprep.subr.mxu0 %v2470
    %3686 = vmatpush1.msra.mxu0 %v2469
    %3687 = vmatprep.subr.mxu0 %v2462
    %3688 = vmatpush1.msra.mxu0 %v2461
    %3689 = vmatprep.subr.mxu0 %v2454
    %3690 = vmatpush1.msra.mxu0 %v2453
    %3691 = vmatprep.subr.mxu0 %v2446
    %3692 = vmatpush1.msra.mxu0 %v2445
    %3693 = vmatprep.subr.mxu0 %v2438
    %3694 = vmatpush1.msra.mxu0 %v2437
    %3695 = vmatprep.subr.mxu0 %v2430
    %3696 = vmatpush1.msra.mxu0 %v2429
    %3697 = vmatprep.subr.mxu0 %v2422
    %3698 = vmatpush1.msra.mxu0 %v2421
    %3699 = vmatprep.subr.mxu0 %v2414
    %3700 = vmatpush1.msra.mxu0 %v2413
    %3701 = vmatprep.subr.mxu0 %v2406
    %3702 = vmatpush1.msra.mxu0 %v2405
    %3703 = vmatprep.subr.mxu0 %v2398
    %3704 = vmatpush1.msra.mxu0 %v2397
    %3705 = vmatprep.subr.mxu0 %v2390
    %3706 = vmatpush1.msra.mxu0 %v2389
    %3707 = vmatprep.subr.mxu0 %v2382
    %3708 = vmatpush1.msra.mxu0 %v2381
    %3709 = vmatprep.subr.mxu0 %v2374
    %3710 = vmatpush1.msra.mxu0 %v2373
    %3711 = vmatprep.subr.mxu0 %v2622
    %3712 = vmatpush2.msra.mxu0 %v2621
    %3713 = vmatprep.subr.mxu0 %v2614
    %3714 = vmatpush2.msra.mxu0 %v2613
    %3715 = vmatprep.subr.mxu0 %v2606
    %3716 = vmatpush2.msra.mxu0 %v2605
    %3717 = vmatprep.subr.mxu0 %v2598
    %3718 = vmatpush2.msra.mxu0 %v2597
    %3719 = vmatprep.subr.mxu0 %v2590
    %3720 = vmatpush2.msra.mxu0 %v2589
    %3721 = vmatprep.subr.mxu0 %v2582
    %3722 = vmatpush2.msra.mxu0 %v2581
    %3723 = vmatprep.subr.mxu0 %v2574
    %3724 = vmatpush2.msra.mxu0 %v2573
    %3725 = vmatprep.subr.mxu0 %v2566
    %3726 = vmatpush2.msra.mxu0 %v2565
    %3727 = vmatprep.subr.mxu0 %v2558
    %3728 = vmatpush2.msra.mxu0 %v2557
    %3729 = vmatprep.subr.mxu0 %v2550
    %3730 = vmatpush2.msra.mxu0 %v2549
    %3731 = vmatprep.subr.mxu0 %v2542
    %3732 = vmatpush2.msra.mxu0 %v2541
    %3733 = vmatprep.subr.mxu0 %v2534
    %3734 = vmatpush2.msra.mxu0 %v2533
    %3735 = vmatprep.subr.mxu0 %v2526
    %3736 = vmatpush2.msra.mxu0 %v2525
    %3737 = vmatprep.subr.mxu0 %v2518
    %3738 = vmatpush2.msra.mxu0 %v2517
    %3739 = vmatprep.subr.mxu0 %v2510
    %3740 = vmatpush2.msra.mxu0 %v2509
    %3741 = vmatprep.subr.mxu0 %v2502
    %3742 = vmatpush2.msra.mxu0 %v2501
    %3743 = vmatprep.mubr.f32.mxu0 %v2303
    %3744 = vmatmul.mubr.f32.gmra.mxu0 %v2302
    %v3745 = vpop.f32.mrf.mxu0
    %v3746 = vadd.f32 0.0, %v3745
    %v3747 = vpop.f32.mrf.mxu0
    %v3748 = vadd.f32 0.0, %v3747
    %3749 = vdwg.mxu0
    %3750 = vmatprep.subr.mxu0 %v2750
    %3751 = vmatpush1.msra.mxu0 %v2749
    %3752 = vmatprep.subr.mxu0 %v2742
    %3753 = vmatpush1.msra.mxu0 %v2741
    %3754 = vmatprep.subr.mxu0 %v2734
    %3755 = vmatpush1.msra.mxu0 %v2733
    %3756 = vmatprep.subr.mxu0 %v2726
    %3757 = vmatpush1.msra.mxu0 %v2725
    %3758 = vmatprep.subr.mxu0 %v2718
    %3759 = vmatpush1.msra.mxu0 %v2717
    %3760 = vmatprep.subr.mxu0 %v2710
    %3761 = vmatpush1.msra.mxu0 %v2709
    %3762 = vmatprep.subr.mxu0 %v2702
    %3763 = vmatpush1.msra.mxu0 %v2701
    %3764 = vmatprep.subr.mxu0 %v2694
    %3765 = vmatpush1.msra.mxu0 %v2693
    %3766 = vmatprep.subr.mxu0 %v2686
    %3767 = vmatpush1.msra.mxu0 %v2685
    %3768 = vmatprep.subr.mxu0 %v2678
    %3769 = vmatpush1.msra.mxu0 %v2677
    %3770 = vmatprep.subr.mxu0 %v2670
    %3771 = vmatpush1.msra.mxu0 %v2669
    %3772 = vmatprep.subr.mxu0 %v2662
    %3773 = vmatpush1.msra.mxu0 %v2661
    %3774 = vmatprep.subr.mxu0 %v2654
    %3775 = vmatpush1.msra.mxu0 %v2653
    %3776 = vmatprep.subr.mxu0 %v2646
    %3777 = vmatpush1.msra.mxu0 %v2645
    %3778 = vmatprep.subr.mxu0 %v2638
    %3779 = vmatpush1.msra.mxu0 %v2637
    %3780 = vmatprep.subr.mxu0 %v2630
    %3781 = vmatpush1.msra.mxu0 %v2629
    %3782 = vmatprep.subr.mxu0 %v2878
    %3783 = vmatpush2.msra.mxu0 %v2877
    %3784 = vmatprep.subr.mxu0 %v2870
    %3785 = vmatpush2.msra.mxu0 %v2869
    %3786 = vmatprep.subr.mxu0 %v2862
    %3787 = vmatpush2.msra.mxu0 %v2861
    %3788 = vmatprep.subr.mxu0 %v2854
    %3789 = vmatpush2.msra.mxu0 %v2853
    %3790 = vmatprep.subr.mxu0 %v2846
    %3791 = vmatpush2.msra.mxu0 %v2845
    %3792 = vmatprep.subr.mxu0 %v2838
    %3793 = vmatpush2.msra.mxu0 %v2837
    %3794 = vmatprep.subr.mxu0 %v2830
    %3795 = vmatpush2.msra.mxu0 %v2829
    %3796 = vmatprep.subr.mxu0 %v2822
    %3797 = vmatpush2.msra.mxu0 %v2821
    %3798 = vmatprep.subr.mxu0 %v2814
    %3799 = vmatpush2.msra.mxu0 %v2813
    %3800 = vmatprep.subr.mxu0 %v2806
    %3801 = vmatpush2.msra.mxu0 %v2805
    %3802 = vmatprep.subr.mxu0 %v2798
    %3803 = vmatpush2.msra.mxu0 %v2797
    %3804 = vmatprep.subr.mxu0 %v2790
    %3805 = vmatpush2.msra.mxu0 %v2789
    %3806 = vmatprep.subr.mxu0 %v2782
    %3807 = vmatpush2.msra.mxu0 %v2781
    %3808 = vmatprep.subr.mxu0 %v2774
    %3809 = vmatpush2.msra.mxu0 %v2773
    %3810 = vmatprep.subr.mxu0 %v2766
    %3811 = vmatpush2.msra.mxu0 %v2765
    %3812 = vmatprep.subr.mxu0 %v2758
    %3813 = vmatpush2.msra.mxu0 %v2757
    %3814 = vmatprep.mubr.f32.mxu0 %v2316
    %3815 = vmatmul.mubr.f32.gmra.mxu0 %v2315
    %v3816 = vpop.f32.mrf.mxu0
    %v3817 = vadd.f32 %v3746, %v3816
    %v3818 = vpop.f32.mrf.mxu0
    %v3819 = vadd.f32 %v3748, %v3818
    %3820 = vdwg.mxu0
    %3821 = vmatprep.subr.mxu0 %v3006
    %3822 = vmatpush1.msra.mxu0 %v3005
    %3823 = vmatprep.subr.mxu0 %v2998
    %3824 = vmatpush1.msra.mxu0 %v2997
    %3825 = vmatprep.subr.mxu0 %v2990
    %3826 = vmatpush1.msra.mxu0 %v2989
    %3827 = vmatprep.subr.mxu0 %v2982
    %3828 = vmatpush1.msra.mxu0 %v2981
    %3829 = vmatprep.subr.mxu0 %v2974
    %3830 = vmatpush1.msra.mxu0 %v2973
    %3831 = vmatprep.subr.mxu0 %v2966
    %3832 = vmatpush1.msra.mxu0 %v2965
    %3833 = vmatprep.subr.mxu0 %v2958
    %3834 = vmatpush1.msra.mxu0 %v2957
    %3835 = vmatprep.subr.mxu0 %v2950
    %3836 = vmatpush1.msra.mxu0 %v2949
    %3837 = vmatprep.subr.mxu0 %v2942
    %3838 = vmatpush1.msra.mxu0 %v2941
    %3839 = vmatprep.subr.mxu0 %v2934
    %3840 = vmatpush1.msra.mxu0 %v2933
    %3841 = vmatprep.subr.mxu0 %v2926
    %3842 = vmatpush1.msra.mxu0 %v2925
    %3843 = vmatprep.subr.mxu0 %v2918
    %3844 = vmatpush1.msra.mxu0 %v2917
    %3845 = vmatprep.subr.mxu0 %v2910
    %3846 = vmatpush1.msra.mxu0 %v2909
    %3847 = vmatprep.subr.mxu0 %v2902
    %3848 = vmatpush1.msra.mxu0 %v2901
    %3849 = vmatprep.subr.mxu0 %v2894
    %3850 = vmatpush1.msra.mxu0 %v2893
    %3851 = vmatprep.subr.mxu0 %v2886
    %3852 = vmatpush1.msra.mxu0 %v2885
    %3853 = vmatprep.subr.mxu0 %v3134
    %3854 = vmatpush2.msra.mxu0 %v3133
    %3855 = vmatprep.subr.mxu0 %v3126
    %3856 = vmatpush2.msra.mxu0 %v3125
    %3857 = vmatprep.subr.mxu0 %v3118
    %3858 = vmatpush2.msra.mxu0 %v3117
    %3859 = vmatprep.subr.mxu0 %v3110
    %3860 = vmatpush2.msra.mxu0 %v3109
    %3861 = vmatprep.subr.mxu0 %v3102
    %3862 = vmatpush2.msra.mxu0 %v3101
    %3863 = vmatprep.subr.mxu0 %v3094
    %3864 = vmatpush2.msra.mxu0 %v3093
    %3865 = vmatprep.subr.mxu0 %v3086
    %3866 = vmatpush2.msra.mxu0 %v3085
    %3867 = vmatprep.subr.mxu0 %v3078
    %3868 = vmatpush2.msra.mxu0 %v3077
    %3869 = vmatprep.subr.mxu0 %v3070
    %3870 = vmatpush2.msra.mxu0 %v3069
    %3871 = vmatprep.subr.mxu0 %v3062
    %3872 = vmatpush2.msra.mxu0 %v3061
    %3873 = vmatprep.subr.mxu0 %v3054
    %3874 = vmatpush2.msra.mxu0 %v3053
    %3875 = vmatprep.subr.mxu0 %v3046
    %3876 = vmatpush2.msra.mxu0 %v3045
    %3877 = vmatprep.subr.mxu0 %v3038
    %3878 = vmatpush2.msra.mxu0 %v3037
    %3879 = vmatprep.subr.mxu0 %v3030
    %3880 = vmatpush2.msra.mxu0 %v3029
    %3881 = vmatprep.subr.mxu0 %v3022
    %3882 = vmatpush2.msra.mxu0 %v3021
    %3883 = vmatprep.subr.mxu0 %v3014
    %3884 = vmatpush2.msra.mxu0 %v3013
    %3885 = vmatprep.mubr.f32.mxu0 %v2357
    %3886 = vmatmul.mubr.f32.gmra.mxu0 %v2356
    %v3887 = vpop.f32.mrf.mxu0
    %v3888 = vadd.f32 %v3817, %v3887
    %v3889 = vpop.f32.mrf.mxu0
    %v3890 = vadd.f32 %v3819, %v3889
    %3891 = vdwg.mxu0
    %3892 = vmatprep.subr.mxu0 %v3262
    %3893 = vmatpush1.msra.mxu0 %v3261
    %3894 = vmatprep.subr.mxu0 %v3254
    %3895 = vmatpush1.msra.mxu0 %v3253
    %3896 = vmatprep.subr.mxu0 %v3246
    %3897 = vmatpush1.msra.mxu0 %v3245
    %3898 = vmatprep.subr.mxu0 %v3238
    %3899 = vmatpush1.msra.mxu0 %v3237
    %3900 = vmatprep.subr.mxu0 %v3230
    %3901 = vmatpush1.msra.mxu0 %v3229
    %3902 = vmatprep.subr.mxu0 %v3222
    %3903 = vmatpush1.msra.mxu0 %v3221
    %3904 = vmatprep.subr.mxu0 %v3214
    %3905 = vmatpush1.msra.mxu0 %v3213
    %3906 = vmatprep.subr.mxu0 %v3206
    %3907 = vmatpush1.msra.mxu0 %v3205
    %3908 = vmatprep.subr.mxu0 %v3198
    %3909 = vmatpush1.msra.mxu0 %v3197
    %3910 = vmatprep.subr.mxu0 %v3190
    %3911 = vmatpush1.msra.mxu0 %v3189
    %3912 = vmatprep.subr.mxu0 %v3182
    %3913 = vmatpush1.msra.mxu0 %v3181
    %3914 = vmatprep.subr.mxu0 %v3174
    %3915 = vmatpush1.msra.mxu0 %v3173
    %3916 = vmatprep.subr.mxu0 %v3166
    %3917 = vmatpush1.msra.mxu0 %v3165
    %3918 = vmatprep.subr.mxu0 %v3158
    %3919 = vmatpush1.msra.mxu0 %v3157
    %3920 = vmatprep.subr.mxu0 %v3150
    %3921 = vmatpush1.msra.mxu0 %v3149
    %3922 = vmatprep.subr.mxu0 %v3142
    %3923 = vmatpush1.msra.mxu0 %v3141
    %3924 = vmatprep.subr.mxu0 %v3390
    %3925 = vmatpush2.msra.mxu0 %v3389
    %3926 = vmatprep.subr.mxu0 %v3382
    %3927 = vmatpush2.msra.mxu0 %v3381
    %3928 = vmatprep.subr.mxu0 %v3374
    %3929 = vmatpush2.msra.mxu0 %v3373
    %3930 = vmatprep.subr.mxu0 %v3366
    %3931 = vmatpush2.msra.mxu0 %v3365
    %3932 = vmatprep.subr.mxu0 %v3358
    %3933 = vmatpush2.msra.mxu0 %v3357
    %3934 = vmatprep.subr.mxu0 %v3350
    %3935 = vmatpush2.msra.mxu0 %v3349
    %3936 = vmatprep.subr.mxu0 %v3342
    %3937 = vmatpush2.msra.mxu0 %v3341
    %3938 = vmatprep.subr.mxu0 %v3334
    %3939 = vmatpush2.msra.mxu0 %v3333
    %3940 = vmatprep.subr.mxu0 %v3326
    %3941 = vmatpush2.msra.mxu0 %v3325
    %3942 = vmatprep.subr.mxu0 %v3318
    %3943 = vmatpush2.msra.mxu0 %v3317
    %3944 = vmatprep.subr.mxu0 %v3310
    %3945 = vmatpush2.msra.mxu0 %v3309
    %3946 = vmatprep.subr.mxu0 %v3302
    %3947 = vmatpush2.msra.mxu0 %v3301
    %3948 = vmatprep.subr.mxu0 %v3294
    %3949 = vmatpush2.msra.mxu0 %v3293
    %3950 = vmatprep.subr.mxu0 %v3286
    %3951 = vmatpush2.msra.mxu0 %v3285
    %3952 = vmatprep.subr.mxu0 %v3278
    %3953 = vmatpush2.msra.mxu0 %v3277
    %3954 = vmatprep.subr.mxu0 %v3270
    %3955 = vmatpush2.msra.mxu0 %v3269
    %3956 = vmatprep.mubr.f32.mxu0 %v2370
    %3957 = vmatmul.mubr.f32.gmra.mxu0 %v2369
    %v3958 = vpop.f32.mrf.mxu0
    %v3959 = vadd.f32 %v3888, %v3958
    %v3960 = vpop.f32.mrf.mxu0
    %v3961 = vadd.f32 %v3890, %v3960
    %3962 = vdwg.mxu0
    %3963 = vmatprep.subr.mxu0 %v2496
    %3964 = vmatpush1.msra.mxu0 %v2495
    %3965 = vmatprep.subr.mxu0 %v2488
    %3966 = vmatpush1.msra.mxu0 %v2487
    %3967 = vmatprep.subr.mxu0 %v2480
    %3968 = vmatpush1.msra.mxu0 %v2479
    %3969 = vmatprep.subr.mxu0 %v2472
    %3970 = vmatpush1.msra.mxu0 %v2471
    %3971 = vmatprep.subr.mxu0 %v2464
    %3972 = vmatpush1.msra.mxu0 %v2463
    %3973 = vmatprep.subr.mxu0 %v2456
    %3974 = vmatpush1.msra.mxu0 %v2455
    %3975 = vmatprep.subr.mxu0 %v2448
    %3976 = vmatpush1.msra.mxu0 %v2447
    %3977 = vmatprep.subr.mxu0 %v2440
    %3978 = vmatpush1.msra.mxu0 %v2439
    %3979 = vmatprep.subr.mxu0 %v2432
    %3980 = vmatpush1.msra.mxu0 %v2431
    %3981 = vmatprep.subr.mxu0 %v2424
    %3982 = vmatpush1.msra.mxu0 %v2423
    %3983 = vmatprep.subr.mxu0 %v2416
    %3984 = vmatpush1.msra.mxu0 %v2415
    %3985 = vmatprep.subr.mxu0 %v2408
    %3986 = vmatpush1.msra.mxu0 %v2407
    %3987 = vmatprep.subr.mxu0 %v2400
    %3988 = vmatpush1.msra.mxu0 %v2399
    %3989 = vmatprep.subr.mxu0 %v2392
    %3990 = vmatpush1.msra.mxu0 %v2391
    %3991 = vmatprep.subr.mxu0 %v2384
    %3992 = vmatpush1.msra.mxu0 %v2383
    %3993 = vmatprep.subr.mxu0 %v2376
    %3994 = vmatpush1.msra.mxu0 %v2375
    %3995 = vmatprep.subr.mxu0 %v2624
    %3996 = vmatpush2.msra.mxu0 %v2623
    %3997 = vmatprep.subr.mxu0 %v2616
    %3998 = vmatpush2.msra.mxu0 %v2615
    %3999 = vmatprep.subr.mxu0 %v2608
    %4000 = vmatpush2.msra.mxu0 %v2607
    %4001 = vmatprep.subr.mxu0 %v2600
    %4002 = vmatpush2.msra.mxu0 %v2599
    %4003 = vmatprep.subr.mxu0 %v2592
    %4004 = vmatpush2.msra.mxu0 %v2591
    %4005 = vmatprep.subr.mxu0 %v2584
    %4006 = vmatpush2.msra.mxu0 %v2583
    %4007 = vmatprep.subr.mxu0 %v2576
    %4008 = vmatpush2.msra.mxu0 %v2575
    %4009 = vmatprep.subr.mxu0 %v2568
    %4010 = vmatpush2.msra.mxu0 %v2567
    %4011 = vmatprep.subr.mxu0 %v2560
    %4012 = vmatpush2.msra.mxu0 %v2559
    %4013 = vmatprep.subr.mxu0 %v2552
    %4014 = vmatpush2.msra.mxu0 %v2551
    %4015 = vmatprep.subr.mxu0 %v2544
    %4016 = vmatpush2.msra.mxu0 %v2543
    %4017 = vmatprep.subr.mxu0 %v2536
    %4018 = vmatpush2.msra.mxu0 %v2535
    %4019 = vmatprep.subr.mxu0 %v2528
    %4020 = vmatpush2.msra.mxu0 %v2527
    %4021 = vmatprep.subr.mxu0 %v2520
    %4022 = vmatpush2.msra.mxu0 %v2519
    %4023 = vmatprep.subr.mxu0 %v2512
    %4024 = vmatpush2.msra.mxu0 %v2511
    %4025 = vmatprep.subr.mxu0 %v2504
    %4026 = vmatpush2.msra.mxu0 %v2503
    %4027 = vmatprep.mubr.f32.mxu0 %v2303
    %4028 = vmatmul.mubr.f32.gmra.mxu0 %v2302
    %v4029 = vpop.f32.mrf.mxu0
    %v4030 = vadd.f32 0.0, %v4029
    %v4031 = vpop.f32.mrf.mxu0
    %v4032 = vadd.f32 0.0, %v4031
    %4033 = vdwg.mxu0
    %4034 = vmatprep.subr.mxu0 %v2752
    %4035 = vmatpush1.msra.mxu0 %v2751
    %4036 = vmatprep.subr.mxu0 %v2744
    %4037 = vmatpush1.msra.mxu0 %v2743
    %4038 = vmatprep.subr.mxu0 %v2736
    %4039 = vmatpush1.msra.mxu0 %v2735
    %4040 = vmatprep.subr.mxu0 %v2728
    %4041 = vmatpush1.msra.mxu0 %v2727
    %4042 = vmatprep.subr.mxu0 %v2720
    %4043 = vmatpush1.msra.mxu0 %v2719
    %4044 = vmatprep.subr.mxu0 %v2712
    %4045 = vmatpush1.msra.mxu0 %v2711
    %4046 = vmatprep.subr.mxu0 %v2704
    %4047 = vmatpush1.msra.mxu0 %v2703
    %4048 = vmatprep.subr.mxu0 %v2696
    %4049 = vmatpush1.msra.mxu0 %v2695
    %4050 = vmatprep.subr.mxu0 %v2688
    %4051 = vmatpush1.msra.mxu0 %v2687
    %4052 = vmatprep.subr.mxu0 %v2680
    %4053 = vmatpush1.msra.mxu0 %v2679
    %4054 = vmatprep.subr.mxu0 %v2672
    %4055 = vmatpush1.msra.mxu0 %v2671
    %4056 = vmatprep.subr.mxu0 %v2664
    %4057 = vmatpush1.msra.mxu0 %v2663
    %4058 = vmatprep.subr.mxu0 %v2656
    %4059 = vmatpush1.msra.mxu0 %v2655
    %4060 = vmatprep.subr.mxu0 %v2648
    %4061 = vmatpush1.msra.mxu0 %v2647
    %4062 = vmatprep.subr.mxu0 %v2640
    %4063 = vmatpush1.msra.mxu0 %v2639
    %4064 = vmatprep.subr.mxu0 %v2632
    %4065 = vmatpush1.msra.mxu0 %v2631
    %4066 = vmatprep.subr.mxu0 %v2880
    %4067 = vmatpush2.msra.mxu0 %v2879
    %4068 = vmatprep.subr.mxu0 %v2872
    %4069 = vmatpush2.msra.mxu0 %v2871
    %4070 = vmatprep.subr.mxu0 %v2864
    %4071 = vmatpush2.msra.mxu0 %v2863
    %4072 = vmatprep.subr.mxu0 %v2856
    %4073 = vmatpush2.msra.mxu0 %v2855
    %4074 = vmatprep.subr.mxu0 %v2848
    %4075 = vmatpush2.msra.mxu0 %v2847
    %4076 = vmatprep.subr.mxu0 %v2840
    %4077 = vmatpush2.msra.mxu0 %v2839
    %4078 = vmatprep.subr.mxu0 %v2832
    %4079 = vmatpush2.msra.mxu0 %v2831
    %4080 = vmatprep.subr.mxu0 %v2824
    %4081 = vmatpush2.msra.mxu0 %v2823
    %4082 = vmatprep.subr.mxu0 %v2816
    %4083 = vmatpush2.msra.mxu0 %v2815
    %4084 = vmatprep.subr.mxu0 %v2808
    %4085 = vmatpush2.msra.mxu0 %v2807
    %4086 = vmatprep.subr.mxu0 %v2800
    %4087 = vmatpush2.msra.mxu0 %v2799
    %4088 = vmatprep.subr.mxu0 %v2792
    %4089 = vmatpush2.msra.mxu0 %v2791
    %4090 = vmatprep.subr.mxu0 %v2784
    %4091 = vmatpush2.msra.mxu0 %v2783
    %4092 = vmatprep.subr.mxu0 %v2776
    %4093 = vmatpush2.msra.mxu0 %v2775
    %4094 = vmatprep.subr.mxu0 %v2768
    %4095 = vmatpush2.msra.mxu0 %v2767
    %4096 = vmatprep.subr.mxu0 %v2760
    %4097 = vmatpush2.msra.mxu0 %v2759
    %4098 = vmatprep.mubr.f32.mxu0 %v2316
    %4099 = vmatmul.mubr.f32.gmra.mxu0 %v2315
    %v4100 = vpop.f32.mrf.mxu0
    %v4101 = vadd.f32 %v4030, %v4100
    %v4102 = vpop.f32.mrf.mxu0
    %v4103 = vadd.f32 %v4032, %v4102
    %4104 = vdwg.mxu0
    %4105 = vmatprep.subr.mxu0 %v3008
    %4106 = vmatpush1.msra.mxu0 %v3007
    %4107 = vmatprep.subr.mxu0 %v3000
    %4108 = vmatpush1.msra.mxu0 %v2999
    %4109 = vmatprep.subr.mxu0 %v2992
    %4110 = vmatpush1.msra.mxu0 %v2991
    %4111 = vmatprep.subr.mxu0 %v2984
    %4112 = vmatpush1.msra.mxu0 %v2983
    %4113 = vmatprep.subr.mxu0 %v2976
    %4114 = vmatpush1.msra.mxu0 %v2975
    %4115 = vmatprep.subr.mxu0 %v2968
    %4116 = vmatpush1.msra.mxu0 %v2967
    %4117 = vmatprep.subr.mxu0 %v2960
    %4118 = vmatpush1.msra.mxu0 %v2959
    %4119 = vmatprep.subr.mxu0 %v2952
    %4120 = vmatpush1.msra.mxu0 %v2951
    %4121 = vmatprep.subr.mxu0 %v2944
    %4122 = vmatpush1.msra.mxu0 %v2943
    %4123 = vmatprep.subr.mxu0 %v2936
    %4124 = vmatpush1.msra.mxu0 %v2935
    %4125 = vmatprep.subr.mxu0 %v2928
    %4126 = vmatpush1.msra.mxu0 %v2927
    %4127 = vmatprep.subr.mxu0 %v2920
    %4128 = vmatpush1.msra.mxu0 %v2919
    %4129 = vmatprep.subr.mxu0 %v2912
    %4130 = vmatpush1.msra.mxu0 %v2911
    %4131 = vmatprep.subr.mxu0 %v2904
    %4132 = vmatpush1.msra.mxu0 %v2903
    %4133 = vmatprep.subr.mxu0 %v2896
    %4134 = vmatpush1.msra.mxu0 %v2895
    %4135 = vmatprep.subr.mxu0 %v2888
    %4136 = vmatpush1.msra.mxu0 %v2887
    %4137 = vmatprep.subr.mxu0 %v3136
    %4138 = vmatpush2.msra.mxu0 %v3135
    %4139 = vmatprep.subr.mxu0 %v3128
    %4140 = vmatpush2.msra.mxu0 %v3127
    %4141 = vmatprep.subr.mxu0 %v3120
    %4142 = vmatpush2.msra.mxu0 %v3119
    %4143 = vmatprep.subr.mxu0 %v3112
    %4144 = vmatpush2.msra.mxu0 %v3111
    %4145 = vmatprep.subr.mxu0 %v3104
    %4146 = vmatpush2.msra.mxu0 %v3103
    %4147 = vmatprep.subr.mxu0 %v3096
    %4148 = vmatpush2.msra.mxu0 %v3095
    %4149 = vmatprep.subr.mxu0 %v3088
    %4150 = vmatpush2.msra.mxu0 %v3087
    %4151 = vmatprep.subr.mxu0 %v3080
    %4152 = vmatpush2.msra.mxu0 %v3079
    %4153 = vmatprep.subr.mxu0 %v3072
    %4154 = vmatpush2.msra.mxu0 %v3071
    %4155 = vmatprep.subr.mxu0 %v3064
    %4156 = vmatpush2.msra.mxu0 %v3063
    %4157 = vmatprep.subr.mxu0 %v3056
    %4158 = vmatpush2.msra.mxu0 %v3055
    %4159 = vmatprep.subr.mxu0 %v3048
    %4160 = vmatpush2.msra.mxu0 %v3047
    %4161 = vmatprep.subr.mxu0 %v3040
    %4162 = vmatpush2.msra.mxu0 %v3039
    %4163 = vmatprep.subr.mxu0 %v3032
    %4164 = vmatpush2.msra.mxu0 %v3031
    %4165 = vmatprep.subr.mxu0 %v3024
    %4166 = vmatpush2.msra.mxu0 %v3023
    %4167 = vmatprep.subr.mxu0 %v3016
    %4168 = vmatpush2.msra.mxu0 %v3015
    %4169 = vmatprep.mubr.f32.mxu0 %v2357
    %4170 = vmatmul.mubr.f32.gmra.mxu0 %v2356
    %v4171 = vpop.f32.mrf.mxu0
    %v4172 = vadd.f32 %v4101, %v4171
    %v4173 = vpop.f32.mrf.mxu0
    %v4174 = vadd.f32 %v4103, %v4173
    %4175 = vdwg.mxu0
    %4176 = vmatprep.subr.mxu0 %v3264
    %4177 = vmatpush1.msra.mxu0 %v3263
    %4178 = vmatprep.subr.mxu0 %v3256
    %4179 = vmatpush1.msra.mxu0 %v3255
    %4180 = vmatprep.subr.mxu0 %v3248
    %4181 = vmatpush1.msra.mxu0 %v3247
    %4182 = vmatprep.subr.mxu0 %v3240
    %4183 = vmatpush1.msra.mxu0 %v3239
    %4184 = vmatprep.subr.mxu0 %v3232
    %4185 = vmatpush1.msra.mxu0 %v3231
    %4186 = vmatprep.subr.mxu0 %v3224
    %4187 = vmatpush1.msra.mxu0 %v3223
    %4188 = vmatprep.subr.mxu0 %v3216
    %4189 = vmatpush1.msra.mxu0 %v3215
    %4190 = vmatprep.subr.mxu0 %v3208
    %4191 = vmatpush1.msra.mxu0 %v3207
    %4192 = vmatprep.subr.mxu0 %v3200
    %4193 = vmatpush1.msra.mxu0 %v3199
    %4194 = vmatprep.subr.mxu0 %v3192
    %4195 = vmatpush1.msra.mxu0 %v3191
    %4196 = vmatprep.subr.mxu0 %v3184
    %4197 = vmatpush1.msra.mxu0 %v3183
    %4198 = vmatprep.subr.mxu0 %v3176
    %4199 = vmatpush1.msra.mxu0 %v3175
    %4200 = vmatprep.subr.mxu0 %v3168
    %4201 = vmatpush1.msra.mxu0 %v3167
    %4202 = vmatprep.subr.mxu0 %v3160
    %4203 = vmatpush1.msra.mxu0 %v3159
    %4204 = vmatprep.subr.mxu0 %v3152
    %4205 = vmatpush1.msra.mxu0 %v3151
    %4206 = vmatprep.subr.mxu0 %v3144
    %4207 = vmatpush1.msra.mxu0 %v3143
    %4208 = vmatprep.subr.mxu0 %v3392
    %4209 = vmatpush2.msra.mxu0 %v3391
    %4210 = vmatprep.subr.mxu0 %v3384
    %4211 = vmatpush2.msra.mxu0 %v3383
    %4212 = vmatprep.subr.mxu0 %v3376
    %4213 = vmatpush2.msra.mxu0 %v3375
    %4214 = vmatprep.subr.mxu0 %v3368
    %4215 = vmatpush2.msra.mxu0 %v3367
    %4216 = vmatprep.subr.mxu0 %v3360
    %4217 = vmatpush2.msra.mxu0 %v3359
    %4218 = vmatprep.subr.mxu0 %v3352
    %4219 = vmatpush2.msra.mxu0 %v3351
    %4220 = vmatprep.subr.mxu0 %v3344
    %4221 = vmatpush2.msra.mxu0 %v3343
    %4222 = vmatprep.subr.mxu0 %v3336
    %4223 = vmatpush2.msra.mxu0 %v3335
    %4224 = vmatprep.subr.mxu0 %v3328
    %4225 = vmatpush2.msra.mxu0 %v3327
    %4226 = vmatprep.subr.mxu0 %v3320
    %4227 = vmatpush2.msra.mxu0 %v3319
    %4228 = vmatprep.subr.mxu0 %v3312
    %4229 = vmatpush2.msra.mxu0 %v3311
    %4230 = vmatprep.subr.mxu0 %v3304
    %4231 = vmatpush2.msra.mxu0 %v3303
    %4232 = vmatprep.subr.mxu0 %v3296
    %4233 = vmatpush2.msra.mxu0 %v3295
    %4234 = vmatprep.subr.mxu0 %v3288
    %4235 = vmatpush2.msra.mxu0 %v3287
    %4236 = vmatprep.subr.mxu0 %v3280
    %4237 = vmatpush2.msra.mxu0 %v3279
    %4238 = vmatprep.subr.mxu0 %v3272
    %4239 = vmatpush2.msra.mxu0 %v3271
    %4240 = vmatprep.mubr.f32.mxu0 %v2370
    %4241 = vmatmul.mubr.f32.gmra.mxu0 %v2369
    %v4242 = vpop.f32.mrf.mxu0
    %v4243 = vadd.f32 %v4172, %v4242
    %v4244 = vpop.f32.mrf.mxu0
    %v4245 = vadd.f32 %v4174, %v4244
    %4246 = vdwg.mxu0
    %4247 = vmatprep.subr.mxu0 %v2498
    %4248 = vmatpush1.msra.mxu0 %v2497
    %4249 = vmatprep.subr.mxu0 %v2490
    %4250 = vmatpush1.msra.mxu0 %v2489
    %4251 = vmatprep.subr.mxu0 %v2482
    %4252 = vmatpush1.msra.mxu0 %v2481
    %4253 = vmatprep.subr.mxu0 %v2474
    %4254 = vmatpush1.msra.mxu0 %v2473
    %4255 = vmatprep.subr.mxu0 %v2466
    %4256 = vmatpush1.msra.mxu0 %v2465
    %4257 = vmatprep.subr.mxu0 %v2458
    %4258 = vmatpush1.msra.mxu0 %v2457
    %4259 = vmatprep.subr.mxu0 %v2450
    %4260 = vmatpush1.msra.mxu0 %v2449
    %4261 = vmatprep.subr.mxu0 %v2442
    %4262 = vmatpush1.msra.mxu0 %v2441
    %4263 = vmatprep.subr.mxu0 %v2434
    %4264 = vmatpush1.msra.mxu0 %v2433
    %4265 = vmatprep.subr.mxu0 %v2426
    %4266 = vmatpush1.msra.mxu0 %v2425
    %4267 = vmatprep.subr.mxu0 %v2418
    %4268 = vmatpush1.msra.mxu0 %v2417
    %4269 = vmatprep.subr.mxu0 %v2410
    %4270 = vmatpush1.msra.mxu0 %v2409
    %4271 = vmatprep.subr.mxu0 %v2402
    %4272 = vmatpush1.msra.mxu0 %v2401
    %4273 = vmatprep.subr.mxu0 %v2394
    %4274 = vmatpush1.msra.mxu0 %v2393
    %4275 = vmatprep.subr.mxu0 %v2386
    %4276 = vmatpush1.msra.mxu0 %v2385
    %4277 = vmatprep.subr.mxu0 %v2378
    %4278 = vmatpush1.msra.mxu0 %v2377
    %4279 = vmatprep.subr.mxu0 %v2626
    %4280 = vmatpush2.msra.mxu0 %v2625
    %4281 = vmatprep.subr.mxu0 %v2618
    %4282 = vmatpush2.msra.mxu0 %v2617
    %4283 = vmatprep.subr.mxu0 %v2610
    %4284 = vmatpush2.msra.mxu0 %v2609
    %4285 = vmatprep.subr.mxu0 %v2602
    %4286 = vmatpush2.msra.mxu0 %v2601
    %4287 = vmatprep.subr.mxu0 %v2594
    %4288 = vmatpush2.msra.mxu0 %v2593
    %4289 = vmatprep.subr.mxu0 %v2586
    %4290 = vmatpush2.msra.mxu0 %v2585
    %4291 = vmatprep.subr.mxu0 %v2578
    %4292 = vmatpush2.msra.mxu0 %v2577
    %4293 = vmatprep.subr.mxu0 %v2570
    %4294 = vmatpush2.msra.mxu0 %v2569
    %4295 = vmatprep.subr.mxu0 %v2562
    %4296 = vmatpush2.msra.mxu0 %v2561
    %4297 = vmatprep.subr.mxu0 %v2554
    %4298 = vmatpush2.msra.mxu0 %v2553
    %4299 = vmatprep.subr.mxu0 %v2546
    %4300 = vmatpush2.msra.mxu0 %v2545
    %4301 = vmatprep.subr.mxu0 %v2538
    %4302 = vmatpush2.msra.mxu0 %v2537
    %4303 = vmatprep.subr.mxu0 %v2530
    %4304 = vmatpush2.msra.mxu0 %v2529
    %4305 = vmatprep.subr.mxu0 %v2522
    %4306 = vmatpush2.msra.mxu0 %v2521
    %4307 = vmatprep.subr.mxu0 %v2514
    %4308 = vmatpush2.msra.mxu0 %v2513
    %4309 = vmatprep.subr.mxu0 %v2506
    %4310 = vmatpush2.msra.mxu0 %v2505
    %4311 = vmatprep.mubr.f32.mxu0 %v2303
    %4312 = vmatmul.mubr.f32.gmra.mxu0 %v2302
    %v4313 = vpop.f32.mrf.mxu0
    %v4314 = vadd.f32 0.0, %v4313
    %v4315 = vpop.f32.mrf.mxu0
    %v4316 = vadd.f32 0.0, %v4315
    %4317 = vdwg.mxu0
    %4318 = vmatprep.subr.mxu0 %v2754
    %4319 = vmatpush1.msra.mxu0 %v2753
    %4320 = vmatprep.subr.mxu0 %v2746
    %4321 = vmatpush1.msra.mxu0 %v2745
    %4322 = vmatprep.subr.mxu0 %v2738
    %4323 = vmatpush1.msra.mxu0 %v2737
    %4324 = vmatprep.subr.mxu0 %v2730
    %4325 = vmatpush1.msra.mxu0 %v2729
    %4326 = vmatprep.subr.mxu0 %v2722
    %4327 = vmatpush1.msra.mxu0 %v2721
    %4328 = vmatprep.subr.mxu0 %v2714
    %4329 = vmatpush1.msra.mxu0 %v2713
    %4330 = vmatprep.subr.mxu0 %v2706
    %4331 = vmatpush1.msra.mxu0 %v2705
    %4332 = vmatprep.subr.mxu0 %v2698
    %4333 = vmatpush1.msra.mxu0 %v2697
    %4334 = vmatprep.subr.mxu0 %v2690
    %4335 = vmatpush1.msra.mxu0 %v2689
    %4336 = vmatprep.subr.mxu0 %v2682
    %4337 = vmatpush1.msra.mxu0 %v2681
    %4338 = vmatprep.subr.mxu0 %v2674
    %4339 = vmatpush1.msra.mxu0 %v2673
    %4340 = vmatprep.subr.mxu0 %v2666
    %4341 = vmatpush1.msra.mxu0 %v2665
    %4342 = vmatprep.subr.mxu0 %v2658
    %4343 = vmatpush1.msra.mxu0 %v2657
    %4344 = vmatprep.subr.mxu0 %v2650
    %4345 = vmatpush1.msra.mxu0 %v2649
    %4346 = vmatprep.subr.mxu0 %v2642
    %4347 = vmatpush1.msra.mxu0 %v2641
    %4348 = vmatprep.subr.mxu0 %v2634
    %4349 = vmatpush1.msra.mxu0 %v2633
    %4350 = vmatprep.subr.mxu0 %v2882
    %4351 = vmatpush2.msra.mxu0 %v2881
    %4352 = vmatprep.subr.mxu0 %v2874
    %4353 = vmatpush2.msra.mxu0 %v2873
    %4354 = vmatprep.subr.mxu0 %v2866
    %4355 = vmatpush2.msra.mxu0 %v2865
    %4356 = vmatprep.subr.mxu0 %v2858
    %4357 = vmatpush2.msra.mxu0 %v2857
    %4358 = vmatprep.subr.mxu0 %v2850
    %4359 = vmatpush2.msra.mxu0 %v2849
    %4360 = vmatprep.subr.mxu0 %v2842
    %4361 = vmatpush2.msra.mxu0 %v2841
    %4362 = vmatprep.subr.mxu0 %v2834
    %4363 = vmatpush2.msra.mxu0 %v2833
    %4364 = vmatprep.subr.mxu0 %v2826
    %4365 = vmatpush2.msra.mxu0 %v2825
    %4366 = vmatprep.subr.mxu0 %v2818
    %4367 = vmatpush2.msra.mxu0 %v2817
    %4368 = vmatprep.subr.mxu0 %v2810
    %4369 = vmatpush2.msra.mxu0 %v2809
    %4370 = vmatprep.subr.mxu0 %v2802
    %4371 = vmatpush2.msra.mxu0 %v2801
    %4372 = vmatprep.subr.mxu0 %v2794
    %4373 = vmatpush2.msra.mxu0 %v2793
    %4374 = vmatprep.subr.mxu0 %v2786
    %4375 = vmatpush2.msra.mxu0 %v2785
    %4376 = vmatprep.subr.mxu0 %v2778
    %4377 = vmatpush2.msra.mxu0 %v2777
    %4378 = vmatprep.subr.mxu0 %v2770
    %4379 = vmatpush2.msra.mxu0 %v2769
    %4380 = vmatprep.subr.mxu0 %v2762
    %4381 = vmatpush2.msra.mxu0 %v2761
    %4382 = vmatprep.mubr.f32.mxu0 %v2316
    %4383 = vmatmul.mubr.f32.gmra.mxu0 %v2315
    %v4384 = vpop.f32.mrf.mxu0
    %v4385 = vadd.f32 %v4314, %v4384
    %v4386 = vpop.f32.mrf.mxu0
    %v4387 = vadd.f32 %v4316, %v4386
    %4388 = vdwg.mxu0
    %4389 = vmatprep.subr.mxu0 %v3010
    %4390 = vmatpush1.msra.mxu0 %v3009
    %4391 = vmatprep.subr.mxu0 %v3002
    %4392 = vmatpush1.msra.mxu0 %v3001
    %4393 = vmatprep.subr.mxu0 %v2994
    %4394 = vmatpush1.msra.mxu0 %v2993
    %4395 = vmatprep.subr.mxu0 %v2986
    %4396 = vmatpush1.msra.mxu0 %v2985
    %4397 = vmatprep.subr.mxu0 %v2978
    %4398 = vmatpush1.msra.mxu0 %v2977
    %4399 = vmatprep.subr.mxu0 %v2970
    %4400 = vmatpush1.msra.mxu0 %v2969
    %4401 = vmatprep.subr.mxu0 %v2962
    %4402 = vmatpush1.msra.mxu0 %v2961
    %4403 = vmatprep.subr.mxu0 %v2954
    %4404 = vmatpush1.msra.mxu0 %v2953
    %4405 = vmatprep.subr.mxu0 %v2946
    %4406 = vmatpush1.msra.mxu0 %v2945
    %4407 = vmatprep.subr.mxu0 %v2938
    %4408 = vmatpush1.msra.mxu0 %v2937
    %4409 = vmatprep.subr.mxu0 %v2930
    %4410 = vmatpush1.msra.mxu0 %v2929
    %4411 = vmatprep.subr.mxu0 %v2922
    %4412 = vmatpush1.msra.mxu0 %v2921
    %4413 = vmatprep.subr.mxu0 %v2914
    %4414 = vmatpush1.msra.mxu0 %v2913
    %4415 = vmatprep.subr.mxu0 %v2906
    %4416 = vmatpush1.msra.mxu0 %v2905
    %4417 = vmatprep.subr.mxu0 %v2898
    %4418 = vmatpush1.msra.mxu0 %v2897
    %4419 = vmatprep.subr.mxu0 %v2890
    %4420 = vmatpush1.msra.mxu0 %v2889
    %4421 = vmatprep.subr.mxu0 %v3138
    %4422 = vmatpush2.msra.mxu0 %v3137
    %4423 = vmatprep.subr.mxu0 %v3130
    %4424 = vmatpush2.msra.mxu0 %v3129
    %4425 = vmatprep.subr.mxu0 %v3122
    %4426 = vmatpush2.msra.mxu0 %v3121
    %4427 = vmatprep.subr.mxu0 %v3114
    %4428 = vmatpush2.msra.mxu0 %v3113
    %4429 = vmatprep.subr.mxu0 %v3106
    %4430 = vmatpush2.msra.mxu0 %v3105
    %4431 = vmatprep.subr.mxu0 %v3098
    %4432 = vmatpush2.msra.mxu0 %v3097
    %4433 = vmatprep.subr.mxu0 %v3090
    %4434 = vmatpush2.msra.mxu0 %v3089
    %4435 = vmatprep.subr.mxu0 %v3082
    %4436 = vmatpush2.msra.mxu0 %v3081
    %4437 = vmatprep.subr.mxu0 %v3074
    %4438 = vmatpush2.msra.mxu0 %v3073
    %4439 = vmatprep.subr.mxu0 %v3066
    %4440 = vmatpush2.msra.mxu0 %v3065
    %4441 = vmatprep.subr.mxu0 %v3058
    %4442 = vmatpush2.msra.mxu0 %v3057
    %4443 = vmatprep.subr.mxu0 %v3050
    %4444 = vmatpush2.msra.mxu0 %v3049
    %4445 = vmatprep.subr.mxu0 %v3042
    %4446 = vmatpush2.msra.mxu0 %v3041
    %4447 = vmatprep.subr.mxu0 %v3034
    %4448 = vmatpush2.msra.mxu0 %v3033
    %4449 = vmatprep.subr.mxu0 %v3026
    %4450 = vmatpush2.msra.mxu0 %v3025
    %4451 = vmatprep.subr.mxu0 %v3018
    %4452 = vmatpush2.msra.mxu0 %v3017
    %4453 = vmatprep.mubr.f32.mxu0 %v2357
    %4454 = vmatmul.mubr.f32.gmra.mxu0 %v2356
    %v4455 = vpop.f32.mrf.mxu0
    %v4456 = vadd.f32 %v4385, %v4455
    %v4457 = vpop.f32.mrf.mxu0
    %v4458 = vadd.f32 %v4387, %v4457
    %4459 = vdwg.mxu0
    %4460 = vmatprep.subr.mxu0 %v3266
    %4461 = vmatpush1.msra.mxu0 %v3265
    %4462 = vmatprep.subr.mxu0 %v3258
    %4463 = vmatpush1.msra.mxu0 %v3257
    %4464 = vmatprep.subr.mxu0 %v3250
    %4465 = vmatpush1.msra.mxu0 %v3249
    %4466 = vmatprep.subr.mxu0 %v3242
    %4467 = vmatpush1.msra.mxu0 %v3241
    %4468 = vmatprep.subr.mxu0 %v3234
    %4469 = vmatpush1.msra.mxu0 %v3233
    %4470 = vmatprep.subr.mxu0 %v3226
    %4471 = vmatpush1.msra.mxu0 %v3225
    %4472 = vmatprep.subr.mxu0 %v3218
    %4473 = vmatpush1.msra.mxu0 %v3217
    %4474 = vmatprep.subr.mxu0 %v3210
    %4475 = vmatpush1.msra.mxu0 %v3209
    %4476 = vmatprep.subr.mxu0 %v3202
    %4477 = vmatpush1.msra.mxu0 %v3201
    %4478 = vmatprep.subr.mxu0 %v3194
    %4479 = vmatpush1.msra.mxu0 %v3193
    %4480 = vmatprep.subr.mxu0 %v3186
    %4481 = vmatpush1.msra.mxu0 %v3185
    %4482 = vmatprep.subr.mxu0 %v3178
    %4483 = vmatpush1.msra.mxu0 %v3177
    %4484 = vmatprep.subr.mxu0 %v3170
    %4485 = vmatpush1.msra.mxu0 %v3169
    %4486 = vmatprep.subr.mxu0 %v3162
    %4487 = vmatpush1.msra.mxu0 %v3161
    %4488 = vmatprep.subr.mxu0 %v3154
    %4489 = vmatpush1.msra.mxu0 %v3153
    %4490 = vmatprep.subr.mxu0 %v3146
    %4491 = vmatpush1.msra.mxu0 %v3145
    %4492 = vmatprep.subr.mxu0 %v3394
    %4493 = vmatpush2.msra.mxu0 %v3393
    %4494 = vmatprep.subr.mxu0 %v3386
    %4495 = vmatpush2.msra.mxu0 %v3385
    %4496 = vmatprep.subr.mxu0 %v3378
    %4497 = vmatpush2.msra.mxu0 %v3377
    %4498 = vmatprep.subr.mxu0 %v3370
    %4499 = vmatpush2.msra.mxu0 %v3369
    %4500 = vmatprep.subr.mxu0 %v3362
    %4501 = vmatpush2.msra.mxu0 %v3361
    %4502 = vmatprep.subr.mxu0 %v3354
    %4503 = vmatpush2.msra.mxu0 %v3353
    %4504 = vmatprep.subr.mxu0 %v3346
    %4505 = vmatpush2.msra.mxu0 %v3345
    %4506 = vmatprep.subr.mxu0 %v3338
    %4507 = vmatpush2.msra.mxu0 %v3337
    %4508 = vmatprep.subr.mxu0 %v3330
    %4509 = vmatpush2.msra.mxu0 %v3329
    %4510 = vmatprep.subr.mxu0 %v3322
    %4511 = vmatpush2.msra.mxu0 %v3321
    %4512 = vmatprep.subr.mxu0 %v3314
    %4513 = vmatpush2.msra.mxu0 %v3313
    %4514 = vmatprep.subr.mxu0 %v3306
    %4515 = vmatpush2.msra.mxu0 %v3305
    %4516 = vmatprep.subr.mxu0 %v3298
    %4517 = vmatpush2.msra.mxu0 %v3297
    %4518 = vmatprep.subr.mxu0 %v3290
    %4519 = vmatpush2.msra.mxu0 %v3289
    %4520 = vmatprep.subr.mxu0 %v3282
    %4521 = vmatpush2.msra.mxu0 %v3281
    %4522 = vmatprep.subr.mxu0 %v3274
    %4523 = vmatpush2.msra.mxu0 %v3273
    %4524 = vmatprep.mubr.f32.mxu0 %v2370
    %4525 = vmatmul.mubr.f32.gmra.mxu0 %v2369
    %v4526 = vpop.f32.mrf.mxu0
    %v4527 = vadd.f32 %v4456, %v4526
    %v4528 = vpop.f32.mrf.mxu0
    %v4529 = vadd.f32 %v4458, %v4528
    %4530 = vdwg.mxu0
    %v4531 = vsel %vm2262, %v3675, 0.0
    %v4532 = vsel %vm2262, %v3677, 0.0
    %v4533 = vadd.f32 %v4531, %v4532
    %v4534 = vsel %vm2262, %v3959, 0.0
    %v4535 = vadd.f32 %v4533, %v4534
    %v4536 = vsel %vm2262, %v3961, 0.0
    %v4537 = vadd.f32 %v4535, %v4536
    %4538 = vadd.xlane.f32.xlu0 %v4537
    %v4539 = vpop.xlane.xlu0 %4538
    %v4540 = vmul.f32 %v3675, %v3675
    %v4541 = vmul.f32 %v3677, %v3677
    %v4542 = vmul.f32 %v3959, %v3959
    %v4543 = vmul.f32 %v3961, %v3961
    %v4544 = vsel %vm2262, %v4540, 0.0
    %v4545 = vsel %vm2262, %v4541, 0.0
    %v4546 = vadd.f32 %v4544, %v4545
    %v4547 = vsel %vm2262, %v4542, 0.0
    %v4548 = vadd.f32 %v4546, %v4547
    %v4549 = vsel %vm2262, %v4543, 0.0
    %v4550 = vadd.f32 %v4548, %v4549
    %4551 = vadd.xlane.f32.xlu0 %v4550
    %v4552 = vpop.xlane.xlu0 %4551
    %v4553 = vmul.f32 %v4539, 0.001953125
    %v4554 = vmul.f32 %v4552, 0.001953125
    %v4555 = vmul.f32 %v4553, %v4553
    %v4556 = vsub.f32 %v4554, %v4555
    %v4557 = vadd.f32 %v4556, 0.0001
    %v4558 = vrsqrt.pop %v4557
    %s4559 = sld [smem:[#allocation7 + $0x100]]
    %v4560 = vstv %s4559
    %v4561 = vmul.f32 %v4558, %v4560
    %s4562 = sld [smem:[#allocation7 + $0x180]]
    %v4563 = vmul.f32 %v4553, %v4561
    %v4564 = vstv %s4562
    %v4565 = vsub.f32 %v4564, %v4563
    %v4566 = vmul.f32 %v3675, %v4561
    %v4567 = vmul.f32 %v3677, %v4561
    %v4568 = vadd.f32 %v4566, %v4565
    %v4569 = vadd.f32 %v4567, %v4565
    %s4570 = sld [smem:[#allocation7 + $0x101]]
    %v4571 = vstv %s4570
    %v4572 = vmul.f32 %v4558, %v4571
    %s4573 = sld [smem:[#allocation7 + $0x181]]
    %v4574 = vmul.f32 %v4553, %v4572
    %v4575 = vstv %s4573
    %v4576 = vsub.f32 %v4575, %v4574
    %v4577 = vmul.f32 %v3959, %v4572
    %v4578 = vmul.f32 %v3961, %v4572
    %v4579 = vadd.f32 %v4577, %v4576
    %v4580 = vadd.f32 %v4578, %v4576
    %v4581 = vsel %vm2262, %v4243, 0.0
    %v4582 = vsel %vm2262, %v4245, 0.0
    %v4583 = vadd.f32 %v4581, %v4582
    %v4584 = vsel %vm2262, %v4527, 0.0
    %v4585 = vadd.f32 %v4583, %v4584
    %v4586 = vsel %vm2262, %v4529, 0.0
    %v4587 = vadd.f32 %v4585, %v4586
    %4588 = vadd.xlane.f32.xlu0 %v4587
    %v4589 = vpop.xlane.xlu0 %4588
    %v4590 = vmul.f32 %v4243, %v4243
    %v4591 = vmul.f32 %v4245, %v4245
    %v4592 = vmul.f32 %v4527, %v4527
    %v4593 = vmul.f32 %v4529, %v4529
    %v4594 = vsel %vm2262, %v4590, 0.0
    %v4595 = vsel %vm2262, %v4591, 0.0
    %v4596 = vadd.f32 %v4594, %v4595
    %v4597 = vsel %vm2262, %v4592, 0.0
    %v4598 = vadd.f32 %v4596, %v4597
    %v4599 = vsel %vm2262, %v4593, 0.0
    %v4600 = vadd.f32 %v4598, %v4599
    %4601 = vadd.xlane.f32.xlu0 %v4600
    %v4602 = vpop.xlane.xlu0 %4601
    %v4603 = vmul.f32 %v4589, 0.001953125
    %v4604 = vmul.f32 %v4602, 0.001953125
    %v4605 = vmul.f32 %v4603, %v4603
    %v4606 = vsub.f32 %v4604, %v4605
    %v4607 = vadd.f32 %v4606, 0.0001
    %v4608 = vrsqrt.pop %v4607
    %s4609 = sld [smem:[#allocation7 + $0x102]]
    %v4610 = vstv %s4609
    %v4611 = vmul.f32 %v4608, %v4610
    %s4612 = sld [smem:[#allocation7 + $0x182]]
    %v4613 = vmul.f32 %v4603, %v4611
    %v4614 = vstv %s4612
    %v4615 = vsub.f32 %v4614, %v4613
    %v4616 = vmul.f32 %v4243, %v4611
    %v4617 = vmul.f32 %v4245, %v4611
    %v4618 = vadd.f32 %v4616, %v4615
    %v4619 = vadd.f32 %v4617, %v4615
    %s4620 = sld [smem:[#allocation7 + $0x103]]
    %v4621 = vstv %s4620
    %v4622 = vmul.f32 %v4608, %v4621
    %s4623 = sld [smem:[#allocation7 + $0x183]]
    %v4624 = vmul.f32 %v4603, %v4622
    %v4625 = vstv %s4623
    %v4626 = vsub.f32 %v4625, %v4624
    %v4627 = vmul.f32 %v4527, %v4622
    %v4628 = vmul.f32 %v4529, %v4622
    %v4629 = vadd.f32 %v4627, %v4626
    %v4630 = vadd.f32 %v4628, %v4626
    %v4631 = vadd.f32 %v4568, %v1091
    %v4632 = vadd.f32 %v4569, %v1099
    %v4633 = vadd.f32 %v4579, %v1098
    %v4634 = vadd.f32 %v4580, %v1100
    %v4635 = vadd.f32 %v4618, %v1108
    %v4636 = vadd.f32 %v4619, %v1116
    %v4637 = vadd.f32 %v4629, %v1115
    %v4638 = vadd.f32 %v4630, %v1117
    %v4639 = vmax.f32 %v4631, 0.0
    %v4640 = vmax.f32 %v4632, 0.0
    %v4641 = vmax.f32 %v4633, 0.0
    %v4642 = vmax.f32 %v4634, 0.0
    %v4643 = vmax.f32 %v4635, 0.0
    %v4644 = vmax.f32 %v4636, 0.0
    %v4645 = vmax.f32 %v4637, 0.0
    %v4646 = vmax.f32 %v4638, 0.0
    %v4655 = vcombine.low %v4639, %v4640
    %v4656 = vcombine.low %v4641, %v4642
    %v4658 = vunpack.c.l.s4 1983009808
    %v4659 = vunpack.c.0.s8 %v4658
    %v4660 = vlaneseq
    %v4661 = vshrl.u32 %v4660, 7
    %v4662 = vsub.s32 %v4659, %v4661
    %v4663 = vrot.slane %v4655, %v4662
    %v4665 = vunpack.c.l.s4 1983009808
    %v4666 = vunpack.c.0.s8 %v4665
    %v4667 = vlaneseq
    %v4668 = vshrl.u32 %v4667, 7
    %v4669 = vsub.s32 %v4666, %v4668
    %v4670 = vrot.slane %v4656, %v4669
    %v4671 = vcombine.low %v4663, %v4670
    %v4672 = vcombine.low %v4643, %v4644
    %v4673 = vcombine.low %v4645, %v4646
    %v4675 = vunpack.c.l.s4 1983009808
    %v4676 = vunpack.c.0.s8 %v4675
    %v4677 = vlaneseq
    %v4678 = vshrl.u32 %v4677, 7
    %v4679 = vsub.s32 %v4676, %v4678
    %v4680 = vrot.slane %v4672, %v4679
    %v4682 = vunpack.c.l.s4 1983009808
    %v4683 = vunpack.c.0.s8 %v4682
    %v4684 = vlaneseq
    %v4685 = vshrl.u32 %v4684, 7
    %v4686 = vsub.s32 %v4683, %v4685
    %v4687 = vrot.slane %v4673, %v4686
    %v4688 = vcombine.low %v4680, %v4687
    %4691 = vst [vmem:[%s4] sm:$0xff] %v4671
    %4692 = vst [vmem:[%s4 + $0x8] sm:$0xff] %v4688
    // Predicated region
    $region30: #{basic_block_apply.1} parent=1 // pred_check
      _
    $region31: #{basic_block_apply.1} parent=1 // pred_check_branch
      %4694 = sbr.rel (0) target = $region33
    $region32: #{basic_block_apply.1} parent=1 // pred_region
      _
    $region33: #{basic_block_apply.1} parent=1 // pred_fallthru
      _
    // Predicated region
    $region34: #{basic_block_apply.1} parent=1 // pred_check
      _
    $region35: #{basic_block_apply.1} parent=1 // pred_check_branch
      %4696 = sbr.rel (0) target = $region37
    $region36: #{basic_block_apply.1} parent=1 // pred_region
      _
    $region37: #{basic_block_apply.1} parent=1 // pred_fallthru
      _
    %4697 = vsyncpa [#allocation3], 1
    %4698 = vsyncpa [#allocation6], 1
    %4699 = vsyncpa [#allocation4], 1

</llo_original>
